<compile_context>
chip_gen: v5e
topology: v5e:2x2
jax: 0.10.0
libtpu: 0.0.40
codegen_flags: <defaults>
</compile_context>

<pallas_src>
import functools
import math

import jax
import jax.numpy as jnp
import numpy as np
from jax import lax
from jax.experimental import pallas as pl
from jax.experimental.pallas import tpu as pltpu

_INV_SQRT2 = 1.0 / math.sqrt(2.0)


# ----------------------------------------------------------------------------
# Pallas kernel: fused fc1 -> GELU -> fc2 on a (rows, C) token tile
# ----------------------------------------------------------------------------
def mlp_kernel(x_ref, w1_ref, b1_ref, w2_ref, b2_ref, o_ref, *,
               approximate_gelu):
    # x_ref already holds bf16 (cast once in the wrapper).
    h = jnp.dot(x_ref[...], w1_ref[...],
                preferred_element_type=jnp.float32)          # (rows, 4C) f32
    h = h + b1_ref[...]                                      # f32 bias add
    if approximate_gelu:
        # tanh approximation: runs on the EUP (separate VLIW slot).
        h = jax.nn.gelu(h, approximate=True)
    else:
        # exact erf GELU (torch.nn.functional.gelu default semantics)
        h = 0.5 * h * (1.0 + lax.erf(h * _INV_SQRT2))
    y = jnp.dot(h.astype(jnp.bfloat16), w2_ref[...],
                preferred_element_type=jnp.float32)          # (rows, C) f32
    o_ref[...] = y + b2_ref[...]


# ----------------------------------------------------------------------------
# generation-aware tiling helpers
# ----------------------------------------------------------------------------
def _vmem_capacity_bytes():
    try:
        info = pltpu.get_tpu_info()
        cap = getattr(info, "vmem_capacity_bytes", None)
        if cap:
            return int(cap)
    except Exception:
        pass
    return 64 * 1024 * 1024          # conservative: v7x per-TensorCore VMEM


def _num_tensorcores():
    try:
        kind = jax.devices()[0].device_kind.lower()
        if "v7" in kind:
            return 2                 # v7x: 2 TensorCores per chip
    except Exception:
        pass
    return 1                         # v5e / v6e: single TensorCore


def _round_up(x, m):
    return ((x + m - 1) // m) * m


def _pick_rows_and_vmem(t, c, num_tc, vmem_cap, max_rows):
    c4 = 4 * c
    # per-row VMEM bytes: bf16 x tile (x2 buffers), f32 out tile (x2 buffers),
    # f32 (rows,4C) GELU intermediate + its bf16 copy + elementwise temps.
    per_row = 2 * (2 * c) + 2 * (4 * c) + 4 * c4 + 2 * c4 + 4 * c4
    # grid-invariant operands: bf16 weights (conservatively double-buffered)
    # plus f32 biases.
    fixed = 2 * (2 * c * c4 + 2 * c4 * c) + 2 * (4 * c4 + 4 * c)
    budget = int(0.6 * vmem_cap)
    rows_budget = max(16, (budget - fixed) // per_row)
    # keep >= num_tc grid steps so both v7x TensorCores get work; no extra
    # steps are forced on single-TC parts.
    target = _round_up(pl.cdiv(t, num_tc), 16)
    rows = min(rows_budget, max_rows, target)
    rows = max(16, (rows // 16) * 16)            # bf16: 16-sublane multiples
    need = fixed + rows * per_row + (2 << 20)    # + internal scratch slack
    vmem_limit = int(min(vmem_cap - (4 << 20),
                         max(need + (8 << 20), 32 << 20)))
    return rows, vmem_limit


def _full_spec(shape):
    nd = len(shape)
    return pl.BlockSpec(shape, lambda i, _nd=nd: (0,) * _nd)


# ----------------------------------------------------------------------------
# pallas_call wrapper
# ----------------------------------------------------------------------------
def mlp_forward(x, params, *, approximate_gelu=False, max_rows=1024):
    """Apply the fused MLP to x of shape (..., hidden_size)."""
    orig_shape = x.shape
    c = orig_shape[-1]
    c4 = params["w1"].shape[1]
    # bf16 MXU operand: cast once here (kernel truncated to bf16 anyway).
    x2 = x.reshape(-1, c).astype(jnp.bfloat16)
    t = x2.shape[0]

    num_tc = _num_tensorcores()
    vmem_cap = _vmem_capacity_bytes()
    rows, vmem_limit = _pick_rows_and_vmem(t, c, num_tc, vmem_cap, max_rows)
    grid = (pl.cdiv(t, rows),)   # ragged last block masked by Pallas on write

    cost = pl.CostEstimate(
        flops=int(2 * t * c * c4 * 2),            # two matmuls
        transcendentals=int(t * c4),              # erf/tanh on the 4C hidden
        bytes_accessed=int(2 * t * c              # x in (bf16)
                           + 4 * t * c            # y out (f32)
                           + 2 * (c * c4 + c4 * c)  # bf16 weights
                           + 4 * (c4 + c)),         # f32 biases
    )

    kernel = functools.partial(mlp_kernel, approximate_gelu=approximate_gelu)

    out = pl.pallas_call(
        kernel,
        out_shape=jax.ShapeDtypeStruct((t, c), jnp.float32),
        grid=grid,
        in_specs=[pl.BlockSpec((rows, c), lambda i: (i, 0)),
                  _full_spec((c, c4)),     # w1 (constant index_map: resident)
                  _full_spec((1, c4)),     # b1
                  _full_spec((c4, c)),     # w2
                  _full_spec((1, c))],     # b2
        # NOTE: output last dim C may be < 128 lanes (masked stores); a
        # lane-dense relayout is only worth it if profiling shows the store
        # phase dominating -- not the case at small C.
        out_specs=pl.BlockSpec((rows, c), lambda i: (i, 0)),
        compiler_params=pltpu.CompilerParams(
            dimension_semantics=("parallel",),
            vmem_limit_bytes=vmem_limit),
        cost_estimate=cost,
    )(x2, params["w1"], params["b1"], params["w2"], params["b2"])

    return out.reshape(orig_shape)


# ----------------------------------------------------------------------------
# deterministic parameter init (matches the PyTorch module's _init_weights)
# weights stored transposed (in, out); matmul operands kept in bf16
# ----------------------------------------------------------------------------
def init_mlp_params(key, hidden_size):
    c, c4 = hidden_size, 4 * hidden_size
    k1, k2, k3, k4 = jax.random.split(key, 4)
    lim = math.sqrt(6.0 / (c + c4))                  # xavier_uniform (both fcs)
    w1 = jax.random.uniform(k1, (c, c4), jnp.float32, -lim, lim)
    w2 = jax.random.uniform(k2, (c4, c), jnp.float32, -lim, lim)
    b1 = (1e-6 * jax.random.normal(k3, (1, c4))).astype(jnp.float32)
    b2 = (1e-6 * jax.random.normal(k4, (1, c))).astype(jnp.float32)
    return dict(w1=w1.astype(jnp.bfloat16), b1=b1,
                w2=w2.astype(jnp.bfloat16), b2=b2)


# ----------------------------------------------------------------------------
# pure-JAX references for validation
# ----------------------------------------------------------------------------
def mlp_reference_f32(x, params):
    """Module semantics in full f32 (the PyTorch forward)."""
    w1 = params["w1"].astype(jnp.float32)
    w2 = params["w2"].astype(jnp.float32)
    h = jnp.einsum("...c,cd->...d", x, w1,
                   precision=jax.lax.Precision.HIGHEST) + params["b1"].reshape(-1)
    h = jax.nn.gelu(h, approximate=False)
    return (jnp.einsum("...d,dc->...c", h, w2,
                       precision=jax.lax.Precision.HIGHEST)
            + params["b2"].reshape(-1))


def mlp_reference_mixed(x, params):
    """Mirrors the kernel's mixed precision (bf16 MXU operands, f32 accum)."""
    h = jnp.dot(x.astype(jnp.bfloat16), params["w1"],
                preferred_element_type=jnp.float32) + params["b1"].reshape(-1)
    h = 0.5 * h * (1.0 + lax.erf(h * _INV_SQRT2))
    return (jnp.dot(h.astype(jnp.bfloat16), params["w2"],
                    preferred_element_type=jnp.float32)
            + params["b2"].reshape(-1))


# ----------------------------------------------------------------------------
if __name__ == "__main__":
    # hidden_size = 32 (Stripformer Mlp over B=2 images of 16x16 tokens)
    B, N, C = 2, 256, 32
    key = jax.random.PRNGKey(0)
    kx, kp = jax.random.split(key)
    x = jax.random.normal(kx, (B, N, C), jnp.float32)
    params = init_mlp_params(kp, C)

    fwd = jax.jit(mlp_forward)
    out = jax.block_until_ready(fwd(x, params))
    assert out.shape == (B, N, C)
    assert out.dtype == jnp.float32

    ref_mixed = mlp_reference_mixed(x, params)   # identical numerics to kernel
    ref_f32 = mlp_reference_f32(x, params)       # f32 module semantics

    if not np.allclose(np.asarray(out), np.asarray(ref_mixed),
                       atol=1e-3, rtol=1e-3):
        raise AssertionError(
            "mismatch vs mixed-precision reference, max abs err "
            f"{float(jnp.max(jnp.abs(out - ref_mixed)))}")
    if not np.allclose(np.asarray(out), np.asarray(ref_f32),
                       atol=3e-2, rtol=3e-2):
        raise AssertionError(
            "mismatch vs f32 reference, max abs err "
            f"{float(jnp.max(jnp.abs(out - ref_f32)))}")
    print("KERNEL_OK")
</pallas_src>

<mosaic_0001>
module attributes {stable_mosaic.version = 11 : i64} {
  func.func @mlp_kernel(%arg0: i32, %arg1: memref<512x32xbf16, #tpu.memory_space<vmem>>, %arg2: memref<32x128xbf16, #tpu.memory_space<vmem>>, %arg3: memref<1x128xf32, #tpu.memory_space<vmem>>, %arg4: memref<128x32xbf16, #tpu.memory_space<vmem>>, %arg5: memref<1x32xf32, #tpu.memory_space<vmem>>, %arg6: memref<512x32xf32, #tpu.memory_space<vmem>>) attributes {dimension_semantics = [#tpu.dimension_semantics<parallel>], iteration_bounds = array<i64: 1>, scalar_prefetch = 0 : i64, scratch_operands = 0 : i64, tpu.core_type = #tpu.core_type<tc>, window_params = [{transform_indices = @transform_0, window_bounds = array<i64: 512, 32>}, {pipeline_mode = #tpu.pipeline_mode<synchronous>, transform_indices = @transform_1, window_bounds = array<i64: 32, 128>}, {pipeline_mode = #tpu.pipeline_mode<synchronous>, transform_indices = @transform_2, window_bounds = array<i64: 1, 128>}, {pipeline_mode = #tpu.pipeline_mode<synchronous>, transform_indices = @transform_3, window_bounds = array<i64: 128, 32>}, {pipeline_mode = #tpu.pipeline_mode<synchronous>, transform_indices = @transform_4, window_bounds = array<i64: 1, 32>}, {transform_indices = @transform_5, window_bounds = array<i64: 512, 32>}]} {
    %c0 = arith.constant 0 : index
    %c0_0 = arith.constant 0 : index
    %0 = vector.load %arg1[%c0, %c0_0] : memref<512x32xbf16, #tpu.memory_space<vmem>>, vector<512x32xbf16>
    %c0_1 = arith.constant 0 : index
    %c0_2 = arith.constant 0 : index
    %1 = vector.load %arg2[%c0_1, %c0_2] : memref<32x128xbf16, #tpu.memory_space<vmem>>, vector<32x128xbf16>
    %cst = arith.constant dense<0.000000e+00> : vector<512x128xf32>
    %2 = tpu.matmul %0, %1, %cst {dimension_numbers = #tpu.dot_dimension_numbers<[1], [0], [0], [1], [0, 0, 1, 1], [], []>} : vector<512x32xbf16>, vector<32x128xbf16>, vector<512x128xf32> -> vector<512x128xf32>
    %c0_3 = arith.constant 0 : index
    %c0_4 = arith.constant 0 : index
    %3 = vector.load %arg3[%c0_3, %c0_4] : memref<1x128xf32, #tpu.memory_space<vmem>>, vector<1x128xf32>
    %4 = vector.broadcast %3 : vector<1x128xf32> to vector<512x128xf32>
    %5 = arith.addf %2, %4 : vector<512x128xf32>
    %cst_5 = arith.constant 5.000000e-01 : f32
    %6 = vector.broadcast %cst_5 : f32 to vector<512x128xf32>
    %7 = arith.mulf %6, %5 : vector<512x128xf32>
    %cst_6 = arith.constant 0.707106769 : f32
    %8 = vector.broadcast %cst_6 : f32 to vector<512x128xf32>
    %9 = arith.mulf %5, %8 : vector<512x128xf32>
    %10 = math.erf %9 : vector<512x128xf32>
    %cst_7 = arith.constant 1.000000e+00 : f32
    %11 = vector.broadcast %cst_7 : f32 to vector<512x128xf32>
    %12 = arith.addf %11, %10 : vector<512x128xf32>
    %13 = arith.mulf %7, %12 : vector<512x128xf32>
    %14 = arith.truncf %13 : vector<512x128xf32> to vector<512x128xbf16>
    %c0_8 = arith.constant 0 : index
    %c0_9 = arith.constant 0 : index
    %15 = vector.load %arg4[%c0_8, %c0_9] : memref<128x32xbf16, #tpu.memory_space<vmem>>, vector<128x32xbf16>
    %cst_10 = arith.constant dense<0.000000e+00> : vector<512x32xf32>
    %16 = tpu.matmul %14, %15, %cst_10 {dimension_numbers = #tpu.dot_dimension_numbers<[1], [0], [0], [1], [0, 0, 1, 1], [], []>} : vector<512x128xbf16>, vector<128x32xbf16>, vector<512x32xf32> -> vector<512x32xf32>
    %c0_11 = arith.constant 0 : index
    %c0_12 = arith.constant 0 : index
    %17 = vector.load %arg5[%c0_11, %c0_12] : memref<1x32xf32, #tpu.memory_space<vmem>>, vector<1x32xf32>
    %18 = vector.broadcast %17 : vector<1x32xf32> to vector<512x32xf32>
    %19 = arith.addf %16, %18 : vector<512x32xf32>
    %c0_13 = arith.constant 0 : index
    %c0_14 = arith.constant 0 : index
    %20 = vector.load %arg6[%c0_13, %c0_14] : memref<512x32xf32, #tpu.memory_space<vmem>>, vector<512x32xf32>
    tpu.vector_store %arg6[%c0_13, %c0_14], %19 {strides = array<i32>} : memref<512x32xf32, #tpu.memory_space<vmem>>, vector<512x32xf32>,
    return
  }
  func.func @transform_0(%arg0: i32) -> (i32, i32) {
    %c0_i32 = arith.constant 0 : i32
    %c0_i32_0 = arith.constant 0 : i32
    return %arg0, %c0_i32 : i32, i32
  }
  func.func @transform_1(%arg0: i32) -> (i32, i32) {
    %c0_i32 = arith.constant 0 : i32
    %c0_i32_0 = arith.constant 0 : i32
    %c0_i32_1 = arith.constant 0 : i32
    return %c0_i32, %c0_i32_0 : i32, i32
  }
  func.func @transform_2(%arg0: i32) -> (i32, i32) {
    %c0_i32 = arith.constant 0 : i32
    %c0_i32_0 = arith.constant 0 : i32
    %c0_i32_1 = arith.constant 0 : i32
    return %c0_i32, %c0_i32_0 : i32, i32
  }
  func.func @transform_3(%arg0: i32) -> (i32, i32) {
    %c0_i32 = arith.constant 0 : i32
    %c0_i32_0 = arith.constant 0 : i32
    %c0_i32_1 = arith.constant 0 : i32
    return %c0_i32, %c0_i32_0 : i32, i32
  }
  func.func @transform_4(%arg0: i32) -> (i32, i32) {
    %c0_i32 = arith.constant 0 : i32
    %c0_i32_0 = arith.constant 0 : i32
    %c0_i32_1 = arith.constant 0 : i32
    return %c0_i32, %c0_i32_0 : i32, i32
  }
  func.func @transform_5(%arg0: i32) -> (i32, i32) {
    %c0_i32 = arith.constant 0 : i32
    %c0_i32_0 = arith.constant 0 : i32
    return %arg0, %c0_i32 : i32, i32
  }
}

</mosaic_0001>

<llo_original>
// kernel: mlp_forward.1
$region0: #{mlp_forward.1}
  #allocation0 [shape = 'u32[]', space=smem, size = 0x4, offset = 0x4, fixed_abs, tag = 'smem constant byte address 0x4 - core index']
  #allocation1 [shape = 'u32[72,128]{1,0:T(1,128)}', space=vmem, size = 0x9000, scoped, tag = 'internal scratch']
  %s0 = inlined_call_operand.vmem [shape: bf16[512,32], index: 0, kind: input, shape index: {}]
  %s1 = inlined_call_operand.vmem [shape: bf16[32,128], index: 1, kind: input, shape index: {}]
  %s2 = inlined_call_operand.vmem [shape: f32[1,128], index: 2, kind: input, shape index: {}]
  %s3 = inlined_call_operand.vmem [shape: bf16[128,32], index: 3, kind: input, shape index: {}]
  %s4 = inlined_call_operand.vmem [shape: f32[1,32], index: 4, kind: input, shape index: {}]
  %s5 = inlined_call_operand.vmem [shape: f32[512,32], index: 5, kind: output, shape index: {}]
  %s6 = sld [smem:[#allocation0]]
  $region30: #{mlp_forward.1} parent=0
    _
  %s8 = ssub.s32 1, %s6
  %s9 = scalar_select 0, %s8, %s6
  // Predicated region
  $region2: #{mlp_forward.1} parent=0 // pred_check
    _
  $region3: #{mlp_forward.1} parent=0 // pred_check_branch
    %11 = sbr.rel (0) target = $region5
  $region4: #{mlp_forward.1} parent=0 // pred_region
    _
  $region5: #{mlp_forward.1} parent=0 // pred_fallthru
    _
  // Predicated region
  $region6: #{mlp_forward.1} parent=0 // pred_check
    _
  $region7: #{mlp_forward.1} parent=0 // pred_check_branch
    %13 = sbr.rel (0) target = $region9
  $region8: #{mlp_forward.1} parent=0 // pred_region
    _
  $region9: #{mlp_forward.1} parent=0 // pred_fallthru
    _
  // Predicated region
  $region10: #{mlp_forward.1} parent=0 // pred_check
    _
  $region11: #{mlp_forward.1} parent=0 // pred_check_branch
    %15 = sbr.rel (0) target = $region13
  $region12: #{mlp_forward.1} parent=0 // pred_region
    _
  $region13: #{mlp_forward.1} parent=0 // pred_fallthru
    _
  // Predicated region
  $region14: #{mlp_forward.1} parent=0 // pred_check
    _
  $region15: #{mlp_forward.1} parent=0 // pred_check_branch
    %17 = sbr.rel (0) target = $region17
  $region16: #{mlp_forward.1} parent=0 // pred_region
    _
  $region17: #{mlp_forward.1} parent=0 // pred_fallthru
    _
  // Predicated region
  $region18: #{mlp_forward.1} parent=0 // pred_check
    _
  $region19: #{mlp_forward.1} parent=0 // pred_check_branch
    %19 = sbr.rel (0) target = $region21
  $region20: #{mlp_forward.1} parent=0 // pred_region
    _
  $region21: #{mlp_forward.1} parent=0 // pred_fallthru
    _
  %v21 = vld [vmem:[%s0] sm:$0xf]
  %v22 = vld [vmem:[%s0 + $0x4] sm:$0xf]
  %v23 = vld [vmem:[%s0 + $0x8] sm:$0xf]
  %v24 = vld [vmem:[%s0 + $0xc] sm:$0xf]
  %v25 = vld [vmem:[%s0 + $0x10] sm:$0xf]
  %v26 = vld [vmem:[%s0 + $0x14] sm:$0xf]
  %v27 = vld [vmem:[%s0 + $0x18] sm:$0xf]
  %v28 = vld [vmem:[%s0 + $0x1c] sm:$0xf]
  %v29 = vld [vmem:[%s0 + $0x20] sm:$0xf]
  %v30 = vld [vmem:[%s0 + $0x24] sm:$0xf]
  %v31 = vld [vmem:[%s0 + $0x28] sm:$0xf]
  %v32 = vld [vmem:[%s0 + $0x2c] sm:$0xf]
  %v33 = vld [vmem:[%s0 + $0x30] sm:$0xf]
  %v34 = vld [vmem:[%s0 + $0x34] sm:$0xf]
  %v35 = vld [vmem:[%s0 + $0x38] sm:$0xf]
  %v36 = vld [vmem:[%s0 + $0x3c] sm:$0xf]
  %v37 = vld [vmem:[%s0 + $0x40] sm:$0xf]
  %v38 = vld [vmem:[%s0 + $0x44] sm:$0xf]
  %v39 = vld [vmem:[%s0 + $0x48] sm:$0xf]
  %v40 = vld [vmem:[%s0 + $0x4c] sm:$0xf]
  %v41 = vld [vmem:[%s0 + $0x50] sm:$0xf]
  %v42 = vld [vmem:[%s0 + $0x54] sm:$0xf]
  %v43 = vld [vmem:[%s0 + $0x58] sm:$0xf]
  %v44 = vld [vmem:[%s0 + $0x5c] sm:$0xf]
  %v45 = vld [vmem:[%s0 + $0x60] sm:$0xf]
  %v46 = vld [vmem:[%s0 + $0x64] sm:$0xf]
  %v47 = vld [vmem:[%s0 + $0x68] sm:$0xf]
  %v48 = vld [vmem:[%s0 + $0x6c] sm:$0xf]
  %v49 = vld [vmem:[%s0 + $0x70] sm:$0xf]
  %v50 = vld [vmem:[%s0 + $0x74] sm:$0xf]
  %v51 = vld [vmem:[%s0 + $0x78] sm:$0xf]
  %v52 = vld [vmem:[%s0 + $0x7c] sm:$0xf]
  %v53 = vld [vmem:[%s0 + $0x80] sm:$0xf]
  %v54 = vld [vmem:[%s0 + $0x84] sm:$0xf]
  %v55 = vld [vmem:[%s0 + $0x88] sm:$0xf]
  %v56 = vld [vmem:[%s0 + $0x8c] sm:$0xf]
  %v57 = vld [vmem:[%s0 + $0x90] sm:$0xf]
  %v58 = vld [vmem:[%s0 + $0x94] sm:$0xf]
  %v59 = vld [vmem:[%s0 + $0x98] sm:$0xf]
  %v60 = vld [vmem:[%s0 + $0x9c] sm:$0xf]
  %v61 = vld [vmem:[%s0 + $0xa0] sm:$0xf]
  %v62 = vld [vmem:[%s0 + $0xa4] sm:$0xf]
  %v63 = vld [vmem:[%s0 + $0xa8] sm:$0xf]
  %v64 = vld [vmem:[%s0 + $0xac] sm:$0xf]
  %v65 = vld [vmem:[%s0 + $0xb0] sm:$0xf]
  %v66 = vld [vmem:[%s0 + $0xb4] sm:$0xf]
  %v67 = vld [vmem:[%s0 + $0xb8] sm:$0xf]
  %v68 = vld [vmem:[%s0 + $0xbc] sm:$0xf]
  %v69 = vld [vmem:[%s0 + $0xc0] sm:$0xf]
  %v70 = vld [vmem:[%s0 + $0xc4] sm:$0xf]
  %v71 = vld [vmem:[%s0 + $0xc8] sm:$0xf]
  %v72 = vld [vmem:[%s0 + $0xcc] sm:$0xf]
  %v73 = vld [vmem:[%s0 + $0xd0] sm:$0xf]
  %v74 = vld [vmem:[%s0 + $0xd4] sm:$0xf]
  %v75 = vld [vmem:[%s0 + $0xd8] sm:$0xf]
  %v76 = vld [vmem:[%s0 + $0xdc] sm:$0xf]
  %v77 = vld [vmem:[%s0 + $0xe0] sm:$0xf]
  %v78 = vld [vmem:[%s0 + $0xe4] sm:$0xf]
  %v79 = vld [vmem:[%s0 + $0xe8] sm:$0xf]
  %v80 = vld [vmem:[%s0 + $0xec] sm:$0xf]
  %v81 = vld [vmem:[%s0 + $0xf0] sm:$0xf]
  %v82 = vld [vmem:[%s0 + $0xf4] sm:$0xf]
  %v83 = vld [vmem:[%s0 + $0xf8] sm:$0xf]
  %v84 = vld [vmem:[%s0 + $0xfc] sm:$0xf]
  %v85 = vld [vmem:[%s1] sm:$0xf]
  %v86 = vld [vmem:[%s1 + $0x4] sm:$0xf]
  %v87 = vld [vmem:[%s1 + $0x8] sm:$0xf]
  %v88 = vld [vmem:[%s1 + $0xc] sm:$0xf]
  %v89 = vld [vmem:[%s2] sm:$0x1]
  %v91 = vperm.slane %v89, 0
  %v157 = vunpack.c.l.b16 %v21
  %v158 = vunpack.c.l.b16 %v22
  %v159 = vunpack.c.l.b16 %v23
  %v160 = vunpack.c.l.b16 %v24
  %v161 = vunpack.c.l.b16 %v25
  %v162 = vunpack.c.l.b16 %v26
  %v163 = vunpack.c.l.b16 %v27
  %v164 = vunpack.c.l.b16 %v28
  %v165 = vunpack.c.l.b16 %v29
  %v166 = vunpack.c.l.b16 %v30
  %v167 = vunpack.c.l.b16 %v31
  %v168 = vunpack.c.l.b16 %v32
  %v169 = vunpack.c.l.b16 %v33
  %v170 = vunpack.c.l.b16 %v34
  %v171 = vunpack.c.l.b16 %v35
  %v172 = vunpack.c.l.b16 %v36
  %v173 = vunpack.c.l.b16 %v37
  %v174 = vunpack.c.l.b16 %v38
  %v175 = vunpack.c.l.b16 %v39
  %v176 = vunpack.c.l.b16 %v40
  %v177 = vunpack.c.l.b16 %v41
  %v178 = vunpack.c.l.b16 %v42
  %v179 = vunpack.c.l.b16 %v43
  %v180 = vunpack.c.l.b16 %v44
  %v181 = vunpack.c.l.b16 %v45
  %v182 = vunpack.c.l.b16 %v46
  %v183 = vunpack.c.l.b16 %v47
  %v184 = vunpack.c.l.b16 %v48
  %v185 = vunpack.c.l.b16 %v49
  %v186 = vunpack.c.l.b16 %v50
  %v187 = vunpack.c.l.b16 %v51
  %v188 = vunpack.c.l.b16 %v52
  %v189 = vunpack.c.l.b16 %v53
  %v190 = vunpack.c.l.b16 %v54
  %v191 = vunpack.c.l.b16 %v55
  %v192 = vunpack.c.l.b16 %v56
  %v193 = vunpack.c.l.b16 %v57
  %v194 = vunpack.c.l.b16 %v58
  %v195 = vunpack.c.l.b16 %v59
  %v196 = vunpack.c.l.b16 %v60
  %v197 = vunpack.c.l.b16 %v61
  %v198 = vunpack.c.l.b16 %v62
  %v199 = vunpack.c.l.b16 %v63
  %v200 = vunpack.c.l.b16 %v64
  %v201 = vunpack.c.l.b16 %v65
  %v202 = vunpack.c.l.b16 %v66
  %v203 = vunpack.c.l.b16 %v67
  %v204 = vunpack.c.l.b16 %v68
  %v205 = vunpack.c.l.b16 %v69
  %v206 = vunpack.c.l.b16 %v70
  %v207 = vunpack.c.l.b16 %v71
  %v208 = vunpack.c.l.b16 %v72
  %v209 = vunpack.c.l.b16 %v73
  %v210 = vunpack.c.l.b16 %v74
  %v211 = vunpack.c.l.b16 %v75
  %v212 = vunpack.c.l.b16 %v76
  %v213 = vunpack.c.l.b16 %v77
  %v214 = vunpack.c.l.b16 %v78
  %v215 = vunpack.c.l.b16 %v79
  %v216 = vunpack.c.l.b16 %v80
  %v217 = vunpack.c.l.b16 %v81
  %v218 = vunpack.c.l.b16 %v82
  %v219 = vunpack.c.l.b16 %v83
  %v220 = vunpack.c.l.b16 %v84
  %v221 = vpack.c.b16 %v158, %v157
  %v222 = vpack.c.b16 %v160, %v159
  %v223 = vpack.c.b16 %v162, %v161
  %v224 = vpack.c.b16 %v164, %v163
  %v225 = vpack.c.b16 %v166, %v165
  %v226 = vpack.c.b16 %v168, %v167
  %v227 = vpack.c.b16 %v170, %v169
  %v228 = vpack.c.b16 %v172, %v171
  %v229 = vpack.c.b16 %v174, %v173
  %v230 = vpack.c.b16 %v176, %v175
  %v231 = vpack.c.b16 %v178, %v177
  %v232 = vpack.c.b16 %v180, %v179
  %v233 = vpack.c.b16 %v182, %v181
  %v234 = vpack.c.b16 %v184, %v183
  %v235 = vpack.c.b16 %v186, %v185
  %v236 = vpack.c.b16 %v188, %v187
  %v237 = vpack.c.b16 %v190, %v189
  %v238 = vpack.c.b16 %v192, %v191
  %v239 = vpack.c.b16 %v194, %v193
  %v240 = vpack.c.b16 %v196, %v195
  %v241 = vpack.c.b16 %v198, %v197
  %v242 = vpack.c.b16 %v200, %v199
  %v243 = vpack.c.b16 %v202, %v201
  %v244 = vpack.c.b16 %v204, %v203
  %v245 = vpack.c.b16 %v206, %v205
  %v246 = vpack.c.b16 %v208, %v207
  %v247 = vpack.c.b16 %v210, %v209
  %v248 = vpack.c.b16 %v212, %v211
  %v249 = vpack.c.b16 %v214, %v213
  %v250 = vpack.c.b16 %v216, %v215
  %v251 = vpack.c.b16 %v218, %v217
  %v252 = vpack.c.b16 %v220, %v219
  %v257 = vunpack.c.l.b16 %v85
  %v258 = vunpack.c.l.b16 %v86
  %v259 = vunpack.c.l.b16 %v87
  %v260 = vunpack.c.l.b16 %v88
  %v261 = vpack.c.b16 %v258, %v257
  %v262 = vpack.c.b16 %v260, %v259
  %vm265 = vcmask 261120
  %v267 = vsel %vm265, %v221, 0
  %v270 = vsel %vm265, %v222, 0
  %v273 = vsel %vm265, %v223, 0
  %v276 = vsel %vm265, %v224, 0
  %v279 = vsel %vm265, %v225, 0
  %v282 = vsel %vm265, %v226, 0
  %v285 = vsel %vm265, %v227, 0
  %v288 = vsel %vm265, %v228, 0
  %v291 = vsel %vm265, %v229, 0
  %v294 = vsel %vm265, %v230, 0
  %v297 = vsel %vm265, %v231, 0
  %v300 = vsel %vm265, %v232, 0
  %v303 = vsel %vm265, %v233, 0
  %v306 = vsel %vm265, %v234, 0
  %v309 = vsel %vm265, %v235, 0
  %v312 = vsel %vm265, %v236, 0
  %v315 = vsel %vm265, %v237, 0
  %v318 = vsel %vm265, %v238, 0
  %v321 = vsel %vm265, %v239, 0
  %v324 = vsel %vm265, %v240, 0
  %v327 = vsel %vm265, %v241, 0
  %v330 = vsel %vm265, %v242, 0
  %v333 = vsel %vm265, %v243, 0
  %v336 = vsel %vm265, %v244, 0
  %v339 = vsel %vm265, %v245, 0
  %v342 = vsel %vm265, %v246, 0
  %v345 = vsel %vm265, %v247, 0
  %v348 = vsel %vm265, %v248, 0
  %v351 = vsel %vm265, %v249, 0
  %v354 = vsel %vm265, %v250, 0
  %v357 = vsel %vm265, %v251, 0
  %v360 = vsel %vm265, %v252, 0
  %362 = vmatpush.bf16.msra.mxu0 0
  %363 = vmatpush.bf16.msra.mxu0 0
  %364 = vmatpush.bf16.msra.mxu0 0
  %365 = vmatpush.bf16.msra.mxu0 0
  %366 = vmatpush.bf16.msra.mxu0 0
  %367 = vmatpush.bf16.msra.mxu0 0
  %368 = vmatpush.bf16.msra.mxu0 %v262
  %369 = vmatpush.bf16.msra.mxu0 %v261
  %370 = vmatmul.bf16.gmra.mxu0 %v267
  %v371 = vpop.f32.mrf.mxu0
  %v372 = vadd.f32 %v91, %v371
  %v373 = vpop.f32.mrf.mxu0
  %v374 = vadd.f32 %v91, %v373
  %375 = vmatmul.bf16.gmra.mxu0 %v270
  %v376 = vpop.f32.mrf.mxu0
  %v377 = vadd.f32 %v91, %v376
  %v378 = vpop.f32.mrf.mxu0
  %v379 = vadd.f32 %v91, %v378
  %380 = vmatmul.bf16.gmra.mxu0 %v273
  %v381 = vpop.f32.mrf.mxu0
  %v382 = vadd.f32 %v91, %v381
  %v383 = vpop.f32.mrf.mxu0
  %v384 = vadd.f32 %v91, %v383
  %385 = vmatmul.bf16.gmra.mxu0 %v276
  %v386 = vpop.f32.mrf.mxu0
  %v387 = vadd.f32 %v91, %v386
  %v388 = vpop.f32.mrf.mxu0
  %v389 = vadd.f32 %v91, %v388
  %390 = vmatmul.bf16.gmra.mxu0 %v279
  %v391 = vpop.f32.mrf.mxu0
  %v392 = vadd.f32 %v91, %v391
  %v393 = vpop.f32.mrf.mxu0
  %v394 = vadd.f32 %v91, %v393
  %395 = vmatmul.bf16.gmra.mxu0 %v282
  %v396 = vpop.f32.mrf.mxu0
  %v397 = vadd.f32 %v91, %v396
  %v398 = vpop.f32.mrf.mxu0
  %v399 = vadd.f32 %v91, %v398
  %400 = vmatmul.bf16.gmra.mxu0 %v285
  %v401 = vpop.f32.mrf.mxu0
  %v402 = vadd.f32 %v91, %v401
  %v403 = vpop.f32.mrf.mxu0
  %v404 = vadd.f32 %v91, %v403
  %405 = vmatmul.bf16.gmra.mxu0 %v288
  %v406 = vpop.f32.mrf.mxu0
  %v407 = vadd.f32 %v91, %v406
  %v408 = vpop.f32.mrf.mxu0
  %v409 = vadd.f32 %v91, %v408
  %410 = vmatmul.bf16.gmra.mxu0 %v291
  %v411 = vpop.f32.mrf.mxu0
  %v412 = vadd.f32 %v91, %v411
  %v413 = vpop.f32.mrf.mxu0
  %v414 = vadd.f32 %v91, %v413
  %415 = vmatmul.bf16.gmra.mxu0 %v294
  %v416 = vpop.f32.mrf.mxu0
  %v417 = vadd.f32 %v91, %v416
  %v418 = vpop.f32.mrf.mxu0
  %v419 = vadd.f32 %v91, %v418
  %420 = vmatmul.bf16.gmra.mxu0 %v297
  %v421 = vpop.f32.mrf.mxu0
  %v422 = vadd.f32 %v91, %v421
  %v423 = vpop.f32.mrf.mxu0
  %v424 = vadd.f32 %v91, %v423
  %425 = vmatmul.bf16.gmra.mxu0 %v300
  %v426 = vpop.f32.mrf.mxu0
  %v427 = vadd.f32 %v91, %v426
  %v428 = vpop.f32.mrf.mxu0
  %v429 = vadd.f32 %v91, %v428
  %430 = vmatmul.bf16.gmra.mxu0 %v303
  %v431 = vpop.f32.mrf.mxu0
  %v432 = vadd.f32 %v91, %v431
  %v433 = vpop.f32.mrf.mxu0
  %v434 = vadd.f32 %v91, %v433
  %435 = vmatmul.bf16.gmra.mxu0 %v306
  %v436 = vpop.f32.mrf.mxu0
  %v437 = vadd.f32 %v91, %v436
  %v438 = vpop.f32.mrf.mxu0
  %v439 = vadd.f32 %v91, %v438
  %440 = vmatmul.bf16.gmra.mxu0 %v309
  %v441 = vpop.f32.mrf.mxu0
  %v442 = vadd.f32 %v91, %v441
  %v443 = vpop.f32.mrf.mxu0
  %v444 = vadd.f32 %v91, %v443
  %445 = vmatmul.bf16.gmra.mxu0 %v312
  %v446 = vpop.f32.mrf.mxu0
  %v447 = vadd.f32 %v91, %v446
  %v448 = vpop.f32.mrf.mxu0
  %v449 = vadd.f32 %v91, %v448
  %450 = vmatmul.bf16.gmra.mxu0 %v315
  %v451 = vpop.f32.mrf.mxu0
  %v452 = vadd.f32 %v91, %v451
  %v453 = vpop.f32.mrf.mxu0
  %v454 = vadd.f32 %v91, %v453
  %455 = vmatmul.bf16.gmra.mxu0 %v318
  %v456 = vpop.f32.mrf.mxu0
  %v457 = vadd.f32 %v91, %v456
  %v458 = vpop.f32.mrf.mxu0
  %v459 = vadd.f32 %v91, %v458
  %460 = vmatmul.bf16.gmra.mxu0 %v321
  %v461 = vpop.f32.mrf.mxu0
  %v462 = vadd.f32 %v91, %v461
  %v463 = vpop.f32.mrf.mxu0
  %v464 = vadd.f32 %v91, %v463
  %465 = vmatmul.bf16.gmra.mxu0 %v324
  %v466 = vpop.f32.mrf.mxu0
  %v467 = vadd.f32 %v91, %v466
  %v468 = vpop.f32.mrf.mxu0
  %v469 = vadd.f32 %v91, %v468
  %470 = vmatmul.bf16.gmra.mxu0 %v327
  %v471 = vpop.f32.mrf.mxu0
  %v472 = vadd.f32 %v91, %v471
  %v473 = vpop.f32.mrf.mxu0
  %v474 = vadd.f32 %v91, %v473
  %475 = vmatmul.bf16.gmra.mxu0 %v330
  %v476 = vpop.f32.mrf.mxu0
  %v477 = vadd.f32 %v91, %v476
  %v478 = vpop.f32.mrf.mxu0
  %v479 = vadd.f32 %v91, %v478
  %480 = vmatmul.bf16.gmra.mxu0 %v333
  %v481 = vpop.f32.mrf.mxu0
  %v482 = vadd.f32 %v91, %v481
  %v483 = vpop.f32.mrf.mxu0
  %v484 = vadd.f32 %v91, %v483
  %485 = vmatmul.bf16.gmra.mxu0 %v336
  %v486 = vpop.f32.mrf.mxu0
  %v487 = vadd.f32 %v91, %v486
  %v488 = vpop.f32.mrf.mxu0
  %v489 = vadd.f32 %v91, %v488
  %490 = vmatmul.bf16.gmra.mxu0 %v339
  %v491 = vpop.f32.mrf.mxu0
  %v492 = vadd.f32 %v91, %v491
  %v493 = vpop.f32.mrf.mxu0
  %v494 = vadd.f32 %v91, %v493
  %495 = vmatmul.bf16.gmra.mxu0 %v342
  %v496 = vpop.f32.mrf.mxu0
  %v497 = vadd.f32 %v91, %v496
  %v498 = vpop.f32.mrf.mxu0
  %v499 = vadd.f32 %v91, %v498
  %500 = vmatmul.bf16.gmra.mxu0 %v345
  %v501 = vpop.f32.mrf.mxu0
  %v502 = vadd.f32 %v91, %v501
  %v503 = vpop.f32.mrf.mxu0
  %v504 = vadd.f32 %v91, %v503
  %505 = vmatmul.bf16.gmra.mxu0 %v348
  %v506 = vpop.f32.mrf.mxu0
  %v507 = vadd.f32 %v91, %v506
  %v508 = vpop.f32.mrf.mxu0
  %v509 = vadd.f32 %v91, %v508
  %510 = vmatmul.bf16.gmra.mxu0 %v351
  %v511 = vpop.f32.mrf.mxu0
  %v512 = vadd.f32 %v91, %v511
  %v513 = vpop.f32.mrf.mxu0
  %v514 = vadd.f32 %v91, %v513
  %515 = vmatmul.bf16.gmra.mxu0 %v354
  %v516 = vpop.f32.mrf.mxu0
  %v517 = vadd.f32 %v91, %v516
  %v518 = vpop.f32.mrf.mxu0
  %v519 = vadd.f32 %v91, %v518
  %520 = vmatmul.bf16.gmra.mxu0 %v357
  %v521 = vpop.f32.mrf.mxu0
  %v522 = vadd.f32 %v91, %v521
  %v523 = vpop.f32.mrf.mxu0
  %v524 = vadd.f32 %v91, %v523
  %525 = vmatmul.bf16.gmra.mxu0 %v360
  %v526 = vpop.f32.mrf.mxu0
  %v527 = vadd.f32 %v91, %v526
  %v528 = vpop.f32.mrf.mxu0
  %v529 = vadd.f32 %v91, %v528
  %530 = vdwg.mxu0
  %v531 = vmul.f32 %v372, 0.5
  %v532 = vmul.f32 %v374, 0.5
  %v533 = vmul.f32 %v377, 0.5
  %v534 = vmul.f32 %v379, 0.5
  %v535 = vmul.f32 %v382, 0.5
  %v536 = vmul.f32 %v384, 0.5
  %v537 = vmul.f32 %v387, 0.5
  %v538 = vmul.f32 %v389, 0.5
  %v539 = vmul.f32 %v392, 0.5
  %v540 = vmul.f32 %v394, 0.5
  %v541 = vmul.f32 %v397, 0.5
  %v542 = vmul.f32 %v399, 0.5
  %v543 = vmul.f32 %v402, 0.5
  %v544 = vmul.f32 %v404, 0.5
  %v545 = vmul.f32 %v407, 0.5
  %v546 = vmul.f32 %v409, 0.5
  %v547 = vmul.f32 %v412, 0.5
  %v548 = vmul.f32 %v414, 0.5
  %v549 = vmul.f32 %v417, 0.5
  %v550 = vmul.f32 %v419, 0.5
  %v551 = vmul.f32 %v422, 0.5
  %v552 = vmul.f32 %v424, 0.5
  %v553 = vmul.f32 %v427, 0.5
  %v554 = vmul.f32 %v429, 0.5
  %v555 = vmul.f32 %v432, 0.5
  %v556 = vmul.f32 %v434, 0.5
  %v557 = vmul.f32 %v437, 0.5
  %v558 = vmul.f32 %v439, 0.5
  %v559 = vmul.f32 %v442, 0.5
  %v560 = vmul.f32 %v444, 0.5
  %v561 = vmul.f32 %v447, 0.5
  %v562 = vmul.f32 %v449, 0.5
  %v563 = vmul.f32 %v452, 0.5
  %v564 = vmul.f32 %v454, 0.5
  %v565 = vmul.f32 %v457, 0.5
  %v566 = vmul.f32 %v459, 0.5
  %v567 = vmul.f32 %v462, 0.5
  %v568 = vmul.f32 %v464, 0.5
  %v569 = vmul.f32 %v467, 0.5
  %v570 = vmul.f32 %v469, 0.5
  %v571 = vmul.f32 %v472, 0.5
  %v572 = vmul.f32 %v474, 0.5
  %v573 = vmul.f32 %v477, 0.5
  %v574 = vmul.f32 %v479, 0.5
  %v575 = vmul.f32 %v482, 0.5
  %v576 = vmul.f32 %v484, 0.5
  %v577 = vmul.f32 %v487, 0.5
  %v578 = vmul.f32 %v489, 0.5
  %v579 = vmul.f32 %v492, 0.5
  %v580 = vmul.f32 %v494, 0.5
  %v581 = vmul.f32 %v497, 0.5
  %v582 = vmul.f32 %v499, 0.5
  %v583 = vmul.f32 %v502, 0.5
  %v584 = vmul.f32 %v504, 0.5
  %v585 = vmul.f32 %v507, 0.5
  %v586 = vmul.f32 %v509, 0.5
  %v587 = vmul.f32 %v512, 0.5
  %v588 = vmul.f32 %v514, 0.5
  %v589 = vmul.f32 %v517, 0.5
  %v590 = vmul.f32 %v519, 0.5
  %v591 = vmul.f32 %v522, 0.5
  %v592 = vmul.f32 %v524, 0.5
  %v593 = vmul.f32 %v527, 0.5
  %v594 = vmul.f32 %v529, 0.5
  %v595 = vmul.f32 %v372, 0.70710677
  %v596 = vmul.f32 %v374, 0.70710677
  %v597 = vmul.f32 %v377, 0.70710677
  %v598 = vmul.f32 %v379, 0.70710677
  %v599 = vmul.f32 %v382, 0.70710677
  %v600 = vmul.f32 %v384, 0.70710677
  %v601 = vmul.f32 %v387, 0.70710677
  %v602 = vmul.f32 %v389, 0.70710677
  %v603 = vmul.f32 %v392, 0.70710677
  %v604 = vmul.f32 %v394, 0.70710677
  %v605 = vmul.f32 %v397, 0.70710677
  %v606 = vmul.f32 %v399, 0.70710677
  %v607 = vmul.f32 %v402, 0.70710677
  %v608 = vmul.f32 %v404, 0.70710677
  %v609 = vmul.f32 %v407, 0.70710677
  %v610 = vmul.f32 %v409, 0.70710677
  %v611 = vmul.f32 %v412, 0.70710677
  %v612 = vmul.f32 %v414, 0.70710677
  %v613 = vmul.f32 %v417, 0.70710677
  %v614 = vmul.f32 %v419, 0.70710677
  %v615 = vmul.f32 %v422, 0.70710677
  %v616 = vmul.f32 %v424, 0.70710677
  %v617 = vmul.f32 %v427, 0.70710677
  %v618 = vmul.f32 %v429, 0.70710677
  %v619 = vmul.f32 %v432, 0.70710677
  %v620 = vmul.f32 %v434, 0.70710677
  %v621 = vmul.f32 %v437, 0.70710677
  %v622 = vmul.f32 %v439, 0.70710677
  %v623 = vmul.f32 %v442, 0.70710677
  %v624 = vmul.f32 %v444, 0.70710677
  %v625 = vmul.f32 %v447, 0.70710677
  %v626 = vmul.f32 %v449, 0.70710677
  %v627 = vmul.f32 %v452, 0.70710677
  %v628 = vmul.f32 %v454, 0.70710677
  %v629 = vmul.f32 %v457, 0.70710677
  %v630 = vmul.f32 %v459, 0.70710677
  %v631 = vmul.f32 %v462, 0.70710677
  %v632 = vmul.f32 %v464, 0.70710677
  %v633 = vmul.f32 %v467, 0.70710677
  %v634 = vmul.f32 %v469, 0.70710677
  %v635 = vmul.f32 %v472, 0.70710677
  %v636 = vmul.f32 %v474, 0.70710677
  %v637 = vmul.f32 %v477, 0.70710677
  %v638 = vmul.f32 %v479, 0.70710677
  %v639 = vmul.f32 %v482, 0.70710677
  %v640 = vmul.f32 %v484, 0.70710677
  %v641 = vmul.f32 %v487, 0.70710677
  %v642 = vmul.f32 %v489, 0.70710677
  %v643 = vmul.f32 %v492, 0.70710677
  %v644 = vmul.f32 %v494, 0.70710677
  %v645 = vmul.f32 %v497, 0.70710677
  %v646 = vmul.f32 %v499, 0.70710677
  %v647 = vmul.f32 %v502, 0.70710677
  %v648 = vmul.f32 %v504, 0.70710677
  %v649 = vmul.f32 %v507, 0.70710677
  %v650 = vmul.f32 %v509, 0.70710677
  %v651 = vmul.f32 %v512, 0.70710677
  %v652 = vmul.f32 %v514, 0.70710677
  %v653 = vmul.f32 %v517, 0.70710677
  %v654 = vmul.f32 %v519, 0.70710677
  %v655 = vmul.f32 %v522, 0.70710677
  %v656 = vmul.f32 %v524, 0.70710677
  %v657 = vmul.f32 %v527, 0.70710677
  %v658 = vmul.f32 %v529, 0.70710677
  %v659 = vmul.f32 %v595, %v595
  %v660 = vmin.f32 16.0, %v659
  %v661 = vmul.f32 %v660, 2.1237322e-06
  %v662 = vadd.f32 %v661, 0.00028619796
  %v663 = vmul.f32 %v660, %v662
  %v664 = vadd.f32 %v663, 0.0036580483
  %v665 = vmul.f32 %v660, %v664
  %v666 = vadd.f32 %v665, 0.05243302
  %v667 = vmul.f32 %v660, %v666
  %v668 = vadd.f32 %v667, 0.18741608
  %v669 = vmul.f32 %v660, %v668
  %v670 = vadd.f32 %v669, 1.1283791
  %v671 = vmul.f32 %v595, %v670
  %v672 = vmul.f32 %v660, 3.8918573e-05
  %v673 = vadd.f32 %v672, 0.001143296
  %v674 = vmul.f32 %v660, %v673
  %v675 = vadd.f32 %v674, 0.014752088
  %v676 = vmul.f32 %v660, %v675
  %v677 = vadd.f32 %v676, 0.112945676
  %v678 = vmul.f32 %v660, %v677
  %v679 = vadd.f32 %v678, 0.4994258
  %v680 = vmul.f32 %v660, %v679
  %v681 = vadd.f32 %v680, 1.0
  %v682 = vrcp.pop %v681
  %v683 = vmul.f32 %v681, %v682
  %v684 = vsub.f32 1.0, %v683
  %v685 = vmul.f32 %v682, %v684
  %v686 = vadd.f32 %v682, %v685
  %vm687 = vweird.f32 %v681
  %vm688 = vweird.f32 %v682
  %vm689 = vmor %vm687, %vm688
  %v690 = vsel %vm689, %v682, %v686
  %v691 = vand.u32 2147483647, %v681
  %vm692 = vcmp.eq.f32.partialorder %v691, 8.507059e+37
  %v693 = vand.u32 %v681, 2147483648
  %v694 = vor.u32 1.1754944e-38, %v693
  %v695 = vsel %vm692, %v694, %v690
  %v696 = vmul.f32 %v671, %v695
  %v697 = vmin.f32 %v696, 1.0
  %v698 = vmax.f32 %v697, -1.0
  %v699 = vmul.f32 %v596, %v596
  %v700 = vmin.f32 16.0, %v699
  %v701 = vmul.f32 %v700, 2.1237322e-06
  %v702 = vadd.f32 %v701, 0.00028619796
  %v703 = vmul.f32 %v700, %v702
  %v704 = vadd.f32 %v703, 0.0036580483
  %v705 = vmul.f32 %v700, %v704
  %v706 = vadd.f32 %v705, 0.05243302
  %v707 = vmul.f32 %v700, %v706
  %v708 = vadd.f32 %v707, 0.18741608
  %v709 = vmul.f32 %v700, %v708
  %v710 = vadd.f32 %v709, 1.1283791
  %v711 = vmul.f32 %v596, %v710
  %v712 = vmul.f32 %v700, 3.8918573e-05
  %v713 = vadd.f32 %v712, 0.001143296
  %v714 = vmul.f32 %v700, %v713
  %v715 = vadd.f32 %v714, 0.014752088
  %v716 = vmul.f32 %v700, %v715
  %v717 = vadd.f32 %v716, 0.112945676
  %v718 = vmul.f32 %v700, %v717
  %v719 = vadd.f32 %v718, 0.4994258
  %v720 = vmul.f32 %v700, %v719
  %v721 = vadd.f32 %v720, 1.0
  %v722 = vrcp.pop %v721
  %v723 = vmul.f32 %v721, %v722
  %v724 = vsub.f32 1.0, %v723
  %v725 = vmul.f32 %v722, %v724
  %v726 = vadd.f32 %v722, %v725
  %vm727 = vweird.f32 %v721
  %vm728 = vweird.f32 %v722
  %vm729 = vmor %vm727, %vm728
  %v730 = vsel %vm729, %v722, %v726
  %v731 = vand.u32 2147483647, %v721
  %vm732 = vcmp.eq.f32.partialorder %v731, 8.507059e+37
  %v733 = vand.u32 %v721, 2147483648
  %v734 = vor.u32 1.1754944e-38, %v733
  %v735 = vsel %vm732, %v734, %v730
  %v736 = vmul.f32 %v711, %v735
  %v737 = vmin.f32 %v736, 1.0
  %v738 = vmax.f32 %v737, -1.0
  %v739 = vmul.f32 %v597, %v597
  %v740 = vmin.f32 16.0, %v739
  %v741 = vmul.f32 %v740, 2.1237322e-06
  %v742 = vadd.f32 %v741, 0.00028619796
  %v743 = vmul.f32 %v740, %v742
  %v744 = vadd.f32 %v743, 0.0036580483
  %v745 = vmul.f32 %v740, %v744
  %v746 = vadd.f32 %v745, 0.05243302
  %v747 = vmul.f32 %v740, %v746
  %v748 = vadd.f32 %v747, 0.18741608
  %v749 = vmul.f32 %v740, %v748
  %v750 = vadd.f32 %v749, 1.1283791
  %v751 = vmul.f32 %v597, %v750
  %v752 = vmul.f32 %v740, 3.8918573e-05
  %v753 = vadd.f32 %v752, 0.001143296
  %v754 = vmul.f32 %v740, %v753
  %v755 = vadd.f32 %v754, 0.014752088
  %v756 = vmul.f32 %v740, %v755
  %v757 = vadd.f32 %v756, 0.112945676
  %v758 = vmul.f32 %v740, %v757
  %v759 = vadd.f32 %v758, 0.4994258
  %v760 = vmul.f32 %v740, %v759
  %v761 = vadd.f32 %v760, 1.0
  %v762 = vrcp.pop %v761
  %v763 = vmul.f32 %v761, %v762
  %v764 = vsub.f32 1.0, %v763
  %v765 = vmul.f32 %v762, %v764
  %v766 = vadd.f32 %v762, %v765
  %vm767 = vweird.f32 %v761
  %vm768 = vweird.f32 %v762
  %vm769 = vmor %vm767, %vm768
  %v770 = vsel %vm769, %v762, %v766
  %v771 = vand.u32 2147483647, %v761
  %vm772 = vcmp.eq.f32.partialorder %v771, 8.507059e+37
  %v773 = vand.u32 %v761, 2147483648
  %v774 = vor.u32 1.1754944e-38, %v773
  %v775 = vsel %vm772, %v774, %v770
  %v776 = vmul.f32 %v751, %v775
  %v777 = vmin.f32 %v776, 1.0
  %v778 = vmax.f32 %v777, -1.0
  %v779 = vmul.f32 %v598, %v598
  %v780 = vmin.f32 16.0, %v779
  %v781 = vmul.f32 %v780, 2.1237322e-06
  %v782 = vadd.f32 %v781, 0.00028619796
  %v783 = vmul.f32 %v780, %v782
  %v784 = vadd.f32 %v783, 0.0036580483
  %v785 = vmul.f32 %v780, %v784
  %v786 = vadd.f32 %v785, 0.05243302
  %v787 = vmul.f32 %v780, %v786
  %v788 = vadd.f32 %v787, 0.18741608
  %v789 = vmul.f32 %v780, %v788
  %v790 = vadd.f32 %v789, 1.1283791
  %v791 = vmul.f32 %v598, %v790
  %v792 = vmul.f32 %v780, 3.8918573e-05
  %v793 = vadd.f32 %v792, 0.001143296
  %v794 = vmul.f32 %v780, %v793
  %v795 = vadd.f32 %v794, 0.014752088
  %v796 = vmul.f32 %v780, %v795
  %v797 = vadd.f32 %v796, 0.112945676
  %v798 = vmul.f32 %v780, %v797
  %v799 = vadd.f32 %v798, 0.4994258
  %v800 = vmul.f32 %v780, %v799
  %v801 = vadd.f32 %v800, 1.0
  %v802 = vrcp.pop %v801
  %v803 = vmul.f32 %v801, %v802
  %v804 = vsub.f32 1.0, %v803
  %v805 = vmul.f32 %v802, %v804
  %v806 = vadd.f32 %v802, %v805
  %vm807 = vweird.f32 %v801
  %vm808 = vweird.f32 %v802
  %vm809 = vmor %vm807, %vm808
  %v810 = vsel %vm809, %v802, %v806
  %v811 = vand.u32 2147483647, %v801
  %vm812 = vcmp.eq.f32.partialorder %v811, 8.507059e+37
  %v813 = vand.u32 %v801, 2147483648
  %v814 = vor.u32 1.1754944e-38, %v813
  %v815 = vsel %vm812, %v814, %v810
  %v816 = vmul.f32 %v791, %v815
  %v817 = vmin.f32 %v816, 1.0
  %v818 = vmax.f32 %v817, -1.0
  %v819 = vmul.f32 %v599, %v599
  %v820 = vmin.f32 16.0, %v819
  %v821 = vmul.f32 %v820, 2.1237322e-06
  %v822 = vadd.f32 %v821, 0.00028619796
  %v823 = vmul.f32 %v820, %v822
  %v824 = vadd.f32 %v823, 0.0036580483
  %v825 = vmul.f32 %v820, %v824
  %v826 = vadd.f32 %v825, 0.05243302
  %v827 = vmul.f32 %v820, %v826
  %v828 = vadd.f32 %v827, 0.18741608
  %v829 = vmul.f32 %v820, %v828
  %v830 = vadd.f32 %v829, 1.1283791
  %v831 = vmul.f32 %v599, %v830
  %v832 = vmul.f32 %v820, 3.8918573e-05
  %v833 = vadd.f32 %v832, 0.001143296
  %v834 = vmul.f32 %v820, %v833
  %v835 = vadd.f32 %v834, 0.014752088
  %v836 = vmul.f32 %v820, %v835
  %v837 = vadd.f32 %v836, 0.112945676
  %v838 = vmul.f32 %v820, %v837
  %v839 = vadd.f32 %v838, 0.4994258
  %v840 = vmul.f32 %v820, %v839
  %v841 = vadd.f32 %v840, 1.0
  %v842 = vrcp.pop %v841
  %v843 = vmul.f32 %v841, %v842
  %v844 = vsub.f32 1.0, %v843
  %v845 = vmul.f32 %v842, %v844
  %v846 = vadd.f32 %v842, %v845
  %vm847 = vweird.f32 %v841
  %vm848 = vweird.f32 %v842
  %vm849 = vmor %vm847, %vm848
  %v850 = vsel %vm849, %v842, %v846
  %v851 = vand.u32 2147483647, %v841
  %vm852 = vcmp.eq.f32.partialorder %v851, 8.507059e+37
  %v853 = vand.u32 %v841, 2147483648
  %v854 = vor.u32 1.1754944e-38, %v853
  %v855 = vsel %vm852, %v854, %v850
  %v856 = vmul.f32 %v831, %v855
  %v857 = vmin.f32 %v856, 1.0
  %v858 = vmax.f32 %v857, -1.0
  %v859 = vmul.f32 %v600, %v600
  %v860 = vmin.f32 16.0, %v859
  %v861 = vmul.f32 %v860, 2.1237322e-06
  %v862 = vadd.f32 %v861, 0.00028619796
  %v863 = vmul.f32 %v860, %v862
  %v864 = vadd.f32 %v863, 0.0036580483
  %v865 = vmul.f32 %v860, %v864
  %v866 = vadd.f32 %v865, 0.05243302
  %v867 = vmul.f32 %v860, %v866
  %v868 = vadd.f32 %v867, 0.18741608
  %v869 = vmul.f32 %v860, %v868
  %v870 = vadd.f32 %v869, 1.1283791
  %v871 = vmul.f32 %v600, %v870
  %v872 = vmul.f32 %v860, 3.8918573e-05
  %v873 = vadd.f32 %v872, 0.001143296
  %v874 = vmul.f32 %v860, %v873
  %v875 = vadd.f32 %v874, 0.014752088
  %v876 = vmul.f32 %v860, %v875
  %v877 = vadd.f32 %v876, 0.112945676
  %v878 = vmul.f32 %v860, %v877
  %v879 = vadd.f32 %v878, 0.4994258
  %v880 = vmul.f32 %v860, %v879
  %v881 = vadd.f32 %v880, 1.0
  %v882 = vrcp.pop %v881
  %v883 = vmul.f32 %v881, %v882
  %v884 = vsub.f32 1.0, %v883
  %v885 = vmul.f32 %v882, %v884
  %v886 = vadd.f32 %v882, %v885
  %vm887 = vweird.f32 %v881
  %vm888 = vweird.f32 %v882
  %vm889 = vmor %vm887, %vm888
  %v890 = vsel %vm889, %v882, %v886
  %v891 = vand.u32 2147483647, %v881
  %vm892 = vcmp.eq.f32.partialorder %v891, 8.507059e+37
  %v893 = vand.u32 %v881, 2147483648
  %v894 = vor.u32 1.1754944e-38, %v893
  %v895 = vsel %vm892, %v894, %v890
  %v896 = vmul.f32 %v871, %v895
  %v897 = vmin.f32 %v896, 1.0
  %v898 = vmax.f32 %v897, -1.0
  %v899 = vmul.f32 %v601, %v601
  %v900 = vmin.f32 16.0, %v899
  %v901 = vmul.f32 %v900, 2.1237322e-06
  %v902 = vadd.f32 %v901, 0.00028619796
  %v903 = vmul.f32 %v900, %v902
  %v904 = vadd.f32 %v903, 0.0036580483
  %v905 = vmul.f32 %v900, %v904
  %v906 = vadd.f32 %v905, 0.05243302
  %v907 = vmul.f32 %v900, %v906
  %v908 = vadd.f32 %v907, 0.18741608
  %v909 = vmul.f32 %v900, %v908
  %v910 = vadd.f32 %v909, 1.1283791
  %v911 = vmul.f32 %v601, %v910
  %v912 = vmul.f32 %v900, 3.8918573e-05
  %v913 = vadd.f32 %v912, 0.001143296
  %v914 = vmul.f32 %v900, %v913
  %v915 = vadd.f32 %v914, 0.014752088
  %v916 = vmul.f32 %v900, %v915
  %v917 = vadd.f32 %v916, 0.112945676
  %v918 = vmul.f32 %v900, %v917
  %v919 = vadd.f32 %v918, 0.4994258
  %v920 = vmul.f32 %v900, %v919
  %v921 = vadd.f32 %v920, 1.0
  %v922 = vrcp.pop %v921
  %v923 = vmul.f32 %v921, %v922
  %v924 = vsub.f32 1.0, %v923
  %v925 = vmul.f32 %v922, %v924
  %v926 = vadd.f32 %v922, %v925
  %vm927 = vweird.f32 %v921
  %vm928 = vweird.f32 %v922
  %vm929 = vmor %vm927, %vm928
  %v930 = vsel %vm929, %v922, %v926
  %v931 = vand.u32 2147483647, %v921
  %vm932 = vcmp.eq.f32.partialorder %v931, 8.507059e+37
  %v933 = vand.u32 %v921, 2147483648
  %v934 = vor.u32 1.1754944e-38, %v933
  %v935 = vsel %vm932, %v934, %v930
  %v936 = vmul.f32 %v911, %v935
  %v937 = vmin.f32 %v936, 1.0
  %v938 = vmax.f32 %v937, -1.0
  %v939 = vmul.f32 %v602, %v602
  %v940 = vmin.f32 16.0, %v939
  %v941 = vmul.f32 %v940, 2.1237322e-06
  %v942 = vadd.f32 %v941, 0.00028619796
  %v943 = vmul.f32 %v940, %v942
  %v944 = vadd.f32 %v943, 0.0036580483
  %v945 = vmul.f32 %v940, %v944
  %v946 = vadd.f32 %v945, 0.05243302
  %v947 = vmul.f32 %v940, %v946
  %v948 = vadd.f32 %v947, 0.18741608
  %v949 = vmul.f32 %v940, %v948
  %v950 = vadd.f32 %v949, 1.1283791
  %v951 = vmul.f32 %v602, %v950
  %v952 = vmul.f32 %v940, 3.8918573e-05
  %v953 = vadd.f32 %v952, 0.001143296
  %v954 = vmul.f32 %v940, %v953
  %v955 = vadd.f32 %v954, 0.014752088
  %v956 = vmul.f32 %v940, %v955
  %v957 = vadd.f32 %v956, 0.112945676
  %v958 = vmul.f32 %v940, %v957
  %v959 = vadd.f32 %v958, 0.4994258
  %v960 = vmul.f32 %v940, %v959
  %v961 = vadd.f32 %v960, 1.0
  %v962 = vrcp.pop %v961
  %v963 = vmul.f32 %v961, %v962
  %v964 = vsub.f32 1.0, %v963
  %v965 = vmul.f32 %v962, %v964
  %v966 = vadd.f32 %v962, %v965
  %vm967 = vweird.f32 %v961
  %vm968 = vweird.f32 %v962
  %vm969 = vmor %vm967, %vm968
  %v970 = vsel %vm969, %v962, %v966
  %v971 = vand.u32 2147483647, %v961
  %vm972 = vcmp.eq.f32.partialorder %v971, 8.507059e+37
  %v973 = vand.u32 %v961, 2147483648
  %v974 = vor.u32 1.1754944e-38, %v973
  %v975 = vsel %vm972, %v974, %v970
  %v976 = vmul.f32 %v951, %v975
  %v977 = vmin.f32 %v976, 1.0
  %v978 = vmax.f32 %v977, -1.0
  %v979 = vmul.f32 %v603, %v603
  %v980 = vmin.f32 16.0, %v979
  %v981 = vmul.f32 %v980, 2.1237322e-06
  %v982 = vadd.f32 %v981, 0.00028619796
  %v983 = vmul.f32 %v980, %v982
  %v984 = vadd.f32 %v983, 0.0036580483
  %v985 = vmul.f32 %v980, %v984
  %v986 = vadd.f32 %v985, 0.05243302
  %v987 = vmul.f32 %v980, %v986
  %v988 = vadd.f32 %v987, 0.18741608
  %v989 = vmul.f32 %v980, %v988
  %v990 = vadd.f32 %v989, 1.1283791
  %v991 = vmul.f32 %v603, %v990
  %v992 = vmul.f32 %v980, 3.8918573e-05
  %v993 = vadd.f32 %v992, 0.001143296
  %v994 = vmul.f32 %v980, %v993
  %v995 = vadd.f32 %v994, 0.014752088
  %v996 = vmul.f32 %v980, %v995
  %v997 = vadd.f32 %v996, 0.112945676
  %v998 = vmul.f32 %v980, %v997
  %v999 = vadd.f32 %v998, 0.4994258
  %v1000 = vmul.f32 %v980, %v999
  %v1001 = vadd.f32 %v1000, 1.0
  %v1002 = vrcp.pop %v1001
  %v1003 = vmul.f32 %v1001, %v1002
  %v1004 = vsub.f32 1.0, %v1003
  %v1005 = vmul.f32 %v1002, %v1004
  %v1006 = vadd.f32 %v1002, %v1005
  %vm1007 = vweird.f32 %v1001
  %vm1008 = vweird.f32 %v1002
  %vm1009 = vmor %vm1007, %vm1008
  %v1010 = vsel %vm1009, %v1002, %v1006
  %v1011 = vand.u32 2147483647, %v1001
  %vm1012 = vcmp.eq.f32.partialorder %v1011, 8.507059e+37
  %v1013 = vand.u32 %v1001, 2147483648
  %v1014 = vor.u32 1.1754944e-38, %v1013
  %v1015 = vsel %vm1012, %v1014, %v1010
  %v1016 = vmul.f32 %v991, %v1015
  %v1017 = vmin.f32 %v1016, 1.0
  %v1018 = vmax.f32 %v1017, -1.0
  %v1019 = vmul.f32 %v604, %v604
  %v1020 = vmin.f32 16.0, %v1019
  %v1021 = vmul.f32 %v1020, 2.1237322e-06
  %v1022 = vadd.f32 %v1021, 0.00028619796
  %v1023 = vmul.f32 %v1020, %v1022
  %v1024 = vadd.f32 %v1023, 0.0036580483
  %v1025 = vmul.f32 %v1020, %v1024
  %v1026 = vadd.f32 %v1025, 0.05243302
  %v1027 = vmul.f32 %v1020, %v1026
  %v1028 = vadd.f32 %v1027, 0.18741608
  %v1029 = vmul.f32 %v1020, %v1028
  %v1030 = vadd.f32 %v1029, 1.1283791
  %v1031 = vmul.f32 %v604, %v1030
  %v1032 = vmul.f32 %v1020, 3.8918573e-05
  %v1033 = vadd.f32 %v1032, 0.001143296
  %v1034 = vmul.f32 %v1020, %v1033
  %v1035 = vadd.f32 %v1034, 0.014752088
  %v1036 = vmul.f32 %v1020, %v1035
  %v1037 = vadd.f32 %v1036, 0.112945676
  %v1038 = vmul.f32 %v1020, %v1037
  %v1039 = vadd.f32 %v1038, 0.4994258
  %v1040 = vmul.f32 %v1020, %v1039
  %v1041 = vadd.f32 %v1040, 1.0
  %v1042 = vrcp.pop %v1041
  %v1043 = vmul.f32 %v1041, %v1042
  %v1044 = vsub.f32 1.0, %v1043
  %v1045 = vmul.f32 %v1042, %v1044
  %v1046 = vadd.f32 %v1042, %v1045
  %vm1047 = vweird.f32 %v1041
  %vm1048 = vweird.f32 %v1042
  %vm1049 = vmor %vm1047, %vm1048
  %v1050 = vsel %vm1049, %v1042, %v1046
  %v1051 = vand.u32 2147483647, %v1041
  %vm1052 = vcmp.eq.f32.partialorder %v1051, 8.507059e+37
  %v1053 = vand.u32 %v1041, 2147483648
  %v1054 = vor.u32 1.1754944e-38, %v1053
  %v1055 = vsel %vm1052, %v1054, %v1050
  %v1056 = vmul.f32 %v1031, %v1055
  %v1057 = vmin.f32 %v1056, 1.0
  %v1058 = vmax.f32 %v1057, -1.0
  %v1059 = vmul.f32 %v605, %v605
  %v1060 = vmin.f32 16.0, %v1059
  %v1061 = vmul.f32 %v1060, 2.1237322e-06
  %v1062 = vadd.f32 %v1061, 0.00028619796
  %v1063 = vmul.f32 %v1060, %v1062
  %v1064 = vadd.f32 %v1063, 0.0036580483
  %v1065 = vmul.f32 %v1060, %v1064
  %v1066 = vadd.f32 %v1065, 0.05243302
  %v1067 = vmul.f32 %v1060, %v1066
  %v1068 = vadd.f32 %v1067, 0.18741608
  %v1069 = vmul.f32 %v1060, %v1068
  %v1070 = vadd.f32 %v1069, 1.1283791
  %v1071 = vmul.f32 %v605, %v1070
  %v1072 = vmul.f32 %v1060, 3.8918573e-05
  %v1073 = vadd.f32 %v1072, 0.001143296
  %v1074 = vmul.f32 %v1060, %v1073
  %v1075 = vadd.f32 %v1074, 0.014752088
  %v1076 = vmul.f32 %v1060, %v1075
  %v1077 = vadd.f32 %v1076, 0.112945676
  %v1078 = vmul.f32 %v1060, %v1077
  %v1079 = vadd.f32 %v1078, 0.4994258
  %v1080 = vmul.f32 %v1060, %v1079
  %v1081 = vadd.f32 %v1080, 1.0
  %v1082 = vrcp.pop %v1081
  %v1083 = vmul.f32 %v1081, %v1082
  %v1084 = vsub.f32 1.0, %v1083
  %v1085 = vmul.f32 %v1082, %v1084
  %v1086 = vadd.f32 %v1082, %v1085
  %vm1087 = vweird.f32 %v1081
  %vm1088 = vweird.f32 %v1082
  %vm1089 = vmor %vm1087, %vm1088
  %v1090 = vsel %vm1089, %v1082, %v1086
  %v1091 = vand.u32 2147483647, %v1081
  %vm1092 = vcmp.eq.f32.partialorder %v1091, 8.507059e+37
  %v1093 = vand.u32 %v1081, 2147483648
  %v1094 = vor.u32 1.1754944e-38, %v1093
  %v1095 = vsel %vm1092, %v1094, %v1090
  %v1096 = vmul.f32 %v1071, %v1095
  %v1097 = vmin.f32 %v1096, 1.0
  %v1098 = vmax.f32 %v1097, -1.0
  %v1099 = vmul.f32 %v606, %v606
  %v1100 = vmin.f32 16.0, %v1099
  %v1101 = vmul.f32 %v1100, 2.1237322e-06
  %v1102 = vadd.f32 %v1101, 0.00028619796
  %v1103 = vmul.f32 %v1100, %v1102
  %v1104 = vadd.f32 %v1103, 0.0036580483
  %v1105 = vmul.f32 %v1100, %v1104
  %v1106 = vadd.f32 %v1105, 0.05243302
  %v1107 = vmul.f32 %v1100, %v1106
  %v1108 = vadd.f32 %v1107, 0.18741608
  %v1109 = vmul.f32 %v1100, %v1108
  %v1110 = vadd.f32 %v1109, 1.1283791
  %v1111 = vmul.f32 %v606, %v1110
  %v1112 = vmul.f32 %v1100, 3.8918573e-05
  %v1113 = vadd.f32 %v1112, 0.001143296
  %v1114 = vmul.f32 %v1100, %v1113
  %v1115 = vadd.f32 %v1114, 0.014752088
  %v1116 = vmul.f32 %v1100, %v1115
  %v1117 = vadd.f32 %v1116, 0.112945676
  %v1118 = vmul.f32 %v1100, %v1117
  %v1119 = vadd.f32 %v1118, 0.4994258
  %v1120 = vmul.f32 %v1100, %v1119
  %v1121 = vadd.f32 %v1120, 1.0
  %v1122 = vrcp.pop %v1121
  %v1123 = vmul.f32 %v1121, %v1122
  %v1124 = vsub.f32 1.0, %v1123
  %v1125 = vmul.f32 %v1122, %v1124
  %v1126 = vadd.f32 %v1122, %v1125
  %vm1127 = vweird.f32 %v1121
  %vm1128 = vweird.f32 %v1122
  %vm1129 = vmor %vm1127, %vm1128
  %v1130 = vsel %vm1129, %v1122, %v1126
  %v1131 = vand.u32 2147483647, %v1121
  %vm1132 = vcmp.eq.f32.partialorder %v1131, 8.507059e+37
  %v1133 = vand.u32 %v1121, 2147483648
  %v1134 = vor.u32 1.1754944e-38, %v1133
  %v1135 = vsel %vm1132, %v1134, %v1130
  %v1136 = vmul.f32 %v1111, %v1135
  %v1137 = vmin.f32 %v1136, 1.0
  %v1138 = vmax.f32 %v1137, -1.0
  %v1139 = vmul.f32 %v607, %v607
  %v1140 = vmin.f32 16.0, %v1139
  %v1141 = vmul.f32 %v1140, 2.1237322e-06
  %v1142 = vadd.f32 %v1141, 0.00028619796
  %v1143 = vmul.f32 %v1140, %v1142
  %v1144 = vadd.f32 %v1143, 0.0036580483
  %v1145 = vmul.f32 %v1140, %v1144
  %v1146 = vadd.f32 %v1145, 0.05243302
  %v1147 = vmul.f32 %v1140, %v1146
  %v1148 = vadd.f32 %v1147, 0.18741608
  %v1149 = vmul.f32 %v1140, %v1148
  %v1150 = vadd.f32 %v1149, 1.1283791
  %v1151 = vmul.f32 %v607, %v1150
  %v1152 = vmul.f32 %v1140, 3.8918573e-05
  %v1153 = vadd.f32 %v1152, 0.001143296
  %v1154 = vmul.f32 %v1140, %v1153
  %v1155 = vadd.f32 %v1154, 0.014752088
  %v1156 = vmul.f32 %v1140, %v1155
  %v1157 = vadd.f32 %v1156, 0.112945676
  %v1158 = vmul.f32 %v1140, %v1157
  %v1159 = vadd.f32 %v1158, 0.4994258
  %v1160 = vmul.f32 %v1140, %v1159
  %v1161 = vadd.f32 %v1160, 1.0
  %v1162 = vrcp.pop %v1161
  %v1163 = vmul.f32 %v1161, %v1162
  %v1164 = vsub.f32 1.0, %v1163
  %v1165 = vmul.f32 %v1162, %v1164
  %v1166 = vadd.f32 %v1162, %v1165
  %vm1167 = vweird.f32 %v1161
  %vm1168 = vweird.f32 %v1162
  %vm1169 = vmor %vm1167, %vm1168
  %v1170 = vsel %vm1169, %v1162, %v1166
  %v1171 = vand.u32 2147483647, %v1161
  %vm1172 = vcmp.eq.f32.partialorder %v1171, 8.507059e+37
  %v1173 = vand.u32 %v1161, 2147483648
  %v1174 = vor.u32 1.1754944e-38, %v1173
  %v1175 = vsel %vm1172, %v1174, %v1170
  %v1176 = vmul.f32 %v1151, %v1175
  %v1177 = vmin.f32 %v1176, 1.0
  %v1178 = vmax.f32 %v1177, -1.0
  %v1179 = vmul.f32 %v608, %v608
  %v1180 = vmin.f32 16.0, %v1179
  %v1181 = vmul.f32 %v1180, 2.1237322e-06
  %v1182 = vadd.f32 %v1181, 0.00028619796
  %v1183 = vmul.f32 %v1180, %v1182
  %v1184 = vadd.f32 %v1183, 0.0036580483
  %v1185 = vmul.f32 %v1180, %v1184
  %v1186 = vadd.f32 %v1185, 0.05243302
  %v1187 = vmul.f32 %v1180, %v1186
  %v1188 = vadd.f32 %v1187, 0.18741608
  %v1189 = vmul.f32 %v1180, %v1188
  %v1190 = vadd.f32 %v1189, 1.1283791
  %v1191 = vmul.f32 %v608, %v1190
  %v1192 = vmul.f32 %v1180, 3.8918573e-05
  %v1193 = vadd.f32 %v1192, 0.001143296
  %v1194 = vmul.f32 %v1180, %v1193
  %v1195 = vadd.f32 %v1194, 0.014752088
  %v1196 = vmul.f32 %v1180, %v1195
  %v1197 = vadd.f32 %v1196, 0.112945676
  %v1198 = vmul.f32 %v1180, %v1197
  %v1199 = vadd.f32 %v1198, 0.4994258
  %v1200 = vmul.f32 %v1180, %v1199
  %v1201 = vadd.f32 %v1200, 1.0
  %v1202 = vrcp.pop %v1201
  %v1203 = vmul.f32 %v1201, %v1202
  %v1204 = vsub.f32 1.0, %v1203
  %v1205 = vmul.f32 %v1202, %v1204
  %v1206 = vadd.f32 %v1202, %v1205
  %vm1207 = vweird.f32 %v1201
  %vm1208 = vweird.f32 %v1202
  %vm1209 = vmor %vm1207, %vm1208
  %v1210 = vsel %vm1209, %v1202, %v1206
  %v1211 = vand.u32 2147483647, %v1201
  %vm1212 = vcmp.eq.f32.partialorder %v1211, 8.507059e+37
  %v1213 = vand.u32 %v1201, 2147483648
  %v1214 = vor.u32 1.1754944e-38, %v1213
  %v1215 = vsel %vm1212, %v1214, %v1210
  %v1216 = vmul.f32 %v1191, %v1215
  %v1217 = vmin.f32 %v1216, 1.0
  %v1218 = vmax.f32 %v1217, -1.0
  %v1219 = vmul.f32 %v609, %v609
  %v1220 = vmin.f32 16.0, %v1219
  %v1221 = vmul.f32 %v1220, 2.1237322e-06
  %v1222 = vadd.f32 %v1221, 0.00028619796
  %v1223 = vmul.f32 %v1220, %v1222
  %v1224 = vadd.f32 %v1223, 0.0036580483
  %v1225 = vmul.f32 %v1220, %v1224
  %v1226 = vadd.f32 %v1225, 0.05243302
  %v1227 = vmul.f32 %v1220, %v1226
  %v1228 = vadd.f32 %v1227, 0.18741608
  %v1229 = vmul.f32 %v1220, %v1228
  %v1230 = vadd.f32 %v1229, 1.1283791
  %v1231 = vmul.f32 %v609, %v1230
  %v1232 = vmul.f32 %v1220, 3.8918573e-05
  %v1233 = vadd.f32 %v1232, 0.001143296
  %v1234 = vmul.f32 %v1220, %v1233
  %v1235 = vadd.f32 %v1234, 0.014752088
  %v1236 = vmul.f32 %v1220, %v1235
  %v1237 = vadd.f32 %v1236, 0.112945676
  %v1238 = vmul.f32 %v1220, %v1237
  %v1239 = vadd.f32 %v1238, 0.4994258
  %v1240 = vmul.f32 %v1220, %v1239
  %v1241 = vadd.f32 %v1240, 1.0
  %v1242 = vrcp.pop %v1241
  %v1243 = vmul.f32 %v1241, %v1242
  %v1244 = vsub.f32 1.0, %v1243
  %v1245 = vmul.f32 %v1242, %v1244
  %v1246 = vadd.f32 %v1242, %v1245
  %vm1247 = vweird.f32 %v1241
  %vm1248 = vweird.f32 %v1242
  %vm1249 = vmor %vm1247, %vm1248
  %v1250 = vsel %vm1249, %v1242, %v1246
  %v1251 = vand.u32 2147483647, %v1241
  %vm1252 = vcmp.eq.f32.partialorder %v1251, 8.507059e+37
  %v1253 = vand.u32 %v1241, 2147483648
  %v1254 = vor.u32 1.1754944e-38, %v1253
  %v1255 = vsel %vm1252, %v1254, %v1250
  %v1256 = vmul.f32 %v1231, %v1255
  %v1257 = vmin.f32 %v1256, 1.0
  %v1258 = vmax.f32 %v1257, -1.0
  %v1259 = vmul.f32 %v610, %v610
  %v1260 = vmin.f32 16.0, %v1259
  %v1261 = vmul.f32 %v1260, 2.1237322e-06
  %v1262 = vadd.f32 %v1261, 0.00028619796
  %v1263 = vmul.f32 %v1260, %v1262
  %v1264 = vadd.f32 %v1263, 0.0036580483
  %v1265 = vmul.f32 %v1260, %v1264
  %v1266 = vadd.f32 %v1265, 0.05243302
  %v1267 = vmul.f32 %v1260, %v1266
  %v1268 = vadd.f32 %v1267, 0.18741608
  %v1269 = vmul.f32 %v1260, %v1268
  %v1270 = vadd.f32 %v1269, 1.1283791
  %v1271 = vmul.f32 %v610, %v1270
  %v1272 = vmul.f32 %v1260, 3.8918573e-05
  %v1273 = vadd.f32 %v1272, 0.001143296
  %v1274 = vmul.f32 %v1260, %v1273
  %v1275 = vadd.f32 %v1274, 0.014752088
  %v1276 = vmul.f32 %v1260, %v1275
  %v1277 = vadd.f32 %v1276, 0.112945676
  %v1278 = vmul.f32 %v1260, %v1277
  %v1279 = vadd.f32 %v1278, 0.4994258
  %v1280 = vmul.f32 %v1260, %v1279
  %v1281 = vadd.f32 %v1280, 1.0
  %v1282 = vrcp.pop %v1281
  %v1283 = vmul.f32 %v1281, %v1282
  %v1284 = vsub.f32 1.0, %v1283
  %v1285 = vmul.f32 %v1282, %v1284
  %v1286 = vadd.f32 %v1282, %v1285
  %vm1287 = vweird.f32 %v1281
  %vm1288 = vweird.f32 %v1282
  %vm1289 = vmor %vm1287, %vm1288
  %v1290 = vsel %vm1289, %v1282, %v1286
  %v1291 = vand.u32 2147483647, %v1281
  %vm1292 = vcmp.eq.f32.partialorder %v1291, 8.507059e+37
  %v1293 = vand.u32 %v1281, 2147483648
  %v1294 = vor.u32 1.1754944e-38, %v1293
  %v1295 = vsel %vm1292, %v1294, %v1290
  %v1296 = vmul.f32 %v1271, %v1295
  %v1297 = vmin.f32 %v1296, 1.0
  %v1298 = vmax.f32 %v1297, -1.0
  %v1299 = vmul.f32 %v611, %v611
  %v1300 = vmin.f32 16.0, %v1299
  %v1301 = vmul.f32 %v1300, 2.1237322e-06
  %v1302 = vadd.f32 %v1301, 0.00028619796
  %v1303 = vmul.f32 %v1300, %v1302
  %v1304 = vadd.f32 %v1303, 0.0036580483
  %v1305 = vmul.f32 %v1300, %v1304
  %v1306 = vadd.f32 %v1305, 0.05243302
  %v1307 = vmul.f32 %v1300, %v1306
  %v1308 = vadd.f32 %v1307, 0.18741608
  %v1309 = vmul.f32 %v1300, %v1308
  %v1310 = vadd.f32 %v1309, 1.1283791
  %v1311 = vmul.f32 %v611, %v1310
  %v1312 = vmul.f32 %v1300, 3.8918573e-05
  %v1313 = vadd.f32 %v1312, 0.001143296
  %v1314 = vmul.f32 %v1300, %v1313
  %v1315 = vadd.f32 %v1314, 0.014752088
  %v1316 = vmul.f32 %v1300, %v1315
  %v1317 = vadd.f32 %v1316, 0.112945676
  %v1318 = vmul.f32 %v1300, %v1317
  %v1319 = vadd.f32 %v1318, 0.4994258
  %v1320 = vmul.f32 %v1300, %v1319
  %v1321 = vadd.f32 %v1320, 1.0
  %v1322 = vrcp.pop %v1321
  %v1323 = vmul.f32 %v1321, %v1322
  %v1324 = vsub.f32 1.0, %v1323
  %v1325 = vmul.f32 %v1322, %v1324
  %v1326 = vadd.f32 %v1322, %v1325
  %vm1327 = vweird.f32 %v1321
  %vm1328 = vweird.f32 %v1322
  %vm1329 = vmor %vm1327, %vm1328
  %v1330 = vsel %vm1329, %v1322, %v1326
  %v1331 = vand.u32 2147483647, %v1321
  %vm1332 = vcmp.eq.f32.partialorder %v1331, 8.507059e+37
  %v1333 = vand.u32 %v1321, 2147483648
  %v1334 = vor.u32 1.1754944e-38, %v1333
  %v1335 = vsel %vm1332, %v1334, %v1330
  %v1336 = vmul.f32 %v1311, %v1335
  %v1337 = vmin.f32 %v1336, 1.0
  %v1338 = vmax.f32 %v1337, -1.0
  %v1339 = vmul.f32 %v612, %v612
  %v1340 = vmin.f32 16.0, %v1339
  %v1341 = vmul.f32 %v1340, 2.1237322e-06
  %v1342 = vadd.f32 %v1341, 0.00028619796
  %v1343 = vmul.f32 %v1340, %v1342
  %v1344 = vadd.f32 %v1343, 0.0036580483
  %v1345 = vmul.f32 %v1340, %v1344
  %v1346 = vadd.f32 %v1345, 0.05243302
  %v1347 = vmul.f32 %v1340, %v1346
  %v1348 = vadd.f32 %v1347, 0.18741608
  %v1349 = vmul.f32 %v1340, %v1348
  %v1350 = vadd.f32 %v1349, 1.1283791
  %v1351 = vmul.f32 %v612, %v1350
  %v1352 = vmul.f32 %v1340, 3.8918573e-05
  %v1353 = vadd.f32 %v1352, 0.001143296
  %v1354 = vmul.f32 %v1340, %v1353
  %v1355 = vadd.f32 %v1354, 0.014752088
  %v1356 = vmul.f32 %v1340, %v1355
  %v1357 = vadd.f32 %v1356, 0.112945676
  %v1358 = vmul.f32 %v1340, %v1357
  %v1359 = vadd.f32 %v1358, 0.4994258
  %v1360 = vmul.f32 %v1340, %v1359
  %v1361 = vadd.f32 %v1360, 1.0
  %v1362 = vrcp.pop %v1361
  %v1363 = vmul.f32 %v1361, %v1362
  %v1364 = vsub.f32 1.0, %v1363
  %v1365 = vmul.f32 %v1362, %v1364
  %v1366 = vadd.f32 %v1362, %v1365
  %vm1367 = vweird.f32 %v1361
  %vm1368 = vweird.f32 %v1362
  %vm1369 = vmor %vm1367, %vm1368
  %v1370 = vsel %vm1369, %v1362, %v1366
  %v1371 = vand.u32 2147483647, %v1361
  %vm1372 = vcmp.eq.f32.partialorder %v1371, 8.507059e+37
  %v1373 = vand.u32 %v1361, 2147483648
  %v1374 = vor.u32 1.1754944e-38, %v1373
  %v1375 = vsel %vm1372, %v1374, %v1370
  %v1376 = vmul.f32 %v1351, %v1375
  %v1377 = vmin.f32 %v1376, 1.0
  %v1378 = vmax.f32 %v1377, -1.0
  %v1379 = vmul.f32 %v613, %v613
  %v1380 = vmin.f32 16.0, %v1379
  %v1381 = vmul.f32 %v1380, 2.1237322e-06
  %v1382 = vadd.f32 %v1381, 0.00028619796
  %v1383 = vmul.f32 %v1380, %v1382
  %v1384 = vadd.f32 %v1383, 0.0036580483
  %v1385 = vmul.f32 %v1380, %v1384
  %v1386 = vadd.f32 %v1385, 0.05243302
  %v1387 = vmul.f32 %v1380, %v1386
  %v1388 = vadd.f32 %v1387, 0.18741608
  %v1389 = vmul.f32 %v1380, %v1388
  %v1390 = vadd.f32 %v1389, 1.1283791
  %v1391 = vmul.f32 %v613, %v1390
  %v1392 = vmul.f32 %v1380, 3.8918573e-05
  %v1393 = vadd.f32 %v1392, 0.001143296
  %v1394 = vmul.f32 %v1380, %v1393
  %v1395 = vadd.f32 %v1394, 0.014752088
  %v1396 = vmul.f32 %v1380, %v1395
  %v1397 = vadd.f32 %v1396, 0.112945676
  %v1398 = vmul.f32 %v1380, %v1397
  %v1399 = vadd.f32 %v1398, 0.4994258
  %v1400 = vmul.f32 %v1380, %v1399
  %v1401 = vadd.f32 %v1400, 1.0
  %v1402 = vrcp.pop %v1401
  %v1403 = vmul.f32 %v1401, %v1402
  %v1404 = vsub.f32 1.0, %v1403
  %v1405 = vmul.f32 %v1402, %v1404
  %v1406 = vadd.f32 %v1402, %v1405
  %vm1407 = vweird.f32 %v1401
  %vm1408 = vweird.f32 %v1402
  %vm1409 = vmor %vm1407, %vm1408
  %v1410 = vsel %vm1409, %v1402, %v1406
  %v1411 = vand.u32 2147483647, %v1401
  %vm1412 = vcmp.eq.f32.partialorder %v1411, 8.507059e+37
  %v1413 = vand.u32 %v1401, 2147483648
  %v1414 = vor.u32 1.1754944e-38, %v1413
  %v1415 = vsel %vm1412, %v1414, %v1410
  %v1416 = vmul.f32 %v1391, %v1415
  %v1417 = vmin.f32 %v1416, 1.0
  %v1418 = vmax.f32 %v1417, -1.0
  %v1419 = vmul.f32 %v614, %v614
  %v1420 = vmin.f32 16.0, %v1419
  %v1421 = vmul.f32 %v1420, 2.1237322e-06
  %v1422 = vadd.f32 %v1421, 0.00028619796
  %v1423 = vmul.f32 %v1420, %v1422
  %v1424 = vadd.f32 %v1423, 0.0036580483
  %v1425 = vmul.f32 %v1420, %v1424
  %v1426 = vadd.f32 %v1425, 0.05243302
  %v1427 = vmul.f32 %v1420, %v1426
  %v1428 = vadd.f32 %v1427, 0.18741608
  %v1429 = vmul.f32 %v1420, %v1428
  %v1430 = vadd.f32 %v1429, 1.1283791
  %v1431 = vmul.f32 %v614, %v1430
  %v1432 = vmul.f32 %v1420, 3.8918573e-05
  %v1433 = vadd.f32 %v1432, 0.001143296
  %v1434 = vmul.f32 %v1420, %v1433
  %v1435 = vadd.f32 %v1434, 0.014752088
  %v1436 = vmul.f32 %v1420, %v1435
  %v1437 = vadd.f32 %v1436, 0.112945676
  %v1438 = vmul.f32 %v1420, %v1437
  %v1439 = vadd.f32 %v1438, 0.4994258
  %v1440 = vmul.f32 %v1420, %v1439
  %v1441 = vadd.f32 %v1440, 1.0
  %v1442 = vrcp.pop %v1441
  %v1443 = vmul.f32 %v1441, %v1442
  %v1444 = vsub.f32 1.0, %v1443
  %v1445 = vmul.f32 %v1442, %v1444
  %v1446 = vadd.f32 %v1442, %v1445
  %vm1447 = vweird.f32 %v1441
  %vm1448 = vweird.f32 %v1442
  %vm1449 = vmor %vm1447, %vm1448
  %v1450 = vsel %vm1449, %v1442, %v1446
  %v1451 = vand.u32 2147483647, %v1441
  %vm1452 = vcmp.eq.f32.partialorder %v1451, 8.507059e+37
  %v1453 = vand.u32 %v1441, 2147483648
  %v1454 = vor.u32 1.1754944e-38, %v1453
  %v1455 = vsel %vm1452, %v1454, %v1450
  %v1456 = vmul.f32 %v1431, %v1455
  %v1457 = vmin.f32 %v1456, 1.0
  %v1458 = vmax.f32 %v1457, -1.0
  %v1459 = vmul.f32 %v615, %v615
  %v1460 = vmin.f32 16.0, %v1459
  %v1461 = vmul.f32 %v1460, 2.1237322e-06
  %v1462 = vadd.f32 %v1461, 0.00028619796
  %v1463 = vmul.f32 %v1460, %v1462
  %v1464 = vadd.f32 %v1463, 0.0036580483
  %v1465 = vmul.f32 %v1460, %v1464
  %v1466 = vadd.f32 %v1465, 0.05243302
  %v1467 = vmul.f32 %v1460, %v1466
  %v1468 = vadd.f32 %v1467, 0.18741608
  %v1469 = vmul.f32 %v1460, %v1468
  %v1470 = vadd.f32 %v1469, 1.1283791
  %v1471 = vmul.f32 %v615, %v1470
  %v1472 = vmul.f32 %v1460, 3.8918573e-05
  %v1473 = vadd.f32 %v1472, 0.001143296
  %v1474 = vmul.f32 %v1460, %v1473
  %v1475 = vadd.f32 %v1474, 0.014752088
  %v1476 = vmul.f32 %v1460, %v1475
  %v1477 = vadd.f32 %v1476, 0.112945676
  %v1478 = vmul.f32 %v1460, %v1477
  %v1479 = vadd.f32 %v1478, 0.4994258
  %v1480 = vmul.f32 %v1460, %v1479
  %v1481 = vadd.f32 %v1480, 1.0
  %v1482 = vrcp.pop %v1481
  %v1483 = vmul.f32 %v1481, %v1482
  %v1484 = vsub.f32 1.0, %v1483
  %v1485 = vmul.f32 %v1482, %v1484
  %v1486 = vadd.f32 %v1482, %v1485
  %vm1487 = vweird.f32 %v1481
  %vm1488 = vweird.f32 %v1482
  %vm1489 = vmor %vm1487, %vm1488
  %v1490 = vsel %vm1489, %v1482, %v1486
  %v1491 = vand.u32 2147483647, %v1481
  %vm1492 = vcmp.eq.f32.partialorder %v1491, 8.507059e+37
  %v1493 = vand.u32 %v1481, 2147483648
  %v1494 = vor.u32 1.1754944e-38, %v1493
  %v1495 = vsel %vm1492, %v1494, %v1490
  %v1496 = vmul.f32 %v1471, %v1495
  %v1497 = vmin.f32 %v1496, 1.0
  %v1498 = vmax.f32 %v1497, -1.0
  %v1499 = vmul.f32 %v616, %v616
  %v1500 = vmin.f32 16.0, %v1499
  %v1501 = vmul.f32 %v1500, 2.1237322e-06
  %v1502 = vadd.f32 %v1501, 0.00028619796
  %v1503 = vmul.f32 %v1500, %v1502
  %v1504 = vadd.f32 %v1503, 0.0036580483
  %v1505 = vmul.f32 %v1500, %v1504
  %v1506 = vadd.f32 %v1505, 0.05243302
  %v1507 = vmul.f32 %v1500, %v1506
  %v1508 = vadd.f32 %v1507, 0.18741608
  %v1509 = vmul.f32 %v1500, %v1508
  %v1510 = vadd.f32 %v1509, 1.1283791
  %v1511 = vmul.f32 %v616, %v1510
  %v1512 = vmul.f32 %v1500, 3.8918573e-05
  %v1513 = vadd.f32 %v1512, 0.001143296
  %v1514 = vmul.f32 %v1500, %v1513
  %v1515 = vadd.f32 %v1514, 0.014752088
  %v1516 = vmul.f32 %v1500, %v1515
  %v1517 = vadd.f32 %v1516, 0.112945676
  %v1518 = vmul.f32 %v1500, %v1517
  %v1519 = vadd.f32 %v1518, 0.4994258
  %v1520 = vmul.f32 %v1500, %v1519
  %v1521 = vadd.f32 %v1520, 1.0
  %v1522 = vrcp.pop %v1521
  %v1523 = vmul.f32 %v1521, %v1522
  %v1524 = vsub.f32 1.0, %v1523
  %v1525 = vmul.f32 %v1522, %v1524
  %v1526 = vadd.f32 %v1522, %v1525
  %vm1527 = vweird.f32 %v1521
  %vm1528 = vweird.f32 %v1522
  %vm1529 = vmor %vm1527, %vm1528
  %v1530 = vsel %vm1529, %v1522, %v1526
  %v1531 = vand.u32 2147483647, %v1521
  %vm1532 = vcmp.eq.f32.partialorder %v1531, 8.507059e+37
  %v1533 = vand.u32 %v1521, 2147483648
  %v1534 = vor.u32 1.1754944e-38, %v1533
  %v1535 = vsel %vm1532, %v1534, %v1530
  %v1536 = vmul.f32 %v1511, %v1535
  %v1537 = vmin.f32 %v1536, 1.0
  %v1538 = vmax.f32 %v1537, -1.0
  %v1539 = vmul.f32 %v617, %v617
  %v1540 = vmin.f32 16.0, %v1539
  %v1541 = vmul.f32 %v1540, 2.1237322e-06
  %v1542 = vadd.f32 %v1541, 0.00028619796
  %v1543 = vmul.f32 %v1540, %v1542
  %v1544 = vadd.f32 %v1543, 0.0036580483
  %v1545 = vmul.f32 %v1540, %v1544
  %v1546 = vadd.f32 %v1545, 0.05243302
  %v1547 = vmul.f32 %v1540, %v1546
  %v1548 = vadd.f32 %v1547, 0.18741608
  %v1549 = vmul.f32 %v1540, %v1548
  %v1550 = vadd.f32 %v1549, 1.1283791
  %v1551 = vmul.f32 %v617, %v1550
  %v1552 = vmul.f32 %v1540, 3.8918573e-05
  %v1553 = vadd.f32 %v1552, 0.001143296
  %v1554 = vmul.f32 %v1540, %v1553
  %v1555 = vadd.f32 %v1554, 0.014752088
  %v1556 = vmul.f32 %v1540, %v1555
  %v1557 = vadd.f32 %v1556, 0.112945676
  %v1558 = vmul.f32 %v1540, %v1557
  %v1559 = vadd.f32 %v1558, 0.4994258
  %v1560 = vmul.f32 %v1540, %v1559
  %v1561 = vadd.f32 %v1560, 1.0
  %v1562 = vrcp.pop %v1561
  %v1563 = vmul.f32 %v1561, %v1562
  %v1564 = vsub.f32 1.0, %v1563
  %v1565 = vmul.f32 %v1562, %v1564
  %v1566 = vadd.f32 %v1562, %v1565
  %vm1567 = vweird.f32 %v1561
  %vm1568 = vweird.f32 %v1562
  %vm1569 = vmor %vm1567, %vm1568
  %v1570 = vsel %vm1569, %v1562, %v1566
  %v1571 = vand.u32 2147483647, %v1561
  %vm1572 = vcmp.eq.f32.partialorder %v1571, 8.507059e+37
  %v1573 = vand.u32 %v1561, 2147483648
  %v1574 = vor.u32 1.1754944e-38, %v1573
  %v1575 = vsel %vm1572, %v1574, %v1570
  %v1576 = vmul.f32 %v1551, %v1575
  %v1577 = vmin.f32 %v1576, 1.0
  %v1578 = vmax.f32 %v1577, -1.0
  %v1579 = vmul.f32 %v618, %v618
  %v1580 = vmin.f32 16.0, %v1579
  %v1581 = vmul.f32 %v1580, 2.1237322e-06
  %v1582 = vadd.f32 %v1581, 0.00028619796
  %v1583 = vmul.f32 %v1580, %v1582
  %v1584 = vadd.f32 %v1583, 0.0036580483
  %v1585 = vmul.f32 %v1580, %v1584
  %v1586 = vadd.f32 %v1585, 0.05243302
  %v1587 = vmul.f32 %v1580, %v1586
  %v1588 = vadd.f32 %v1587, 0.18741608
  %v1589 = vmul.f32 %v1580, %v1588
  %v1590 = vadd.f32 %v1589, 1.1283791
  %v1591 = vmul.f32 %v618, %v1590
  %v1592 = vmul.f32 %v1580, 3.8918573e-05
  %v1593 = vadd.f32 %v1592, 0.001143296
  %v1594 = vmul.f32 %v1580, %v1593
  %v1595 = vadd.f32 %v1594, 0.014752088
  %v1596 = vmul.f32 %v1580, %v1595
  %v1597 = vadd.f32 %v1596, 0.112945676
  %v1598 = vmul.f32 %v1580, %v1597
  %v1599 = vadd.f32 %v1598, 0.4994258
  %v1600 = vmul.f32 %v1580, %v1599
  %v1601 = vadd.f32 %v1600, 1.0
  %v1602 = vrcp.pop %v1601
  %v1603 = vmul.f32 %v1601, %v1602
  %v1604 = vsub.f32 1.0, %v1603
  %v1605 = vmul.f32 %v1602, %v1604
  %v1606 = vadd.f32 %v1602, %v1605
  %vm1607 = vweird.f32 %v1601
  %vm1608 = vweird.f32 %v1602
  %vm1609 = vmor %vm1607, %vm1608
  %v1610 = vsel %vm1609, %v1602, %v1606
  %v1611 = vand.u32 2147483647, %v1601
  %vm1612 = vcmp.eq.f32.partialorder %v1611, 8.507059e+37
  %v1613 = vand.u32 %v1601, 2147483648
  %v1614 = vor.u32 1.1754944e-38, %v1613
  %v1615 = vsel %vm1612, %v1614, %v1610
  %v1616 = vmul.f32 %v1591, %v1615
  %v1617 = vmin.f32 %v1616, 1.0
  %v1618 = vmax.f32 %v1617, -1.0
  %v1619 = vmul.f32 %v619, %v619
  %v1620 = vmin.f32 16.0, %v1619
  %v1621 = vmul.f32 %v1620, 2.1237322e-06
  %v1622 = vadd.f32 %v1621, 0.00028619796
  %v1623 = vmul.f32 %v1620, %v1622
  %v1624 = vadd.f32 %v1623, 0.0036580483
  %v1625 = vmul.f32 %v1620, %v1624
  %v1626 = vadd.f32 %v1625, 0.05243302
  %v1627 = vmul.f32 %v1620, %v1626
  %v1628 = vadd.f32 %v1627, 0.18741608
  %v1629 = vmul.f32 %v1620, %v1628
  %v1630 = vadd.f32 %v1629, 1.1283791
  %v1631 = vmul.f32 %v619, %v1630
  %v1632 = vmul.f32 %v1620, 3.8918573e-05
  %v1633 = vadd.f32 %v1632, 0.001143296
  %v1634 = vmul.f32 %v1620, %v1633
  %v1635 = vadd.f32 %v1634, 0.014752088
  %v1636 = vmul.f32 %v1620, %v1635
  %v1637 = vadd.f32 %v1636, 0.112945676
  %v1638 = vmul.f32 %v1620, %v1637
  %v1639 = vadd.f32 %v1638, 0.4994258
  %v1640 = vmul.f32 %v1620, %v1639
  %v1641 = vadd.f32 %v1640, 1.0
  %v1642 = vrcp.pop %v1641
  %v1643 = vmul.f32 %v1641, %v1642
  %v1644 = vsub.f32 1.0, %v1643
  %v1645 = vmul.f32 %v1642, %v1644
  %v1646 = vadd.f32 %v1642, %v1645
  %vm1647 = vweird.f32 %v1641
  %vm1648 = vweird.f32 %v1642
  %vm1649 = vmor %vm1647, %vm1648
  %v1650 = vsel %vm1649, %v1642, %v1646
  %v1651 = vand.u32 2147483647, %v1641
  %vm1652 = vcmp.eq.f32.partialorder %v1651, 8.507059e+37
  %v1653 = vand.u32 %v1641, 2147483648
  %v1654 = vor.u32 1.1754944e-38, %v1653
  %v1655 = vsel %vm1652, %v1654, %v1650
  %v1656 = vmul.f32 %v1631, %v1655
  %v1657 = vmin.f32 %v1656, 1.0
  %v1658 = vmax.f32 %v1657, -1.0
  %v1659 = vmul.f32 %v620, %v620
  %v1660 = vmin.f32 16.0, %v1659
  %v1661 = vmul.f32 %v1660, 2.1237322e-06
  %v1662 = vadd.f32 %v1661, 0.00028619796
  %v1663 = vmul.f32 %v1660, %v1662
  %v1664 = vadd.f32 %v1663, 0.0036580483
  %v1665 = vmul.f32 %v1660, %v1664
  %v1666 = vadd.f32 %v1665, 0.05243302
  %v1667 = vmul.f32 %v1660, %v1666
  %v1668 = vadd.f32 %v1667, 0.18741608
  %v1669 = vmul.f32 %v1660, %v1668
  %v1670 = vadd.f32 %v1669, 1.1283791
  %v1671 = vmul.f32 %v620, %v1670
  %v1672 = vmul.f32 %v1660, 3.8918573e-05
  %v1673 = vadd.f32 %v1672, 0.001143296
  %v1674 = vmul.f32 %v1660, %v1673
  %v1675 = vadd.f32 %v1674, 0.014752088
  %v1676 = vmul.f32 %v1660, %v1675
  %v1677 = vadd.f32 %v1676, 0.112945676
  %v1678 = vmul.f32 %v1660, %v1677
  %v1679 = vadd.f32 %v1678, 0.4994258
  %v1680 = vmul.f32 %v1660, %v1679
  %v1681 = vadd.f32 %v1680, 1.0
  %v1682 = vrcp.pop %v1681
  %v1683 = vmul.f32 %v1681, %v1682
  %v1684 = vsub.f32 1.0, %v1683
  %v1685 = vmul.f32 %v1682, %v1684
  %v1686 = vadd.f32 %v1682, %v1685
  %vm1687 = vweird.f32 %v1681
  %vm1688 = vweird.f32 %v1682
  %vm1689 = vmor %vm1687, %vm1688
  %v1690 = vsel %vm1689, %v1682, %v1686
  %v1691 = vand.u32 2147483647, %v1681
  %vm1692 = vcmp.eq.f32.partialorder %v1691, 8.507059e+37
  %v1693 = vand.u32 %v1681, 2147483648
  %v1694 = vor.u32 1.1754944e-38, %v1693
  %v1695 = vsel %vm1692, %v1694, %v1690
  %v1696 = vmul.f32 %v1671, %v1695
  %v1697 = vmin.f32 %v1696, 1.0
  %v1698 = vmax.f32 %v1697, -1.0
  %v1699 = vmul.f32 %v621, %v621
  %v1700 = vmin.f32 16.0, %v1699
  %v1701 = vmul.f32 %v1700, 2.1237322e-06
  %v1702 = vadd.f32 %v1701, 0.00028619796
  %v1703 = vmul.f32 %v1700, %v1702
  %v1704 = vadd.f32 %v1703, 0.0036580483
  %v1705 = vmul.f32 %v1700, %v1704
  %v1706 = vadd.f32 %v1705, 0.05243302
  %v1707 = vmul.f32 %v1700, %v1706
  %v1708 = vadd.f32 %v1707, 0.18741608
  %v1709 = vmul.f32 %v1700, %v1708
  %v1710 = vadd.f32 %v1709, 1.1283791
  %v1711 = vmul.f32 %v621, %v1710
  %v1712 = vmul.f32 %v1700, 3.8918573e-05
  %v1713 = vadd.f32 %v1712, 0.001143296
  %v1714 = vmul.f32 %v1700, %v1713
  %v1715 = vadd.f32 %v1714, 0.014752088
  %v1716 = vmul.f32 %v1700, %v1715
  %v1717 = vadd.f32 %v1716, 0.112945676
  %v1718 = vmul.f32 %v1700, %v1717
  %v1719 = vadd.f32 %v1718, 0.4994258
  %v1720 = vmul.f32 %v1700, %v1719
  %v1721 = vadd.f32 %v1720, 1.0
  %v1722 = vrcp.pop %v1721
  %v1723 = vmul.f32 %v1721, %v1722
  %v1724 = vsub.f32 1.0, %v1723
  %v1725 = vmul.f32 %v1722, %v1724
  %v1726 = vadd.f32 %v1722, %v1725
  %vm1727 = vweird.f32 %v1721
  %vm1728 = vweird.f32 %v1722
  %vm1729 = vmor %vm1727, %vm1728
  %v1730 = vsel %vm1729, %v1722, %v1726
  %v1731 = vand.u32 2147483647, %v1721
  %vm1732 = vcmp.eq.f32.partialorder %v1731, 8.507059e+37
  %v1733 = vand.u32 %v1721, 2147483648
  %v1734 = vor.u32 1.1754944e-38, %v1733
  %v1735 = vsel %vm1732, %v1734, %v1730
  %v1736 = vmul.f32 %v1711, %v1735
  %v1737 = vmin.f32 %v1736, 1.0
  %v1738 = vmax.f32 %v1737, -1.0
  %v1739 = vmul.f32 %v622, %v622
  %v1740 = vmin.f32 16.0, %v1739
  %v1741 = vmul.f32 %v1740, 2.1237322e-06
  %v1742 = vadd.f32 %v1741, 0.00028619796
  %v1743 = vmul.f32 %v1740, %v1742
  %v1744 = vadd.f32 %v1743, 0.0036580483
  %v1745 = vmul.f32 %v1740, %v1744
  %v1746 = vadd.f32 %v1745, 0.05243302
  %v1747 = vmul.f32 %v1740, %v1746
  %v1748 = vadd.f32 %v1747, 0.18741608
  %v1749 = vmul.f32 %v1740, %v1748
  %v1750 = vadd.f32 %v1749, 1.1283791
  %v1751 = vmul.f32 %v622, %v1750
  %v1752 = vmul.f32 %v1740, 3.8918573e-05
  %v1753 = vadd.f32 %v1752, 0.001143296
  %v1754 = vmul.f32 %v1740, %v1753
  %v1755 = vadd.f32 %v1754, 0.014752088
  %v1756 = vmul.f32 %v1740, %v1755
  %v1757 = vadd.f32 %v1756, 0.112945676
  %v1758 = vmul.f32 %v1740, %v1757
  %v1759 = vadd.f32 %v1758, 0.4994258
  %v1760 = vmul.f32 %v1740, %v1759
  %v1761 = vadd.f32 %v1760, 1.0
  %v1762 = vrcp.pop %v1761
  %v1763 = vmul.f32 %v1761, %v1762
  %v1764 = vsub.f32 1.0, %v1763
  %v1765 = vmul.f32 %v1762, %v1764
  %v1766 = vadd.f32 %v1762, %v1765
  %vm1767 = vweird.f32 %v1761
  %vm1768 = vweird.f32 %v1762
  %vm1769 = vmor %vm1767, %vm1768
  %v1770 = vsel %vm1769, %v1762, %v1766
  %v1771 = vand.u32 2147483647, %v1761
  %vm1772 = vcmp.eq.f32.partialorder %v1771, 8.507059e+37
  %v1773 = vand.u32 %v1761, 2147483648
  %v1774 = vor.u32 1.1754944e-38, %v1773
  %v1775 = vsel %vm1772, %v1774, %v1770
  %v1776 = vmul.f32 %v1751, %v1775
  %v1777 = vmin.f32 %v1776, 1.0
  %v1778 = vmax.f32 %v1777, -1.0
  %v1779 = vmul.f32 %v623, %v623
  %v1780 = vmin.f32 16.0, %v1779
  %v1781 = vmul.f32 %v1780, 2.1237322e-06
  %v1782 = vadd.f32 %v1781, 0.00028619796
  %v1783 = vmul.f32 %v1780, %v1782
  %v1784 = vadd.f32 %v1783, 0.0036580483
  %v1785 = vmul.f32 %v1780, %v1784
  %v1786 = vadd.f32 %v1785, 0.05243302
  %v1787 = vmul.f32 %v1780, %v1786
  %v1788 = vadd.f32 %v1787, 0.18741608
  %v1789 = vmul.f32 %v1780, %v1788
  %v1790 = vadd.f32 %v1789, 1.1283791
  %v1791 = vmul.f32 %v623, %v1790
  %v1792 = vmul.f32 %v1780, 3.8918573e-05
  %v1793 = vadd.f32 %v1792, 0.001143296
  %v1794 = vmul.f32 %v1780, %v1793
  %v1795 = vadd.f32 %v1794, 0.014752088
  %v1796 = vmul.f32 %v1780, %v1795
  %v1797 = vadd.f32 %v1796, 0.112945676
  %v1798 = vmul.f32 %v1780, %v1797
  %v1799 = vadd.f32 %v1798, 0.4994258
  %v1800 = vmul.f32 %v1780, %v1799
  %v1801 = vadd.f32 %v1800, 1.0
  %v1802 = vrcp.pop %v1801
  %v1803 = vmul.f32 %v1801, %v1802
  %v1804 = vsub.f32 1.0, %v1803
  %v1805 = vmul.f32 %v1802, %v1804
  %v1806 = vadd.f32 %v1802, %v1805
  %vm1807 = vweird.f32 %v1801
  %vm1808 = vweird.f32 %v1802
  %vm1809 = vmor %vm1807, %vm1808
  %v1810 = vsel %vm1809, %v1802, %v1806
  %v1811 = vand.u32 2147483647, %v1801
  %vm1812 = vcmp.eq.f32.partialorder %v1811, 8.507059e+37
  %v1813 = vand.u32 %v1801, 2147483648
  %v1814 = vor.u32 1.1754944e-38, %v1813
  %v1815 = vsel %vm1812, %v1814, %v1810
  %v1816 = vmul.f32 %v1791, %v1815
  %v1817 = vmin.f32 %v1816, 1.0
  %v1818 = vmax.f32 %v1817, -1.0
  %v1819 = vmul.f32 %v624, %v624
  %v1820 = vmin.f32 16.0, %v1819
  %v1821 = vmul.f32 %v1820, 2.1237322e-06
  %v1822 = vadd.f32 %v1821, 0.00028619796
  %v1823 = vmul.f32 %v1820, %v1822
  %v1824 = vadd.f32 %v1823, 0.0036580483
  %v1825 = vmul.f32 %v1820, %v1824
  %v1826 = vadd.f32 %v1825, 0.05243302
  %v1827 = vmul.f32 %v1820, %v1826
  %v1828 = vadd.f32 %v1827, 0.18741608
  %v1829 = vmul.f32 %v1820, %v1828
  %v1830 = vadd.f32 %v1829, 1.1283791
  %v1831 = vmul.f32 %v624, %v1830
  %v1832 = vmul.f32 %v1820, 3.8918573e-05
  %v1833 = vadd.f32 %v1832, 0.001143296
  %v1834 = vmul.f32 %v1820, %v1833
  %v1835 = vadd.f32 %v1834, 0.014752088
  %v1836 = vmul.f32 %v1820, %v1835
  %v1837 = vadd.f32 %v1836, 0.112945676
  %v1838 = vmul.f32 %v1820, %v1837
  %v1839 = vadd.f32 %v1838, 0.4994258
  %v1840 = vmul.f32 %v1820, %v1839
  %v1841 = vadd.f32 %v1840, 1.0
  %v1842 = vrcp.pop %v1841
  %v1843 = vmul.f32 %v1841, %v1842
  %v1844 = vsub.f32 1.0, %v1843
  %v1845 = vmul.f32 %v1842, %v1844
  %v1846 = vadd.f32 %v1842, %v1845
  %vm1847 = vweird.f32 %v1841
  %vm1848 = vweird.f32 %v1842
  %vm1849 = vmor %vm1847, %vm1848
  %v1850 = vsel %vm1849, %v1842, %v1846
  %v1851 = vand.u32 2147483647, %v1841
  %vm1852 = vcmp.eq.f32.partialorder %v1851, 8.507059e+37
  %v1853 = vand.u32 %v1841, 2147483648
  %v1854 = vor.u32 1.1754944e-38, %v1853
  %v1855 = vsel %vm1852, %v1854, %v1850
  %v1856 = vmul.f32 %v1831, %v1855
  %v1857 = vmin.f32 %v1856, 1.0
  %v1858 = vmax.f32 %v1857, -1.0
  %v1859 = vmul.f32 %v625, %v625
  %v1860 = vmin.f32 16.0, %v1859
  %v1861 = vmul.f32 %v1860, 2.1237322e-06
  %v1862 = vadd.f32 %v1861, 0.00028619796
  %v1863 = vmul.f32 %v1860, %v1862
  %v1864 = vadd.f32 %v1863, 0.0036580483
  %v1865 = vmul.f32 %v1860, %v1864
  %v1866 = vadd.f32 %v1865, 0.05243302
  %v1867 = vmul.f32 %v1860, %v1866
  %v1868 = vadd.f32 %v1867, 0.18741608
  %v1869 = vmul.f32 %v1860, %v1868
  %v1870 = vadd.f32 %v1869, 1.1283791
  %v1871 = vmul.f32 %v625, %v1870
  %v1872 = vmul.f32 %v1860, 3.8918573e-05
  %v1873 = vadd.f32 %v1872, 0.001143296
  %v1874 = vmul.f32 %v1860, %v1873
  %v1875 = vadd.f32 %v1874, 0.014752088
  %v1876 = vmul.f32 %v1860, %v1875
  %v1877 = vadd.f32 %v1876, 0.112945676
  %v1878 = vmul.f32 %v1860, %v1877
  %v1879 = vadd.f32 %v1878, 0.4994258
  %v1880 = vmul.f32 %v1860, %v1879
  %v1881 = vadd.f32 %v1880, 1.0
  %v1882 = vrcp.pop %v1881
  %v1883 = vmul.f32 %v1881, %v1882
  %v1884 = vsub.f32 1.0, %v1883
  %v1885 = vmul.f32 %v1882, %v1884
  %v1886 = vadd.f32 %v1882, %v1885
  %vm1887 = vweird.f32 %v1881
  %vm1888 = vweird.f32 %v1882
  %vm1889 = vmor %vm1887, %vm1888
  %v1890 = vsel %vm1889, %v1882, %v1886
  %v1891 = vand.u32 2147483647, %v1881
  %vm1892 = vcmp.eq.f32.partialorder %v1891, 8.507059e+37
  %v1893 = vand.u32 %v1881, 2147483648
  %v1894 = vor.u32 1.1754944e-38, %v1893
  %v1895 = vsel %vm1892, %v1894, %v1890
  %v1896 = vmul.f32 %v1871, %v1895
  %v1897 = vmin.f32 %v1896, 1.0
  %v1898 = vmax.f32 %v1897, -1.0
  %v1899 = vmul.f32 %v626, %v626
  %v1900 = vmin.f32 16.0, %v1899
  %v1901 = vmul.f32 %v1900, 2.1237322e-06
  %v1902 = vadd.f32 %v1901, 0.00028619796
  %v1903 = vmul.f32 %v1900, %v1902
  %v1904 = vadd.f32 %v1903, 0.0036580483
  %v1905 = vmul.f32 %v1900, %v1904
  %v1906 = vadd.f32 %v1905, 0.05243302
  %v1907 = vmul.f32 %v1900, %v1906
  %v1908 = vadd.f32 %v1907, 0.18741608
  %v1909 = vmul.f32 %v1900, %v1908
  %v1910 = vadd.f32 %v1909, 1.1283791
  %v1911 = vmul.f32 %v626, %v1910
  %v1912 = vmul.f32 %v1900, 3.8918573e-05
  %v1913 = vadd.f32 %v1912, 0.001143296
  %v1914 = vmul.f32 %v1900, %v1913
  %v1915 = vadd.f32 %v1914, 0.014752088
  %v1916 = vmul.f32 %v1900, %v1915
  %v1917 = vadd.f32 %v1916, 0.112945676
  %v1918 = vmul.f32 %v1900, %v1917
  %v1919 = vadd.f32 %v1918, 0.4994258
  %v1920 = vmul.f32 %v1900, %v1919
  %v1921 = vadd.f32 %v1920, 1.0
  %v1922 = vrcp.pop %v1921
  %v1923 = vmul.f32 %v1921, %v1922
  %v1924 = vsub.f32 1.0, %v1923
  %v1925 = vmul.f32 %v1922, %v1924
  %v1926 = vadd.f32 %v1922, %v1925
  %vm1927 = vweird.f32 %v1921
  %vm1928 = vweird.f32 %v1922
  %vm1929 = vmor %vm1927, %vm1928
  %v1930 = vsel %vm1929, %v1922, %v1926
  %v1931 = vand.u32 2147483647, %v1921
  %vm1932 = vcmp.eq.f32.partialorder %v1931, 8.507059e+37
  %v1933 = vand.u32 %v1921, 2147483648
  %v1934 = vor.u32 1.1754944e-38, %v1933
  %v1935 = vsel %vm1932, %v1934, %v1930
  %v1936 = vmul.f32 %v1911, %v1935
  %v1937 = vmin.f32 %v1936, 1.0
  %v1938 = vmax.f32 %v1937, -1.0
  %v1939 = vmul.f32 %v627, %v627
  %v1940 = vmin.f32 16.0, %v1939
  %v1941 = vmul.f32 %v1940, 2.1237322e-06
  %v1942 = vadd.f32 %v1941, 0.00028619796
  %v1943 = vmul.f32 %v1940, %v1942
  %v1944 = vadd.f32 %v1943, 0.0036580483
  %v1945 = vmul.f32 %v1940, %v1944
  %v1946 = vadd.f32 %v1945, 0.05243302
  %v1947 = vmul.f32 %v1940, %v1946
  %v1948 = vadd.f32 %v1947, 0.18741608
  %v1949 = vmul.f32 %v1940, %v1948
  %v1950 = vadd.f32 %v1949, 1.1283791
  %v1951 = vmul.f32 %v627, %v1950
  %v1952 = vmul.f32 %v1940, 3.8918573e-05
  %v1953 = vadd.f32 %v1952, 0.001143296
  %v1954 = vmul.f32 %v1940, %v1953
  %v1955 = vadd.f32 %v1954, 0.014752088
  %v1956 = vmul.f32 %v1940, %v1955
  %v1957 = vadd.f32 %v1956, 0.112945676
  %v1958 = vmul.f32 %v1940, %v1957
  %v1959 = vadd.f32 %v1958, 0.4994258
  %v1960 = vmul.f32 %v1940, %v1959
  %v1961 = vadd.f32 %v1960, 1.0
  %v1962 = vrcp.pop %v1961
  %v1963 = vmul.f32 %v1961, %v1962
  %v1964 = vsub.f32 1.0, %v1963
  %v1965 = vmul.f32 %v1962, %v1964
  %v1966 = vadd.f32 %v1962, %v1965
  %vm1967 = vweird.f32 %v1961
  %vm1968 = vweird.f32 %v1962
  %vm1969 = vmor %vm1967, %vm1968
  %v1970 = vsel %vm1969, %v1962, %v1966
  %v1971 = vand.u32 2147483647, %v1961
  %vm1972 = vcmp.eq.f32.partialorder %v1971, 8.507059e+37
  %v1973 = vand.u32 %v1961, 2147483648
  %v1974 = vor.u32 1.1754944e-38, %v1973
  %v1975 = vsel %vm1972, %v1974, %v1970
  %v1976 = vmul.f32 %v1951, %v1975
  %v1977 = vmin.f32 %v1976, 1.0
  %v1978 = vmax.f32 %v1977, -1.0
  %v1979 = vmul.f32 %v628, %v628
  %v1980 = vmin.f32 16.0, %v1979
  %v1981 = vmul.f32 %v1980, 2.1237322e-06
  %v1982 = vadd.f32 %v1981, 0.00028619796
  %v1983 = vmul.f32 %v1980, %v1982
  %v1984 = vadd.f32 %v1983, 0.0036580483
  %v1985 = vmul.f32 %v1980, %v1984
  %v1986 = vadd.f32 %v1985, 0.05243302
  %v1987 = vmul.f32 %v1980, %v1986
  %v1988 = vadd.f32 %v1987, 0.18741608
  %v1989 = vmul.f32 %v1980, %v1988
  %v1990 = vadd.f32 %v1989, 1.1283791
  %v1991 = vmul.f32 %v628, %v1990
  %v1992 = vmul.f32 %v1980, 3.8918573e-05
  %v1993 = vadd.f32 %v1992, 0.001143296
  %v1994 = vmul.f32 %v1980, %v1993
  %v1995 = vadd.f32 %v1994, 0.014752088
  %v1996 = vmul.f32 %v1980, %v1995
  %v1997 = vadd.f32 %v1996, 0.112945676
  %v1998 = vmul.f32 %v1980, %v1997
  %v1999 = vadd.f32 %v1998, 0.4994258
  %v2000 = vmul.f32 %v1980, %v1999
  %v2001 = vadd.f32 %v2000, 1.0
  %v2002 = vrcp.pop %v2001
  %v2003 = vmul.f32 %v2001, %v2002
  %v2004 = vsub.f32 1.0, %v2003
  %v2005 = vmul.f32 %v2002, %v2004
  %v2006 = vadd.f32 %v2002, %v2005
  %vm2007 = vweird.f32 %v2001
  %vm2008 = vweird.f32 %v2002
  %vm2009 = vmor %vm2007, %vm2008
  %v2010 = vsel %vm2009, %v2002, %v2006
  %v2011 = vand.u32 2147483647, %v2001
  %vm2012 = vcmp.eq.f32.partialorder %v2011, 8.507059e+37
  %v2013 = vand.u32 %v2001, 2147483648
  %v2014 = vor.u32 1.1754944e-38, %v2013
  %v2015 = vsel %vm2012, %v2014, %v2010
  %v2016 = vmul.f32 %v1991, %v2015
  %v2017 = vmin.f32 %v2016, 1.0
  %v2018 = vmax.f32 %v2017, -1.0
  %v2019 = vmul.f32 %v629, %v629
  %v2020 = vmin.f32 16.0, %v2019
  %v2021 = vmul.f32 %v2020, 2.1237322e-06
  %v2022 = vadd.f32 %v2021, 0.00028619796
  %v2023 = vmul.f32 %v2020, %v2022
  %v2024 = vadd.f32 %v2023, 0.0036580483
  %v2025 = vmul.f32 %v2020, %v2024
  %v2026 = vadd.f32 %v2025, 0.05243302
  %v2027 = vmul.f32 %v2020, %v2026
  %v2028 = vadd.f32 %v2027, 0.18741608
  %v2029 = vmul.f32 %v2020, %v2028
  %v2030 = vadd.f32 %v2029, 1.1283791
  %v2031 = vmul.f32 %v629, %v2030
  %v2032 = vmul.f32 %v2020, 3.8918573e-05
  %v2033 = vadd.f32 %v2032, 0.001143296
  %v2034 = vmul.f32 %v2020, %v2033
  %v2035 = vadd.f32 %v2034, 0.014752088
  %v2036 = vmul.f32 %v2020, %v2035
  %v2037 = vadd.f32 %v2036, 0.112945676
  %v2038 = vmul.f32 %v2020, %v2037
  %v2039 = vadd.f32 %v2038, 0.4994258
  %v2040 = vmul.f32 %v2020, %v2039
  %v2041 = vadd.f32 %v2040, 1.0
  %v2042 = vrcp.pop %v2041
  %v2043 = vmul.f32 %v2041, %v2042
  %v2044 = vsub.f32 1.0, %v2043
  %v2045 = vmul.f32 %v2042, %v2044
  %v2046 = vadd.f32 %v2042, %v2045
  %vm2047 = vweird.f32 %v2041
  %vm2048 = vweird.f32 %v2042
  %vm2049 = vmor %vm2047, %vm2048
  %v2050 = vsel %vm2049, %v2042, %v2046
  %v2051 = vand.u32 2147483647, %v2041
  %vm2052 = vcmp.eq.f32.partialorder %v2051, 8.507059e+37
  %v2053 = vand.u32 %v2041, 2147483648
  %v2054 = vor.u32 1.1754944e-38, %v2053
  %v2055 = vsel %vm2052, %v2054, %v2050
  %v2056 = vmul.f32 %v2031, %v2055
  %v2057 = vmin.f32 %v2056, 1.0
  %v2058 = vmax.f32 %v2057, -1.0
  %v2059 = vmul.f32 %v630, %v630
  %v2060 = vmin.f32 16.0, %v2059
  %v2061 = vmul.f32 %v2060, 2.1237322e-06
  %v2062 = vadd.f32 %v2061, 0.00028619796
  %v2063 = vmul.f32 %v2060, %v2062
  %v2064 = vadd.f32 %v2063, 0.0036580483
  %v2065 = vmul.f32 %v2060, %v2064
  %v2066 = vadd.f32 %v2065, 0.05243302
  %v2067 = vmul.f32 %v2060, %v2066
  %v2068 = vadd.f32 %v2067, 0.18741608
  %v2069 = vmul.f32 %v2060, %v2068
  %v2070 = vadd.f32 %v2069, 1.1283791
  %v2071 = vmul.f32 %v630, %v2070
  %v2072 = vmul.f32 %v2060, 3.8918573e-05
  %v2073 = vadd.f32 %v2072, 0.001143296
  %v2074 = vmul.f32 %v2060, %v2073
  %v2075 = vadd.f32 %v2074, 0.014752088
  %v2076 = vmul.f32 %v2060, %v2075
  %v2077 = vadd.f32 %v2076, 0.112945676
  %v2078 = vmul.f32 %v2060, %v2077
  %v2079 = vadd.f32 %v2078, 0.4994258
  %v2080 = vmul.f32 %v2060, %v2079
  %v2081 = vadd.f32 %v2080, 1.0
  %v2082 = vrcp.pop %v2081
  %v2083 = vmul.f32 %v2081, %v2082
  %v2084 = vsub.f32 1.0, %v2083
  %v2085 = vmul.f32 %v2082, %v2084
  %v2086 = vadd.f32 %v2082, %v2085
  %vm2087 = vweird.f32 %v2081
  %vm2088 = vweird.f32 %v2082
  %vm2089 = vmor %vm2087, %vm2088
  %v2090 = vsel %vm2089, %v2082, %v2086
  %v2091 = vand.u32 2147483647, %v2081
  %vm2092 = vcmp.eq.f32.partialorder %v2091, 8.507059e+37
  %v2093 = vand.u32 %v2081, 2147483648
  %v2094 = vor.u32 1.1754944e-38, %v2093
  %v2095 = vsel %vm2092, %v2094, %v2090
  %v2096 = vmul.f32 %v2071, %v2095
  %v2097 = vmin.f32 %v2096, 1.0
  %v2098 = vmax.f32 %v2097, -1.0
  %v2099 = vmul.f32 %v631, %v631
  %v2100 = vmin.f32 16.0, %v2099
  %v2101 = vmul.f32 %v2100, 2.1237322e-06
  %v2102 = vadd.f32 %v2101, 0.00028619796
  %v2103 = vmul.f32 %v2100, %v2102
  %v2104 = vadd.f32 %v2103, 0.0036580483
  %v2105 = vmul.f32 %v2100, %v2104
  %v2106 = vadd.f32 %v2105, 0.05243302
  %v2107 = vmul.f32 %v2100, %v2106
  %v2108 = vadd.f32 %v2107, 0.18741608
  %v2109 = vmul.f32 %v2100, %v2108
  %v2110 = vadd.f32 %v2109, 1.1283791
  %v2111 = vmul.f32 %v631, %v2110
  %v2112 = vmul.f32 %v2100, 3.8918573e-05
  %v2113 = vadd.f32 %v2112, 0.001143296
  %v2114 = vmul.f32 %v2100, %v2113
  %v2115 = vadd.f32 %v2114, 0.014752088
  %v2116 = vmul.f32 %v2100, %v2115
  %v2117 = vadd.f32 %v2116, 0.112945676
  %v2118 = vmul.f32 %v2100, %v2117
  %v2119 = vadd.f32 %v2118, 0.4994258
  %v2120 = vmul.f32 %v2100, %v2119
  %v2121 = vadd.f32 %v2120, 1.0
  %v2122 = vrcp.pop %v2121
  %v2123 = vmul.f32 %v2121, %v2122
  %v2124 = vsub.f32 1.0, %v2123
  %v2125 = vmul.f32 %v2122, %v2124
  %v2126 = vadd.f32 %v2122, %v2125
  %vm2127 = vweird.f32 %v2121
  %vm2128 = vweird.f32 %v2122
  %vm2129 = vmor %vm2127, %vm2128
  %v2130 = vsel %vm2129, %v2122, %v2126
  %v2131 = vand.u32 2147483647, %v2121
  %vm2132 = vcmp.eq.f32.partialorder %v2131, 8.507059e+37
  %v2133 = vand.u32 %v2121, 2147483648
  %v2134 = vor.u32 1.1754944e-38, %v2133
  %v2135 = vsel %vm2132, %v2134, %v2130
  %v2136 = vmul.f32 %v2111, %v2135
  %v2137 = vmin.f32 %v2136, 1.0
  %v2138 = vmax.f32 %v2137, -1.0
  %v2139 = vmul.f32 %v632, %v632
  %v2140 = vmin.f32 16.0, %v2139
  %v2141 = vmul.f32 %v2140, 2.1237322e-06
  %v2142 = vadd.f32 %v2141, 0.00028619796
  %v2143 = vmul.f32 %v2140, %v2142
  %v2144 = vadd.f32 %v2143, 0.0036580483
  %v2145 = vmul.f32 %v2140, %v2144
  %v2146 = vadd.f32 %v2145, 0.05243302
  %v2147 = vmul.f32 %v2140, %v2146
  %v2148 = vadd.f32 %v2147, 0.18741608
  %v2149 = vmul.f32 %v2140, %v2148
  %v2150 = vadd.f32 %v2149, 1.1283791
  %v2151 = vmul.f32 %v632, %v2150
  %v2152 = vmul.f32 %v2140, 3.8918573e-05
  %v2153 = vadd.f32 %v2152, 0.001143296
  %v2154 = vmul.f32 %v2140, %v2153
  %v2155 = vadd.f32 %v2154, 0.014752088
  %v2156 = vmul.f32 %v2140, %v2155
  %v2157 = vadd.f32 %v2156, 0.112945676
  %v2158 = vmul.f32 %v2140, %v2157
  %v2159 = vadd.f32 %v2158, 0.4994258
  %v2160 = vmul.f32 %v2140, %v2159
  %v2161 = vadd.f32 %v2160, 1.0
  %v2162 = vrcp.pop %v2161
  %v2163 = vmul.f32 %v2161, %v2162
  %v2164 = vsub.f32 1.0, %v2163
  %v2165 = vmul.f32 %v2162, %v2164
  %v2166 = vadd.f32 %v2162, %v2165
  %vm2167 = vweird.f32 %v2161
  %vm2168 = vweird.f32 %v2162
  %vm2169 = vmor %vm2167, %vm2168
  %v2170 = vsel %vm2169, %v2162, %v2166
  %v2171 = vand.u32 2147483647, %v2161
  %vm2172 = vcmp.eq.f32.partialorder %v2171, 8.507059e+37
  %v2173 = vand.u32 %v2161, 2147483648
  %v2174 = vor.u32 1.1754944e-38, %v2173
  %v2175 = vsel %vm2172, %v2174, %v2170
  %v2176 = vmul.f32 %v2151, %v2175
  %v2177 = vmin.f32 %v2176, 1.0
  %v2178 = vmax.f32 %v2177, -1.0
  %v2179 = vmul.f32 %v633, %v633
  %v2180 = vmin.f32 16.0, %v2179
  %v2181 = vmul.f32 %v2180, 2.1237322e-06
  %v2182 = vadd.f32 %v2181, 0.00028619796
  %v2183 = vmul.f32 %v2180, %v2182
  %v2184 = vadd.f32 %v2183, 0.0036580483
  %v2185 = vmul.f32 %v2180, %v2184
  %v2186 = vadd.f32 %v2185, 0.05243302
  %v2187 = vmul.f32 %v2180, %v2186
  %v2188 = vadd.f32 %v2187, 0.18741608
  %v2189 = vmul.f32 %v2180, %v2188
  %v2190 = vadd.f32 %v2189, 1.1283791
  %v2191 = vmul.f32 %v633, %v2190
  %v2192 = vmul.f32 %v2180, 3.8918573e-05
  %v2193 = vadd.f32 %v2192, 0.001143296
  %v2194 = vmul.f32 %v2180, %v2193
  %v2195 = vadd.f32 %v2194, 0.014752088
  %v2196 = vmul.f32 %v2180, %v2195
  %v2197 = vadd.f32 %v2196, 0.112945676
  %v2198 = vmul.f32 %v2180, %v2197
  %v2199 = vadd.f32 %v2198, 0.4994258
  %v2200 = vmul.f32 %v2180, %v2199
  %v2201 = vadd.f32 %v2200, 1.0
  %v2202 = vrcp.pop %v2201
  %v2203 = vmul.f32 %v2201, %v2202
  %v2204 = vsub.f32 1.0, %v2203
  %v2205 = vmul.f32 %v2202, %v2204
  %v2206 = vadd.f32 %v2202, %v2205
  %vm2207 = vweird.f32 %v2201
  %vm2208 = vweird.f32 %v2202
  %vm2209 = vmor %vm2207, %vm2208
  %v2210 = vsel %vm2209, %v2202, %v2206
  %v2211 = vand.u32 2147483647, %v2201
  %vm2212 = vcmp.eq.f32.partialorder %v2211, 8.507059e+37
  %v2213 = vand.u32 %v2201, 2147483648
  %v2214 = vor.u32 1.1754944e-38, %v2213
  %v2215 = vsel %vm2212, %v2214, %v2210
  %v2216 = vmul.f32 %v2191, %v2215
  %v2217 = vmin.f32 %v2216, 1.0
  %v2218 = vmax.f32 %v2217, -1.0
  %v2219 = vmul.f32 %v634, %v634
  %v2220 = vmin.f32 16.0, %v2219
  %v2221 = vmul.f32 %v2220, 2.1237322e-06
  %v2222 = vadd.f32 %v2221, 0.00028619796
  %v2223 = vmul.f32 %v2220, %v2222
  %v2224 = vadd.f32 %v2223, 0.0036580483
  %v2225 = vmul.f32 %v2220, %v2224
  %v2226 = vadd.f32 %v2225, 0.05243302
  %v2227 = vmul.f32 %v2220, %v2226
  %v2228 = vadd.f32 %v2227, 0.18741608
  %v2229 = vmul.f32 %v2220, %v2228
  %v2230 = vadd.f32 %v2229, 1.1283791
  %v2231 = vmul.f32 %v634, %v2230
  %v2232 = vmul.f32 %v2220, 3.8918573e-05
  %v2233 = vadd.f32 %v2232, 0.001143296
  %v2234 = vmul.f32 %v2220, %v2233
  %v2235 = vadd.f32 %v2234, 0.014752088
  %v2236 = vmul.f32 %v2220, %v2235
  %v2237 = vadd.f32 %v2236, 0.112945676
  %v2238 = vmul.f32 %v2220, %v2237
  %v2239 = vadd.f32 %v2238, 0.4994258
  %v2240 = vmul.f32 %v2220, %v2239
  %v2241 = vadd.f32 %v2240, 1.0
  %v2242 = vrcp.pop %v2241
  %v2243 = vmul.f32 %v2241, %v2242
  %v2244 = vsub.f32 1.0, %v2243
  %v2245 = vmul.f32 %v2242, %v2244
  %v2246 = vadd.f32 %v2242, %v2245
  %vm2247 = vweird.f32 %v2241
  %vm2248 = vweird.f32 %v2242
  %vm2249 = vmor %vm2247, %vm2248
  %v2250 = vsel %vm2249, %v2242, %v2246
  %v2251 = vand.u32 2147483647, %v2241
  %vm2252 = vcmp.eq.f32.partialorder %v2251, 8.507059e+37
  %v2253 = vand.u32 %v2241, 2147483648
  %v2254 = vor.u32 1.1754944e-38, %v2253
  %v2255 = vsel %vm2252, %v2254, %v2250
  %v2256 = vmul.f32 %v2231, %v2255
  %v2257 = vmin.f32 %v2256, 1.0
  %v2258 = vmax.f32 %v2257, -1.0
  %v2259 = vmul.f32 %v635, %v635
  %v2260 = vmin.f32 16.0, %v2259
  %v2261 = vmul.f32 %v2260, 2.1237322e-06
  %v2262 = vadd.f32 %v2261, 0.00028619796
  %v2263 = vmul.f32 %v2260, %v2262
  %v2264 = vadd.f32 %v2263, 0.0036580483
  %v2265 = vmul.f32 %v2260, %v2264
  %v2266 = vadd.f32 %v2265, 0.05243302
  %v2267 = vmul.f32 %v2260, %v2266
  %v2268 = vadd.f32 %v2267, 0.18741608
  %v2269 = vmul.f32 %v2260, %v2268
  %v2270 = vadd.f32 %v2269, 1.1283791
  %v2271 = vmul.f32 %v635, %v2270
  %v2272 = vmul.f32 %v2260, 3.8918573e-05
  %v2273 = vadd.f32 %v2272, 0.001143296
  %v2274 = vmul.f32 %v2260, %v2273
  %v2275 = vadd.f32 %v2274, 0.014752088
  %v2276 = vmul.f32 %v2260, %v2275
  %v2277 = vadd.f32 %v2276, 0.112945676
  %v2278 = vmul.f32 %v2260, %v2277
  %v2279 = vadd.f32 %v2278, 0.4994258
  %v2280 = vmul.f32 %v2260, %v2279
  %v2281 = vadd.f32 %v2280, 1.0
  %v2282 = vrcp.pop %v2281
  %v2283 = vmul.f32 %v2281, %v2282
  %v2284 = vsub.f32 1.0, %v2283
  %v2285 = vmul.f32 %v2282, %v2284
  %v2286 = vadd.f32 %v2282, %v2285
  %vm2287 = vweird.f32 %v2281
  %vm2288 = vweird.f32 %v2282
  %vm2289 = vmor %vm2287, %vm2288
  %v2290 = vsel %vm2289, %v2282, %v2286
  %v2291 = vand.u32 2147483647, %v2281
  %vm2292 = vcmp.eq.f32.partialorder %v2291, 8.507059e+37
  %v2293 = vand.u32 %v2281, 2147483648
  %v2294 = vor.u32 1.1754944e-38, %v2293
  %v2295 = vsel %vm2292, %v2294, %v2290
  %v2296 = vmul.f32 %v2271, %v2295
  %v2297 = vmin.f32 %v2296, 1.0
  %v2298 = vmax.f32 %v2297, -1.0
  %v2299 = vmul.f32 %v636, %v636
  %v2300 = vmin.f32 16.0, %v2299
  %v2301 = vmul.f32 %v2300, 2.1237322e-06
  %v2302 = vadd.f32 %v2301, 0.00028619796
  %v2303 = vmul.f32 %v2300, %v2302
  %v2304 = vadd.f32 %v2303, 0.0036580483
  %v2305 = vmul.f32 %v2300, %v2304
  %v2306 = vadd.f32 %v2305, 0.05243302
  %v2307 = vmul.f32 %v2300, %v2306
  %v2308 = vadd.f32 %v2307, 0.18741608
  %v2309 = vmul.f32 %v2300, %v2308
  %v2310 = vadd.f32 %v2309, 1.1283791
  %v2311 = vmul.f32 %v636, %v2310
  %v2312 = vmul.f32 %v2300, 3.8918573e-05
  %v2313 = vadd.f32 %v2312, 0.001143296
  %v2314 = vmul.f32 %v2300, %v2313
  %v2315 = vadd.f32 %v2314, 0.014752088
  %v2316 = vmul.f32 %v2300, %v2315
  %v2317 = vadd.f32 %v2316, 0.112945676
  %v2318 = vmul.f32 %v2300, %v2317
  %v2319 = vadd.f32 %v2318, 0.4994258
  %v2320 = vmul.f32 %v2300, %v2319
  %v2321 = vadd.f32 %v2320, 1.0
  %v2322 = vrcp.pop %v2321
  %v2323 = vmul.f32 %v2321, %v2322
  %v2324 = vsub.f32 1.0, %v2323
  %v2325 = vmul.f32 %v2322, %v2324
  %v2326 = vadd.f32 %v2322, %v2325
  %vm2327 = vweird.f32 %v2321
  %vm2328 = vweird.f32 %v2322
  %vm2329 = vmor %vm2327, %vm2328
  %v2330 = vsel %vm2329, %v2322, %v2326
  %v2331 = vand.u32 2147483647, %v2321
  %vm2332 = vcmp.eq.f32.partialorder %v2331, 8.507059e+37
  %v2333 = vand.u32 %v2321, 2147483648
  %v2334 = vor.u32 1.1754944e-38, %v2333
  %v2335 = vsel %vm2332, %v2334, %v2330
  %v2336 = vmul.f32 %v2311, %v2335
  %v2337 = vmin.f32 %v2336, 1.0
  %v2338 = vmax.f32 %v2337, -1.0
  %v2339 = vmul.f32 %v637, %v637
  %v2340 = vmin.f32 16.0, %v2339
  %v2341 = vmul.f32 %v2340, 2.1237322e-06
  %v2342 = vadd.f32 %v2341, 0.00028619796
  %v2343 = vmul.f32 %v2340, %v2342
  %v2344 = vadd.f32 %v2343, 0.0036580483
  %v2345 = vmul.f32 %v2340, %v2344
  %v2346 = vadd.f32 %v2345, 0.05243302
  %v2347 = vmul.f32 %v2340, %v2346
  %v2348 = vadd.f32 %v2347, 0.18741608
  %v2349 = vmul.f32 %v2340, %v2348
  %v2350 = vadd.f32 %v2349, 1.1283791
  %v2351 = vmul.f32 %v637, %v2350
  %v2352 = vmul.f32 %v2340, 3.8918573e-05
  %v2353 = vadd.f32 %v2352, 0.001143296
  %v2354 = vmul.f32 %v2340, %v2353
  %v2355 = vadd.f32 %v2354, 0.014752088
  %v2356 = vmul.f32 %v2340, %v2355
  %v2357 = vadd.f32 %v2356, 0.112945676
  %v2358 = vmul.f32 %v2340, %v2357
  %v2359 = vadd.f32 %v2358, 0.4994258
  %v2360 = vmul.f32 %v2340, %v2359
  %v2361 = vadd.f32 %v2360, 1.0
  %v2362 = vrcp.pop %v2361
  %v2363 = vmul.f32 %v2361, %v2362
  %v2364 = vsub.f32 1.0, %v2363
  %v2365 = vmul.f32 %v2362, %v2364
  %v2366 = vadd.f32 %v2362, %v2365
  %vm2367 = vweird.f32 %v2361
  %vm2368 = vweird.f32 %v2362
  %vm2369 = vmor %vm2367, %vm2368
  %v2370 = vsel %vm2369, %v2362, %v2366
  %v2371 = vand.u32 2147483647, %v2361
  %vm2372 = vcmp.eq.f32.partialorder %v2371, 8.507059e+37
  %v2373 = vand.u32 %v2361, 2147483648
  %v2374 = vor.u32 1.1754944e-38, %v2373
  %v2375 = vsel %vm2372, %v2374, %v2370
  %v2376 = vmul.f32 %v2351, %v2375
  %v2377 = vmin.f32 %v2376, 1.0
  %v2378 = vmax.f32 %v2377, -1.0
  %v2379 = vmul.f32 %v638, %v638
  %v2380 = vmin.f32 16.0, %v2379
  %v2381 = vmul.f32 %v2380, 2.1237322e-06
  %v2382 = vadd.f32 %v2381, 0.00028619796
  %v2383 = vmul.f32 %v2380, %v2382
  %v2384 = vadd.f32 %v2383, 0.0036580483
  %v2385 = vmul.f32 %v2380, %v2384
  %v2386 = vadd.f32 %v2385, 0.05243302
  %v2387 = vmul.f32 %v2380, %v2386
  %v2388 = vadd.f32 %v2387, 0.18741608
  %v2389 = vmul.f32 %v2380, %v2388
  %v2390 = vadd.f32 %v2389, 1.1283791
  %v2391 = vmul.f32 %v638, %v2390
  %v2392 = vmul.f32 %v2380, 3.8918573e-05
  %v2393 = vadd.f32 %v2392, 0.001143296
  %v2394 = vmul.f32 %v2380, %v2393
  %v2395 = vadd.f32 %v2394, 0.014752088
  %v2396 = vmul.f32 %v2380, %v2395
  %v2397 = vadd.f32 %v2396, 0.112945676
  %v2398 = vmul.f32 %v2380, %v2397
  %v2399 = vadd.f32 %v2398, 0.4994258
  %v2400 = vmul.f32 %v2380, %v2399
  %v2401 = vadd.f32 %v2400, 1.0
  %v2402 = vrcp.pop %v2401
  %v2403 = vmul.f32 %v2401, %v2402
  %v2404 = vsub.f32 1.0, %v2403
  %v2405 = vmul.f32 %v2402, %v2404
  %v2406 = vadd.f32 %v2402, %v2405
  %vm2407 = vweird.f32 %v2401
  %vm2408 = vweird.f32 %v2402
  %vm2409 = vmor %vm2407, %vm2408
  %v2410 = vsel %vm2409, %v2402, %v2406
  %v2411 = vand.u32 2147483647, %v2401
  %vm2412 = vcmp.eq.f32.partialorder %v2411, 8.507059e+37
  %v2413 = vand.u32 %v2401, 2147483648
  %v2414 = vor.u32 1.1754944e-38, %v2413
  %v2415 = vsel %vm2412, %v2414, %v2410
  %v2416 = vmul.f32 %v2391, %v2415
  %v2417 = vmin.f32 %v2416, 1.0
  %v2418 = vmax.f32 %v2417, -1.0
  %v2419 = vmul.f32 %v639, %v639
  %v2420 = vmin.f32 16.0, %v2419
  %v2421 = vmul.f32 %v2420, 2.1237322e-06
  %v2422 = vadd.f32 %v2421, 0.00028619796
  %v2423 = vmul.f32 %v2420, %v2422
  %v2424 = vadd.f32 %v2423, 0.0036580483
  %v2425 = vmul.f32 %v2420, %v2424
  %v2426 = vadd.f32 %v2425, 0.05243302
  %v2427 = vmul.f32 %v2420, %v2426
  %v2428 = vadd.f32 %v2427, 0.18741608
  %v2429 = vmul.f32 %v2420, %v2428
  %v2430 = vadd.f32 %v2429, 1.1283791
  %v2431 = vmul.f32 %v639, %v2430
  %v2432 = vmul.f32 %v2420, 3.8918573e-05
  %v2433 = vadd.f32 %v2432, 0.001143296
  %v2434 = vmul.f32 %v2420, %v2433
  %v2435 = vadd.f32 %v2434, 0.014752088
  %v2436 = vmul.f32 %v2420, %v2435
  %v2437 = vadd.f32 %v2436, 0.112945676
  %v2438 = vmul.f32 %v2420, %v2437
  %v2439 = vadd.f32 %v2438, 0.4994258
  %v2440 = vmul.f32 %v2420, %v2439
  %v2441 = vadd.f32 %v2440, 1.0
  %v2442 = vrcp.pop %v2441
  %v2443 = vmul.f32 %v2441, %v2442
  %v2444 = vsub.f32 1.0, %v2443
  %v2445 = vmul.f32 %v2442, %v2444
  %v2446 = vadd.f32 %v2442, %v2445
  %vm2447 = vweird.f32 %v2441
  %vm2448 = vweird.f32 %v2442
  %vm2449 = vmor %vm2447, %vm2448
  %v2450 = vsel %vm2449, %v2442, %v2446
  %v2451 = vand.u32 2147483647, %v2441
  %vm2452 = vcmp.eq.f32.partialorder %v2451, 8.507059e+37
  %v2453 = vand.u32 %v2441, 2147483648
  %v2454 = vor.u32 1.1754944e-38, %v2453
  %v2455 = vsel %vm2452, %v2454, %v2450
  %v2456 = vmul.f32 %v2431, %v2455
  %v2457 = vmin.f32 %v2456, 1.0
  %v2458 = vmax.f32 %v2457, -1.0
  %v2459 = vmul.f32 %v640, %v640
  %v2460 = vmin.f32 16.0, %v2459
  %v2461 = vmul.f32 %v2460, 2.1237322e-06
  %v2462 = vadd.f32 %v2461, 0.00028619796
  %v2463 = vmul.f32 %v2460, %v2462
  %v2464 = vadd.f32 %v2463, 0.0036580483
  %v2465 = vmul.f32 %v2460, %v2464
  %v2466 = vadd.f32 %v2465, 0.05243302
  %v2467 = vmul.f32 %v2460, %v2466
  %v2468 = vadd.f32 %v2467, 0.18741608
  %v2469 = vmul.f32 %v2460, %v2468
  %v2470 = vadd.f32 %v2469, 1.1283791
  %v2471 = vmul.f32 %v640, %v2470
  %v2472 = vmul.f32 %v2460, 3.8918573e-05
  %v2473 = vadd.f32 %v2472, 0.001143296
  %v2474 = vmul.f32 %v2460, %v2473
  %v2475 = vadd.f32 %v2474, 0.014752088
  %v2476 = vmul.f32 %v2460, %v2475
  %v2477 = vadd.f32 %v2476, 0.112945676
  %v2478 = vmul.f32 %v2460, %v2477
  %v2479 = vadd.f32 %v2478, 0.4994258
  %v2480 = vmul.f32 %v2460, %v2479
  %v2481 = vadd.f32 %v2480, 1.0
  %v2482 = vrcp.pop %v2481
  %v2483 = vmul.f32 %v2481, %v2482
  %v2484 = vsub.f32 1.0, %v2483
  %v2485 = vmul.f32 %v2482, %v2484
  %v2486 = vadd.f32 %v2482, %v2485
  %vm2487 = vweird.f32 %v2481
  %vm2488 = vweird.f32 %v2482
  %vm2489 = vmor %vm2487, %vm2488
  %v2490 = vsel %vm2489, %v2482, %v2486
  %v2491 = vand.u32 2147483647, %v2481
  %vm2492 = vcmp.eq.f32.partialorder %v2491, 8.507059e+37
  %v2493 = vand.u32 %v2481, 2147483648
  %v2494 = vor.u32 1.1754944e-38, %v2493
  %v2495 = vsel %vm2492, %v2494, %v2490
  %v2496 = vmul.f32 %v2471, %v2495
  %v2497 = vmin.f32 %v2496, 1.0
  %v2498 = vmax.f32 %v2497, -1.0
  %v2499 = vmul.f32 %v641, %v641
  %v2500 = vmin.f32 16.0, %v2499
  %v2501 = vmul.f32 %v2500, 2.1237322e-06
  %v2502 = vadd.f32 %v2501, 0.00028619796
  %v2503 = vmul.f32 %v2500, %v2502
  %v2504 = vadd.f32 %v2503, 0.0036580483
  %v2505 = vmul.f32 %v2500, %v2504
  %v2506 = vadd.f32 %v2505, 0.05243302
  %v2507 = vmul.f32 %v2500, %v2506
  %v2508 = vadd.f32 %v2507, 0.18741608
  %v2509 = vmul.f32 %v2500, %v2508
  %v2510 = vadd.f32 %v2509, 1.1283791
  %v2511 = vmul.f32 %v641, %v2510
  %v2512 = vmul.f32 %v2500, 3.8918573e-05
  %v2513 = vadd.f32 %v2512, 0.001143296
  %v2514 = vmul.f32 %v2500, %v2513
  %v2515 = vadd.f32 %v2514, 0.014752088
  %v2516 = vmul.f32 %v2500, %v2515
  %v2517 = vadd.f32 %v2516, 0.112945676
  %v2518 = vmul.f32 %v2500, %v2517
  %v2519 = vadd.f32 %v2518, 0.4994258
  %v2520 = vmul.f32 %v2500, %v2519
  %v2521 = vadd.f32 %v2520, 1.0
  %v2522 = vrcp.pop %v2521
  %v2523 = vmul.f32 %v2521, %v2522
  %v2524 = vsub.f32 1.0, %v2523
  %v2525 = vmul.f32 %v2522, %v2524
  %v2526 = vadd.f32 %v2522, %v2525
  %vm2527 = vweird.f32 %v2521
  %vm2528 = vweird.f32 %v2522
  %vm2529 = vmor %vm2527, %vm2528
  %v2530 = vsel %vm2529, %v2522, %v2526
  %v2531 = vand.u32 2147483647, %v2521
  %vm2532 = vcmp.eq.f32.partialorder %v2531, 8.507059e+37
  %v2533 = vand.u32 %v2521, 2147483648
  %v2534 = vor.u32 1.1754944e-38, %v2533
  %v2535 = vsel %vm2532, %v2534, %v2530
  %v2536 = vmul.f32 %v2511, %v2535
  %v2537 = vmin.f32 %v2536, 1.0
  %v2538 = vmax.f32 %v2537, -1.0
  %v2539 = vmul.f32 %v642, %v642
  %v2540 = vmin.f32 16.0, %v2539
  %v2541 = vmul.f32 %v2540, 2.1237322e-06
  %v2542 = vadd.f32 %v2541, 0.00028619796
  %v2543 = vmul.f32 %v2540, %v2542
  %v2544 = vadd.f32 %v2543, 0.0036580483
  %v2545 = vmul.f32 %v2540, %v2544
  %v2546 = vadd.f32 %v2545, 0.05243302
  %v2547 = vmul.f32 %v2540, %v2546
  %v2548 = vadd.f32 %v2547, 0.18741608
  %v2549 = vmul.f32 %v2540, %v2548
  %v2550 = vadd.f32 %v2549, 1.1283791
  %v2551 = vmul.f32 %v642, %v2550
  %v2552 = vmul.f32 %v2540, 3.8918573e-05
  %v2553 = vadd.f32 %v2552, 0.001143296
  %v2554 = vmul.f32 %v2540, %v2553
  %v2555 = vadd.f32 %v2554, 0.014752088
  %v2556 = vmul.f32 %v2540, %v2555
  %v2557 = vadd.f32 %v2556, 0.112945676
  %v2558 = vmul.f32 %v2540, %v2557
  %v2559 = vadd.f32 %v2558, 0.4994258
  %v2560 = vmul.f32 %v2540, %v2559
  %v2561 = vadd.f32 %v2560, 1.0
  %v2562 = vrcp.pop %v2561
  %v2563 = vmul.f32 %v2561, %v2562
  %v2564 = vsub.f32 1.0, %v2563
  %v2565 = vmul.f32 %v2562, %v2564
  %v2566 = vadd.f32 %v2562, %v2565
  %vm2567 = vweird.f32 %v2561
  %vm2568 = vweird.f32 %v2562
  %vm2569 = vmor %vm2567, %vm2568
  %v2570 = vsel %vm2569, %v2562, %v2566
  %v2571 = vand.u32 2147483647, %v2561
  %vm2572 = vcmp.eq.f32.partialorder %v2571, 8.507059e+37
  %v2573 = vand.u32 %v2561, 2147483648
  %v2574 = vor.u32 1.1754944e-38, %v2573
  %v2575 = vsel %vm2572, %v2574, %v2570
  %v2576 = vmul.f32 %v2551, %v2575
  %v2577 = vmin.f32 %v2576, 1.0
  %v2578 = vmax.f32 %v2577, -1.0
  %v2579 = vmul.f32 %v643, %v643
  %v2580 = vmin.f32 16.0, %v2579
  %v2581 = vmul.f32 %v2580, 2.1237322e-06
  %v2582 = vadd.f32 %v2581, 0.00028619796
  %v2583 = vmul.f32 %v2580, %v2582
  %v2584 = vadd.f32 %v2583, 0.0036580483
  %v2585 = vmul.f32 %v2580, %v2584
  %v2586 = vadd.f32 %v2585, 0.05243302
  %v2587 = vmul.f32 %v2580, %v2586
  %v2588 = vadd.f32 %v2587, 0.18741608
  %v2589 = vmul.f32 %v2580, %v2588
  %v2590 = vadd.f32 %v2589, 1.1283791
  %v2591 = vmul.f32 %v643, %v2590
  %v2592 = vmul.f32 %v2580, 3.8918573e-05
  %v2593 = vadd.f32 %v2592, 0.001143296
  %v2594 = vmul.f32 %v2580, %v2593
  %v2595 = vadd.f32 %v2594, 0.014752088
  %v2596 = vmul.f32 %v2580, %v2595
  %v2597 = vadd.f32 %v2596, 0.112945676
  %v2598 = vmul.f32 %v2580, %v2597
  %v2599 = vadd.f32 %v2598, 0.4994258
  %v2600 = vmul.f32 %v2580, %v2599
  %v2601 = vadd.f32 %v2600, 1.0
  %v2602 = vrcp.pop %v2601
  %v2603 = vmul.f32 %v2601, %v2602
  %v2604 = vsub.f32 1.0, %v2603
  %v2605 = vmul.f32 %v2602, %v2604
  %v2606 = vadd.f32 %v2602, %v2605
  %vm2607 = vweird.f32 %v2601
  %vm2608 = vweird.f32 %v2602
  %vm2609 = vmor %vm2607, %vm2608
  %v2610 = vsel %vm2609, %v2602, %v2606
  %v2611 = vand.u32 2147483647, %v2601
  %vm2612 = vcmp.eq.f32.partialorder %v2611, 8.507059e+37
  %v2613 = vand.u32 %v2601, 2147483648
  %v2614 = vor.u32 1.1754944e-38, %v2613
  %v2615 = vsel %vm2612, %v2614, %v2610
  %v2616 = vmul.f32 %v2591, %v2615
  %v2617 = vmin.f32 %v2616, 1.0
  %v2618 = vmax.f32 %v2617, -1.0
  %v2619 = vmul.f32 %v644, %v644
  %v2620 = vmin.f32 16.0, %v2619
  %v2621 = vmul.f32 %v2620, 2.1237322e-06
  %v2622 = vadd.f32 %v2621, 0.00028619796
  %v2623 = vmul.f32 %v2620, %v2622
  %v2624 = vadd.f32 %v2623, 0.0036580483
  %v2625 = vmul.f32 %v2620, %v2624
  %v2626 = vadd.f32 %v2625, 0.05243302
  %v2627 = vmul.f32 %v2620, %v2626
  %v2628 = vadd.f32 %v2627, 0.18741608
  %v2629 = vmul.f32 %v2620, %v2628
  %v2630 = vadd.f32 %v2629, 1.1283791
  %v2631 = vmul.f32 %v644, %v2630
  %v2632 = vmul.f32 %v2620, 3.8918573e-05
  %v2633 = vadd.f32 %v2632, 0.001143296
  %v2634 = vmul.f32 %v2620, %v2633
  %v2635 = vadd.f32 %v2634, 0.014752088
  %v2636 = vmul.f32 %v2620, %v2635
  %v2637 = vadd.f32 %v2636, 0.112945676
  %v2638 = vmul.f32 %v2620, %v2637
  %v2639 = vadd.f32 %v2638, 0.4994258
  %v2640 = vmul.f32 %v2620, %v2639
  %v2641 = vadd.f32 %v2640, 1.0
  %v2642 = vrcp.pop %v2641
  %v2643 = vmul.f32 %v2641, %v2642
  %v2644 = vsub.f32 1.0, %v2643
  %v2645 = vmul.f32 %v2642, %v2644
  %v2646 = vadd.f32 %v2642, %v2645
  %vm2647 = vweird.f32 %v2641
  %vm2648 = vweird.f32 %v2642
  %vm2649 = vmor %vm2647, %vm2648
  %v2650 = vsel %vm2649, %v2642, %v2646
  %v2651 = vand.u32 2147483647, %v2641
  %vm2652 = vcmp.eq.f32.partialorder %v2651, 8.507059e+37
  %v2653 = vand.u32 %v2641, 2147483648
  %v2654 = vor.u32 1.1754944e-38, %v2653
  %v2655 = vsel %vm2652, %v2654, %v2650
  %v2656 = vmul.f32 %v2631, %v2655
  %v2657 = vmin.f32 %v2656, 1.0
  %v2658 = vmax.f32 %v2657, -1.0
  %v2659 = vmul.f32 %v645, %v645
  %v2660 = vmin.f32 16.0, %v2659
  %v2661 = vmul.f32 %v2660, 2.1237322e-06
  %v2662 = vadd.f32 %v2661, 0.00028619796
  %v2663 = vmul.f32 %v2660, %v2662
  %v2664 = vadd.f32 %v2663, 0.0036580483
  %v2665 = vmul.f32 %v2660, %v2664
  %v2666 = vadd.f32 %v2665, 0.05243302
  %v2667 = vmul.f32 %v2660, %v2666
  %v2668 = vadd.f32 %v2667, 0.18741608
  %v2669 = vmul.f32 %v2660, %v2668
  %v2670 = vadd.f32 %v2669, 1.1283791
  %v2671 = vmul.f32 %v645, %v2670
  %v2672 = vmul.f32 %v2660, 3.8918573e-05
  %v2673 = vadd.f32 %v2672, 0.001143296
  %v2674 = vmul.f32 %v2660, %v2673
  %v2675 = vadd.f32 %v2674, 0.014752088
  %v2676 = vmul.f32 %v2660, %v2675
  %v2677 = vadd.f32 %v2676, 0.112945676
  %v2678 = vmul.f32 %v2660, %v2677
  %v2679 = vadd.f32 %v2678, 0.4994258
  %v2680 = vmul.f32 %v2660, %v2679
  %v2681 = vadd.f32 %v2680, 1.0
  %v2682 = vrcp.pop %v2681
  %v2683 = vmul.f32 %v2681, %v2682
  %v2684 = vsub.f32 1.0, %v2683
  %v2685 = vmul.f32 %v2682, %v2684
  %v2686 = vadd.f32 %v2682, %v2685
  %vm2687 = vweird.f32 %v2681
  %vm2688 = vweird.f32 %v2682
  %vm2689 = vmor %vm2687, %vm2688
  %v2690 = vsel %vm2689, %v2682, %v2686
  %v2691 = vand.u32 2147483647, %v2681
  %vm2692 = vcmp.eq.f32.partialorder %v2691, 8.507059e+37
  %v2693 = vand.u32 %v2681, 2147483648
  %v2694 = vor.u32 1.1754944e-38, %v2693
  %v2695 = vsel %vm2692, %v2694, %v2690
  %v2696 = vmul.f32 %v2671, %v2695
  %v2697 = vmin.f32 %v2696, 1.0
  %v2698 = vmax.f32 %v2697, -1.0
  %v2699 = vmul.f32 %v646, %v646
  %v2700 = vmin.f32 16.0, %v2699
  %v2701 = vmul.f32 %v2700, 2.1237322e-06
  %v2702 = vadd.f32 %v2701, 0.00028619796
  %v2703 = vmul.f32 %v2700, %v2702
  %v2704 = vadd.f32 %v2703, 0.0036580483
  %v2705 = vmul.f32 %v2700, %v2704
  %v2706 = vadd.f32 %v2705, 0.05243302
  %v2707 = vmul.f32 %v2700, %v2706
  %v2708 = vadd.f32 %v2707, 0.18741608
  %v2709 = vmul.f32 %v2700, %v2708
  %v2710 = vadd.f32 %v2709, 1.1283791
  %v2711 = vmul.f32 %v646, %v2710
  %v2712 = vmul.f32 %v2700, 3.8918573e-05
  %v2713 = vadd.f32 %v2712, 0.001143296
  %v2714 = vmul.f32 %v2700, %v2713
  %v2715 = vadd.f32 %v2714, 0.014752088
  %v2716 = vmul.f32 %v2700, %v2715
  %v2717 = vadd.f32 %v2716, 0.112945676
  %v2718 = vmul.f32 %v2700, %v2717
  %v2719 = vadd.f32 %v2718, 0.4994258
  %v2720 = vmul.f32 %v2700, %v2719
  %v2721 = vadd.f32 %v2720, 1.0
  %v2722 = vrcp.pop %v2721
  %v2723 = vmul.f32 %v2721, %v2722
  %v2724 = vsub.f32 1.0, %v2723
  %v2725 = vmul.f32 %v2722, %v2724
  %v2726 = vadd.f32 %v2722, %v2725
  %vm2727 = vweird.f32 %v2721
  %vm2728 = vweird.f32 %v2722
  %vm2729 = vmor %vm2727, %vm2728
  %v2730 = vsel %vm2729, %v2722, %v2726
  %v2731 = vand.u32 2147483647, %v2721
  %vm2732 = vcmp.eq.f32.partialorder %v2731, 8.507059e+37
  %v2733 = vand.u32 %v2721, 2147483648
  %v2734 = vor.u32 1.1754944e-38, %v2733
  %v2735 = vsel %vm2732, %v2734, %v2730
  %v2736 = vmul.f32 %v2711, %v2735
  %v2737 = vmin.f32 %v2736, 1.0
  %v2738 = vmax.f32 %v2737, -1.0
  %v2739 = vmul.f32 %v647, %v647
  %v2740 = vmin.f32 16.0, %v2739
  %v2741 = vmul.f32 %v2740, 2.1237322e-06
  %v2742 = vadd.f32 %v2741, 0.00028619796
  %v2743 = vmul.f32 %v2740, %v2742
  %v2744 = vadd.f32 %v2743, 0.0036580483
  %v2745 = vmul.f32 %v2740, %v2744
  %v2746 = vadd.f32 %v2745, 0.05243302
  %v2747 = vmul.f32 %v2740, %v2746
  %v2748 = vadd.f32 %v2747, 0.18741608
  %v2749 = vmul.f32 %v2740, %v2748
  %v2750 = vadd.f32 %v2749, 1.1283791
  %v2751 = vmul.f32 %v647, %v2750
  %v2752 = vmul.f32 %v2740, 3.8918573e-05
  %v2753 = vadd.f32 %v2752, 0.001143296
  %v2754 = vmul.f32 %v2740, %v2753
  %v2755 = vadd.f32 %v2754, 0.014752088
  %v2756 = vmul.f32 %v2740, %v2755
  %v2757 = vadd.f32 %v2756, 0.112945676
  %v2758 = vmul.f32 %v2740, %v2757
  %v2759 = vadd.f32 %v2758, 0.4994258
  %v2760 = vmul.f32 %v2740, %v2759
  %v2761 = vadd.f32 %v2760, 1.0
  %v2762 = vrcp.pop %v2761
  %v2763 = vmul.f32 %v2761, %v2762
  %v2764 = vsub.f32 1.0, %v2763
  %v2765 = vmul.f32 %v2762, %v2764
  %v2766 = vadd.f32 %v2762, %v2765
  %vm2767 = vweird.f32 %v2761
  %vm2768 = vweird.f32 %v2762
  %vm2769 = vmor %vm2767, %vm2768
  %v2770 = vsel %vm2769, %v2762, %v2766
  %v2771 = vand.u32 2147483647, %v2761
  %vm2772 = vcmp.eq.f32.partialorder %v2771, 8.507059e+37
  %v2773 = vand.u32 %v2761, 2147483648
  %v2774 = vor.u32 1.1754944e-38, %v2773
  %v2775 = vsel %vm2772, %v2774, %v2770
  %v2776 = vmul.f32 %v2751, %v2775
  %v2777 = vmin.f32 %v2776, 1.0
  %v2778 = vmax.f32 %v2777, -1.0
  %v2779 = vmul.f32 %v648, %v648
  %v2780 = vmin.f32 16.0, %v2779
  %v2781 = vmul.f32 %v2780, 2.1237322e-06
  %v2782 = vadd.f32 %v2781, 0.00028619796
  %v2783 = vmul.f32 %v2780, %v2782
  %v2784 = vadd.f32 %v2783, 0.0036580483
  %v2785 = vmul.f32 %v2780, %v2784
  %v2786 = vadd.f32 %v2785, 0.05243302
  %v2787 = vmul.f32 %v2780, %v2786
  %v2788 = vadd.f32 %v2787, 0.18741608
  %v2789 = vmul.f32 %v2780, %v2788
  %v2790 = vadd.f32 %v2789, 1.1283791
  %v2791 = vmul.f32 %v648, %v2790
  %v2792 = vmul.f32 %v2780, 3.8918573e-05
  %v2793 = vadd.f32 %v2792, 0.001143296
  %v2794 = vmul.f32 %v2780, %v2793
  %v2795 = vadd.f32 %v2794, 0.014752088
  %v2796 = vmul.f32 %v2780, %v2795
  %v2797 = vadd.f32 %v2796, 0.112945676
  %v2798 = vmul.f32 %v2780, %v2797
  %v2799 = vadd.f32 %v2798, 0.4994258
  %v2800 = vmul.f32 %v2780, %v2799
  %v2801 = vadd.f32 %v2800, 1.0
  %v2802 = vrcp.pop %v2801
  %v2803 = vmul.f32 %v2801, %v2802
  %v2804 = vsub.f32 1.0, %v2803
  %v2805 = vmul.f32 %v2802, %v2804
  %v2806 = vadd.f32 %v2802, %v2805
  %vm2807 = vweird.f32 %v2801
  %vm2808 = vweird.f32 %v2802
  %vm2809 = vmor %vm2807, %vm2808
  %v2810 = vsel %vm2809, %v2802, %v2806
  %v2811 = vand.u32 2147483647, %v2801
  %vm2812 = vcmp.eq.f32.partialorder %v2811, 8.507059e+37
  %v2813 = vand.u32 %v2801, 2147483648
  %v2814 = vor.u32 1.1754944e-38, %v2813
  %v2815 = vsel %vm2812, %v2814, %v2810
  %v2816 = vmul.f32 %v2791, %v2815
  %v2817 = vmin.f32 %v2816, 1.0
  %v2818 = vmax.f32 %v2817, -1.0
  %v2819 = vmul.f32 %v649, %v649
  %v2820 = vmin.f32 16.0, %v2819
  %v2821 = vmul.f32 %v2820, 2.1237322e-06
  %v2822 = vadd.f32 %v2821, 0.00028619796
  %v2823 = vmul.f32 %v2820, %v2822
  %v2824 = vadd.f32 %v2823, 0.0036580483
  %v2825 = vmul.f32 %v2820, %v2824
  %v2826 = vadd.f32 %v2825, 0.05243302
  %v2827 = vmul.f32 %v2820, %v2826
  %v2828 = vadd.f32 %v2827, 0.18741608
  %v2829 = vmul.f32 %v2820, %v2828
  %v2830 = vadd.f32 %v2829, 1.1283791
  %v2831 = vmul.f32 %v649, %v2830
  %v2832 = vmul.f32 %v2820, 3.8918573e-05
  %v2833 = vadd.f32 %v2832, 0.001143296
  %v2834 = vmul.f32 %v2820, %v2833
  %v2835 = vadd.f32 %v2834, 0.014752088
  %v2836 = vmul.f32 %v2820, %v2835
  %v2837 = vadd.f32 %v2836, 0.112945676
  %v2838 = vmul.f32 %v2820, %v2837
  %v2839 = vadd.f32 %v2838, 0.4994258
  %v2840 = vmul.f32 %v2820, %v2839
  %v2841 = vadd.f32 %v2840, 1.0
  %v2842 = vrcp.pop %v2841
  %v2843 = vmul.f32 %v2841, %v2842
  %v2844 = vsub.f32 1.0, %v2843
  %v2845 = vmul.f32 %v2842, %v2844
  %v2846 = vadd.f32 %v2842, %v2845
  %vm2847 = vweird.f32 %v2841
  %vm2848 = vweird.f32 %v2842
  %vm2849 = vmor %vm2847, %vm2848
  %v2850 = vsel %vm2849, %v2842, %v2846
  %v2851 = vand.u32 2147483647, %v2841
  %vm2852 = vcmp.eq.f32.partialorder %v2851, 8.507059e+37
  %v2853 = vand.u32 %v2841, 2147483648
  %v2854 = vor.u32 1.1754944e-38, %v2853
  %v2855 = vsel %vm2852, %v2854, %v2850
  %v2856 = vmul.f32 %v2831, %v2855
  %v2857 = vmin.f32 %v2856, 1.0
  %v2858 = vmax.f32 %v2857, -1.0
  %v2859 = vmul.f32 %v650, %v650
  %v2860 = vmin.f32 16.0, %v2859
  %v2861 = vmul.f32 %v2860, 2.1237322e-06
  %v2862 = vadd.f32 %v2861, 0.00028619796
  %v2863 = vmul.f32 %v2860, %v2862
  %v2864 = vadd.f32 %v2863, 0.0036580483
  %v2865 = vmul.f32 %v2860, %v2864
  %v2866 = vadd.f32 %v2865, 0.05243302
  %v2867 = vmul.f32 %v2860, %v2866
  %v2868 = vadd.f32 %v2867, 0.18741608
  %v2869 = vmul.f32 %v2860, %v2868
  %v2870 = vadd.f32 %v2869, 1.1283791
  %v2871 = vmul.f32 %v650, %v2870
  %v2872 = vmul.f32 %v2860, 3.8918573e-05
  %v2873 = vadd.f32 %v2872, 0.001143296
  %v2874 = vmul.f32 %v2860, %v2873
  %v2875 = vadd.f32 %v2874, 0.014752088
  %v2876 = vmul.f32 %v2860, %v2875
  %v2877 = vadd.f32 %v2876, 0.112945676
  %v2878 = vmul.f32 %v2860, %v2877
  %v2879 = vadd.f32 %v2878, 0.4994258
  %v2880 = vmul.f32 %v2860, %v2879
  %v2881 = vadd.f32 %v2880, 1.0
  %v2882 = vrcp.pop %v2881
  %v2883 = vmul.f32 %v2881, %v2882
  %v2884 = vsub.f32 1.0, %v2883
  %v2885 = vmul.f32 %v2882, %v2884
  %v2886 = vadd.f32 %v2882, %v2885
  %vm2887 = vweird.f32 %v2881
  %vm2888 = vweird.f32 %v2882
  %vm2889 = vmor %vm2887, %vm2888
  %v2890 = vsel %vm2889, %v2882, %v2886
  %v2891 = vand.u32 2147483647, %v2881
  %vm2892 = vcmp.eq.f32.partialorder %v2891, 8.507059e+37
  %v2893 = vand.u32 %v2881, 2147483648
  %v2894 = vor.u32 1.1754944e-38, %v2893
  %v2895 = vsel %vm2892, %v2894, %v2890
  %v2896 = vmul.f32 %v2871, %v2895
  %v2897 = vmin.f32 %v2896, 1.0
  %v2898 = vmax.f32 %v2897, -1.0
  %v2899 = vmul.f32 %v651, %v651
  %v2900 = vmin.f32 16.0, %v2899
  %v2901 = vmul.f32 %v2900, 2.1237322e-06
  %v2902 = vadd.f32 %v2901, 0.00028619796
  %v2903 = vmul.f32 %v2900, %v2902
  %v2904 = vadd.f32 %v2903, 0.0036580483
  %v2905 = vmul.f32 %v2900, %v2904
  %v2906 = vadd.f32 %v2905, 0.05243302
  %v2907 = vmul.f32 %v2900, %v2906
  %v2908 = vadd.f32 %v2907, 0.18741608
  %v2909 = vmul.f32 %v2900, %v2908
  %v2910 = vadd.f32 %v2909, 1.1283791
  %v2911 = vmul.f32 %v651, %v2910
  %v2912 = vmul.f32 %v2900, 3.8918573e-05
  %v2913 = vadd.f32 %v2912, 0.001143296
  %v2914 = vmul.f32 %v2900, %v2913
  %v2915 = vadd.f32 %v2914, 0.014752088
  %v2916 = vmul.f32 %v2900, %v2915
  %v2917 = vadd.f32 %v2916, 0.112945676
  %v2918 = vmul.f32 %v2900, %v2917
  %v2919 = vadd.f32 %v2918, 0.4994258
  %v2920 = vmul.f32 %v2900, %v2919
  %v2921 = vadd.f32 %v2920, 1.0
  %v2922 = vrcp.pop %v2921
  %v2923 = vmul.f32 %v2921, %v2922
  %v2924 = vsub.f32 1.0, %v2923
  %v2925 = vmul.f32 %v2922, %v2924
  %v2926 = vadd.f32 %v2922, %v2925
  %vm2927 = vweird.f32 %v2921
  %vm2928 = vweird.f32 %v2922
  %vm2929 = vmor %vm2927, %vm2928
  %v2930 = vsel %vm2929, %v2922, %v2926
  %v2931 = vand.u32 2147483647, %v2921
  %vm2932 = vcmp.eq.f32.partialorder %v2931, 8.507059e+37
  %v2933 = vand.u32 %v2921, 2147483648
  %v2934 = vor.u32 1.1754944e-38, %v2933
  %v2935 = vsel %vm2932, %v2934, %v2930
  %v2936 = vmul.f32 %v2911, %v2935
  %v2937 = vmin.f32 %v2936, 1.0
  %v2938 = vmax.f32 %v2937, -1.0
  %v2939 = vmul.f32 %v652, %v652
  %v2940 = vmin.f32 16.0, %v2939
  %v2941 = vmul.f32 %v2940, 2.1237322e-06
  %v2942 = vadd.f32 %v2941, 0.00028619796
  %v2943 = vmul.f32 %v2940, %v2942
  %v2944 = vadd.f32 %v2943, 0.0036580483
  %v2945 = vmul.f32 %v2940, %v2944
  %v2946 = vadd.f32 %v2945, 0.05243302
  %v2947 = vmul.f32 %v2940, %v2946
  %v2948 = vadd.f32 %v2947, 0.18741608
  %v2949 = vmul.f32 %v2940, %v2948
  %v2950 = vadd.f32 %v2949, 1.1283791
  %v2951 = vmul.f32 %v652, %v2950
  %v2952 = vmul.f32 %v2940, 3.8918573e-05
  %v2953 = vadd.f32 %v2952, 0.001143296
  %v2954 = vmul.f32 %v2940, %v2953
  %v2955 = vadd.f32 %v2954, 0.014752088
  %v2956 = vmul.f32 %v2940, %v2955
  %v2957 = vadd.f32 %v2956, 0.112945676
  %v2958 = vmul.f32 %v2940, %v2957
  %v2959 = vadd.f32 %v2958, 0.4994258
  %v2960 = vmul.f32 %v2940, %v2959
  %v2961 = vadd.f32 %v2960, 1.0
  %v2962 = vrcp.pop %v2961
  %v2963 = vmul.f32 %v2961, %v2962
  %v2964 = vsub.f32 1.0, %v2963
  %v2965 = vmul.f32 %v2962, %v2964
  %v2966 = vadd.f32 %v2962, %v2965
  %vm2967 = vweird.f32 %v2961
  %vm2968 = vweird.f32 %v2962
  %vm2969 = vmor %vm2967, %vm2968
  %v2970 = vsel %vm2969, %v2962, %v2966
  %v2971 = vand.u32 2147483647, %v2961
  %vm2972 = vcmp.eq.f32.partialorder %v2971, 8.507059e+37
  %v2973 = vand.u32 %v2961, 2147483648
  %v2974 = vor.u32 1.1754944e-38, %v2973
  %v2975 = vsel %vm2972, %v2974, %v2970
  %v2976 = vmul.f32 %v2951, %v2975
  %v2977 = vmin.f32 %v2976, 1.0
  %v2978 = vmax.f32 %v2977, -1.0
  %v2979 = vmul.f32 %v653, %v653
  %v2980 = vmin.f32 16.0, %v2979
  %v2981 = vmul.f32 %v2980, 2.1237322e-06
  %v2982 = vadd.f32 %v2981, 0.00028619796
  %v2983 = vmul.f32 %v2980, %v2982
  %v2984 = vadd.f32 %v2983, 0.0036580483
  %v2985 = vmul.f32 %v2980, %v2984
  %v2986 = vadd.f32 %v2985, 0.05243302
  %v2987 = vmul.f32 %v2980, %v2986
  %v2988 = vadd.f32 %v2987, 0.18741608
  %v2989 = vmul.f32 %v2980, %v2988
  %v2990 = vadd.f32 %v2989, 1.1283791
  %v2991 = vmul.f32 %v653, %v2990
  %v2992 = vmul.f32 %v2980, 3.8918573e-05
  %v2993 = vadd.f32 %v2992, 0.001143296
  %v2994 = vmul.f32 %v2980, %v2993
  %v2995 = vadd.f32 %v2994, 0.014752088
  %v2996 = vmul.f32 %v2980, %v2995
  %v2997 = vadd.f32 %v2996, 0.112945676
  %v2998 = vmul.f32 %v2980, %v2997
  %v2999 = vadd.f32 %v2998, 0.4994258
  %v3000 = vmul.f32 %v2980, %v2999
  %v3001 = vadd.f32 %v3000, 1.0
  %v3002 = vrcp.pop %v3001
  %v3003 = vmul.f32 %v3001, %v3002
  %v3004 = vsub.f32 1.0, %v3003
  %v3005 = vmul.f32 %v3002, %v3004
  %v3006 = vadd.f32 %v3002, %v3005
  %vm3007 = vweird.f32 %v3001
  %vm3008 = vweird.f32 %v3002
  %vm3009 = vmor %vm3007, %vm3008
  %v3010 = vsel %vm3009, %v3002, %v3006
  %v3011 = vand.u32 2147483647, %v3001
  %vm3012 = vcmp.eq.f32.partialorder %v3011, 8.507059e+37
  %v3013 = vand.u32 %v3001, 2147483648
  %v3014 = vor.u32 1.1754944e-38, %v3013
  %v3015 = vsel %vm3012, %v3014, %v3010
  %v3016 = vmul.f32 %v2991, %v3015
  %v3017 = vmin.f32 %v3016, 1.0
  %v3018 = vmax.f32 %v3017, -1.0
  %v3019 = vmul.f32 %v654, %v654
  %v3020 = vmin.f32 16.0, %v3019
  %v3021 = vmul.f32 %v3020, 2.1237322e-06
  %v3022 = vadd.f32 %v3021, 0.00028619796
  %v3023 = vmul.f32 %v3020, %v3022
  %v3024 = vadd.f32 %v3023, 0.0036580483
  %v3025 = vmul.f32 %v3020, %v3024
  %v3026 = vadd.f32 %v3025, 0.05243302
  %v3027 = vmul.f32 %v3020, %v3026
  %v3028 = vadd.f32 %v3027, 0.18741608
  %v3029 = vmul.f32 %v3020, %v3028
  %v3030 = vadd.f32 %v3029, 1.1283791
  %v3031 = vmul.f32 %v654, %v3030
  %v3032 = vmul.f32 %v3020, 3.8918573e-05
  %v3033 = vadd.f32 %v3032, 0.001143296
  %v3034 = vmul.f32 %v3020, %v3033
  %v3035 = vadd.f32 %v3034, 0.014752088
  %v3036 = vmul.f32 %v3020, %v3035
  %v3037 = vadd.f32 %v3036, 0.112945676
  %v3038 = vmul.f32 %v3020, %v3037
  %v3039 = vadd.f32 %v3038, 0.4994258
  %v3040 = vmul.f32 %v3020, %v3039
  %v3041 = vadd.f32 %v3040, 1.0
  %v3042 = vrcp.pop %v3041
  %v3043 = vmul.f32 %v3041, %v3042
  %v3044 = vsub.f32 1.0, %v3043
  %v3045 = vmul.f32 %v3042, %v3044
  %v3046 = vadd.f32 %v3042, %v3045
  %vm3047 = vweird.f32 %v3041
  %vm3048 = vweird.f32 %v3042
  %vm3049 = vmor %vm3047, %vm3048
  %v3050 = vsel %vm3049, %v3042, %v3046
  %v3051 = vand.u32 2147483647, %v3041
  %vm3052 = vcmp.eq.f32.partialorder %v3051, 8.507059e+37
  %v3053 = vand.u32 %v3041, 2147483648
  %v3054 = vor.u32 1.1754944e-38, %v3053
  %v3055 = vsel %vm3052, %v3054, %v3050
  %v3056 = vmul.f32 %v3031, %v3055
  %v3057 = vmin.f32 %v3056, 1.0
  %v3058 = vmax.f32 %v3057, -1.0
  %v3059 = vmul.f32 %v655, %v655
  %v3060 = vmin.f32 16.0, %v3059
  %v3061 = vmul.f32 %v3060, 2.1237322e-06
  %v3062 = vadd.f32 %v3061, 0.00028619796
  %v3063 = vmul.f32 %v3060, %v3062
  %v3064 = vadd.f32 %v3063, 0.0036580483
  %v3065 = vmul.f32 %v3060, %v3064
  %v3066 = vadd.f32 %v3065, 0.05243302
  %v3067 = vmul.f32 %v3060, %v3066
  %v3068 = vadd.f32 %v3067, 0.18741608
  %v3069 = vmul.f32 %v3060, %v3068
  %v3070 = vadd.f32 %v3069, 1.1283791
  %v3071 = vmul.f32 %v655, %v3070
  %v3072 = vmul.f32 %v3060, 3.8918573e-05
  %v3073 = vadd.f32 %v3072, 0.001143296
  %v3074 = vmul.f32 %v3060, %v3073
  %v3075 = vadd.f32 %v3074, 0.014752088
  %v3076 = vmul.f32 %v3060, %v3075
  %v3077 = vadd.f32 %v3076, 0.112945676
  %v3078 = vmul.f32 %v3060, %v3077
  %v3079 = vadd.f32 %v3078, 0.4994258
  %v3080 = vmul.f32 %v3060, %v3079
  %v3081 = vadd.f32 %v3080, 1.0
  %v3082 = vrcp.pop %v3081
  %v3083 = vmul.f32 %v3081, %v3082
  %v3084 = vsub.f32 1.0, %v3083
  %v3085 = vmul.f32 %v3082, %v3084
  %v3086 = vadd.f32 %v3082, %v3085
  %vm3087 = vweird.f32 %v3081
  %vm3088 = vweird.f32 %v3082
  %vm3089 = vmor %vm3087, %vm3088
  %v3090 = vsel %vm3089, %v3082, %v3086
  %v3091 = vand.u32 2147483647, %v3081
  %vm3092 = vcmp.eq.f32.partialorder %v3091, 8.507059e+37
  %v3093 = vand.u32 %v3081, 2147483648
  %v3094 = vor.u32 1.1754944e-38, %v3093
  %v3095 = vsel %vm3092, %v3094, %v3090
  %v3096 = vmul.f32 %v3071, %v3095
  %v3097 = vmin.f32 %v3096, 1.0
  %v3098 = vmax.f32 %v3097, -1.0
  %v3099 = vmul.f32 %v656, %v656
  %v3100 = vmin.f32 16.0, %v3099
  %v3101 = vmul.f32 %v3100, 2.1237322e-06
  %v3102 = vadd.f32 %v3101, 0.00028619796
  %v3103 = vmul.f32 %v3100, %v3102
  %v3104 = vadd.f32 %v3103, 0.0036580483
  %v3105 = vmul.f32 %v3100, %v3104
  %v3106 = vadd.f32 %v3105, 0.05243302
  %v3107 = vmul.f32 %v3100, %v3106
  %v3108 = vadd.f32 %v3107, 0.18741608
  %v3109 = vmul.f32 %v3100, %v3108
  %v3110 = vadd.f32 %v3109, 1.1283791
  %v3111 = vmul.f32 %v656, %v3110
  %v3112 = vmul.f32 %v3100, 3.8918573e-05
  %v3113 = vadd.f32 %v3112, 0.001143296
  %v3114 = vmul.f32 %v3100, %v3113
  %v3115 = vadd.f32 %v3114, 0.014752088
  %v3116 = vmul.f32 %v3100, %v3115
  %v3117 = vadd.f32 %v3116, 0.112945676
  %v3118 = vmul.f32 %v3100, %v3117
  %v3119 = vadd.f32 %v3118, 0.4994258
  %v3120 = vmul.f32 %v3100, %v3119
  %v3121 = vadd.f32 %v3120, 1.0
  %v3122 = vrcp.pop %v3121
  %v3123 = vmul.f32 %v3121, %v3122
  %v3124 = vsub.f32 1.0, %v3123
  %v3125 = vmul.f32 %v3122, %v3124
  %v3126 = vadd.f32 %v3122, %v3125
  %vm3127 = vweird.f32 %v3121
  %vm3128 = vweird.f32 %v3122
  %vm3129 = vmor %vm3127, %vm3128
  %v3130 = vsel %vm3129, %v3122, %v3126
  %v3131 = vand.u32 2147483647, %v3121
  %vm3132 = vcmp.eq.f32.partialorder %v3131, 8.507059e+37
  %v3133 = vand.u32 %v3121, 2147483648
  %v3134 = vor.u32 1.1754944e-38, %v3133
  %v3135 = vsel %vm3132, %v3134, %v3130
  %v3136 = vmul.f32 %v3111, %v3135
  %v3137 = vmin.f32 %v3136, 1.0
  %v3138 = vmax.f32 %v3137, -1.0
  %v3139 = vmul.f32 %v657, %v657
  %v3140 = vmin.f32 16.0, %v3139
  %v3141 = vmul.f32 %v3140, 2.1237322e-06
  %v3142 = vadd.f32 %v3141, 0.00028619796
  %v3143 = vmul.f32 %v3140, %v3142
  %v3144 = vadd.f32 %v3143, 0.0036580483
  %v3145 = vmul.f32 %v3140, %v3144
  %v3146 = vadd.f32 %v3145, 0.05243302
  %v3147 = vmul.f32 %v3140, %v3146
  %v3148 = vadd.f32 %v3147, 0.18741608
  %v3149 = vmul.f32 %v3140, %v3148
  %v3150 = vadd.f32 %v3149, 1.1283791
  %v3151 = vmul.f32 %v657, %v3150
  %v3152 = vmul.f32 %v3140, 3.8918573e-05
  %v3153 = vadd.f32 %v3152, 0.001143296
  %v3154 = vmul.f32 %v3140, %v3153
  %v3155 = vadd.f32 %v3154, 0.014752088
  %v3156 = vmul.f32 %v3140, %v3155
  %v3157 = vadd.f32 %v3156, 0.112945676
  %v3158 = vmul.f32 %v3140, %v3157
  %v3159 = vadd.f32 %v3158, 0.4994258
  %v3160 = vmul.f32 %v3140, %v3159
  %v3161 = vadd.f32 %v3160, 1.0
  %v3162 = vrcp.pop %v3161
  %v3163 = vmul.f32 %v3161, %v3162
  %v3164 = vsub.f32 1.0, %v3163
  %v3165 = vmul.f32 %v3162, %v3164
  %v3166 = vadd.f32 %v3162, %v3165
  %vm3167 = vweird.f32 %v3161
  %vm3168 = vweird.f32 %v3162
  %vm3169 = vmor %vm3167, %vm3168
  %v3170 = vsel %vm3169, %v3162, %v3166
  %v3171 = vand.u32 2147483647, %v3161
  %vm3172 = vcmp.eq.f32.partialorder %v3171, 8.507059e+37
  %v3173 = vand.u32 %v3161, 2147483648
  %v3174 = vor.u32 1.1754944e-38, %v3173
  %v3175 = vsel %vm3172, %v3174, %v3170
  %v3176 = vmul.f32 %v3151, %v3175
  %v3177 = vmin.f32 %v3176, 1.0
  %v3178 = vmax.f32 %v3177, -1.0
  %v3179 = vmul.f32 %v658, %v658
  %v3180 = vmin.f32 16.0, %v3179
  %v3181 = vmul.f32 %v3180, 2.1237322e-06
  %v3182 = vadd.f32 %v3181, 0.00028619796
  %v3183 = vmul.f32 %v3180, %v3182
  %v3184 = vadd.f32 %v3183, 0.0036580483
  %v3185 = vmul.f32 %v3180, %v3184
  %v3186 = vadd.f32 %v3185, 0.05243302
  %v3187 = vmul.f32 %v3180, %v3186
  %v3188 = vadd.f32 %v3187, 0.18741608
  %v3189 = vmul.f32 %v3180, %v3188
  %v3190 = vadd.f32 %v3189, 1.1283791
  %v3191 = vmul.f32 %v658, %v3190
  %v3192 = vmul.f32 %v3180, 3.8918573e-05
  %v3193 = vadd.f32 %v3192, 0.001143296
  %v3194 = vmul.f32 %v3180, %v3193
  %v3195 = vadd.f32 %v3194, 0.014752088
  %v3196 = vmul.f32 %v3180, %v3195
  %v3197 = vadd.f32 %v3196, 0.112945676
  %v3198 = vmul.f32 %v3180, %v3197
  %v3199 = vadd.f32 %v3198, 0.4994258
  %v3200 = vmul.f32 %v3180, %v3199
  %v3201 = vadd.f32 %v3200, 1.0
  %v3202 = vrcp.pop %v3201
  %v3203 = vmul.f32 %v3201, %v3202
  %v3204 = vsub.f32 1.0, %v3203
  %v3205 = vmul.f32 %v3202, %v3204
  %v3206 = vadd.f32 %v3202, %v3205
  %vm3207 = vweird.f32 %v3201
  %vm3208 = vweird.f32 %v3202
  %vm3209 = vmor %vm3207, %vm3208
  %v3210 = vsel %vm3209, %v3202, %v3206
  %v3211 = vand.u32 2147483647, %v3201
  %vm3212 = vcmp.eq.f32.partialorder %v3211, 8.507059e+37
  %v3213 = vand.u32 %v3201, 2147483648
  %v3214 = vor.u32 1.1754944e-38, %v3213
  %v3215 = vsel %vm3212, %v3214, %v3210
  %v3216 = vmul.f32 %v3191, %v3215
  %v3217 = vmin.f32 %v3216, 1.0
  %v3218 = vmax.f32 %v3217, -1.0
  %v3219 = vadd.f32 %v698, 1.0
  %v3220 = vadd.f32 %v738, 1.0
  %v3221 = vadd.f32 %v778, 1.0
  %v3222 = vadd.f32 %v818, 1.0
  %v3223 = vadd.f32 %v858, 1.0
  %v3224 = vadd.f32 %v898, 1.0
  %v3225 = vadd.f32 %v938, 1.0
  %v3226 = vadd.f32 %v978, 1.0
  %v3227 = vadd.f32 %v1018, 1.0
  %v3228 = vadd.f32 %v1058, 1.0
  %v3229 = vadd.f32 %v1098, 1.0
  %v3230 = vadd.f32 %v1138, 1.0
  %v3231 = vadd.f32 %v1178, 1.0
  %v3232 = vadd.f32 %v1218, 1.0
  %v3233 = vadd.f32 %v1258, 1.0
  %v3234 = vadd.f32 %v1298, 1.0
  %v3235 = vadd.f32 %v1338, 1.0
  %v3236 = vadd.f32 %v1378, 1.0
  %v3237 = vadd.f32 %v1418, 1.0
  %v3238 = vadd.f32 %v1458, 1.0
  %v3239 = vadd.f32 %v1498, 1.0
  %v3240 = vadd.f32 %v1538, 1.0
  %v3241 = vadd.f32 %v1578, 1.0
  %v3242 = vadd.f32 %v1618, 1.0
  %v3243 = vadd.f32 %v1658, 1.0
  %v3244 = vadd.f32 %v1698, 1.0
  %v3245 = vadd.f32 %v1738, 1.0
  %v3246 = vadd.f32 %v1778, 1.0
  %v3247 = vadd.f32 %v1818, 1.0
  %v3248 = vadd.f32 %v1858, 1.0
  %v3249 = vadd.f32 %v1898, 1.0
  %v3250 = vadd.f32 %v1938, 1.0
  %v3251 = vadd.f32 %v1978, 1.0
  %v3252 = vadd.f32 %v2018, 1.0
  %v3253 = vadd.f32 %v2058, 1.0
  %v3254 = vadd.f32 %v2098, 1.0
  %v3255 = vadd.f32 %v2138, 1.0
  %v3256 = vadd.f32 %v2178, 1.0
  %v3257 = vadd.f32 %v2218, 1.0
  %v3258 = vadd.f32 %v2258, 1.0
  %v3259 = vadd.f32 %v2298, 1.0
  %v3260 = vadd.f32 %v2338, 1.0
  %v3261 = vadd.f32 %v2378, 1.0
  %v3262 = vadd.f32 %v2418, 1.0
  %v3263 = vadd.f32 %v2458, 1.0
  %v3264 = vadd.f32 %v2498, 1.0
  %v3265 = vadd.f32 %v2538, 1.0
  %v3266 = vadd.f32 %v2578, 1.0
  %v3267 = vadd.f32 %v2618, 1.0
  %v3268 = vadd.f32 %v2658, 1.0
  %v3269 = vadd.f32 %v2698, 1.0
  %v3270 = vadd.f32 %v2738, 1.0
  %v3271 = vadd.f32 %v2778, 1.0
  %v3272 = vadd.f32 %v2818, 1.0
  %v3273 = vadd.f32 %v2858, 1.0
  %v3274 = vadd.f32 %v2898, 1.0
  %v3275 = vadd.f32 %v2938, 1.0
  %v3276 = vadd.f32 %v2978, 1.0
  %v3277 = vadd.f32 %v3018, 1.0
  %v3278 = vadd.f32 %v3058, 1.0
  %v3279 = vadd.f32 %v3098, 1.0
  %v3280 = vadd.f32 %v3138, 1.0
  %v3281 = vadd.f32 %v3178, 1.0
  %v3282 = vadd.f32 %v3218, 1.0
  %v3283 = vmul.f32 %v531, %v3219
  %v3284 = vmul.f32 %v532, %v3220
  %v3285 = vmul.f32 %v533, %v3221
  %v3286 = vmul.f32 %v534, %v3222
  %v3287 = vmul.f32 %v535, %v3223
  %v3288 = vmul.f32 %v536, %v3224
  %v3289 = vmul.f32 %v537, %v3225
  %v3290 = vmul.f32 %v538, %v3226
  %v3291 = vmul.f32 %v539, %v3227
  %v3292 = vmul.f32 %v540, %v3228
  %v3293 = vmul.f32 %v541, %v3229
  %v3294 = vmul.f32 %v542, %v3230
  %v3295 = vmul.f32 %v543, %v3231
  %v3296 = vmul.f32 %v544, %v3232
  %v3297 = vmul.f32 %v545, %v3233
  %v3298 = vmul.f32 %v546, %v3234
  %v3299 = vmul.f32 %v547, %v3235
  %v3300 = vmul.f32 %v548, %v3236
  %v3301 = vmul.f32 %v549, %v3237
  %v3302 = vmul.f32 %v550, %v3238
  %v3303 = vmul.f32 %v551, %v3239
  %v3304 = vmul.f32 %v552, %v3240
  %v3305 = vmul.f32 %v553, %v3241
  %v3306 = vmul.f32 %v554, %v3242
  %v3307 = vmul.f32 %v555, %v3243
  %v3308 = vmul.f32 %v556, %v3244
  %v3309 = vmul.f32 %v557, %v3245
  %v3310 = vmul.f32 %v558, %v3246
  %v3311 = vmul.f32 %v559, %v3247
  %v3312 = vmul.f32 %v560, %v3248
  %v3313 = vmul.f32 %v561, %v3249
  %v3314 = vmul.f32 %v562, %v3250
  %v3315 = vmul.f32 %v563, %v3251
  %v3316 = vmul.f32 %v564, %v3252
  %v3317 = vmul.f32 %v565, %v3253
  %v3318 = vmul.f32 %v566, %v3254
  %v3319 = vmul.f32 %v567, %v3255
  %v3320 = vmul.f32 %v568, %v3256
  %v3321 = vmul.f32 %v569, %v3257
  %v3322 = vmul.f32 %v570, %v3258
  %v3323 = vmul.f32 %v571, %v3259
  %v3324 = vmul.f32 %v572, %v3260
  %v3325 = vmul.f32 %v573, %v3261
  %v3326 = vmul.f32 %v574, %v3262
  %v3327 = vmul.f32 %v575, %v3263
  %v3328 = vmul.f32 %v576, %v3264
  %v3329 = vmul.f32 %v577, %v3265
  %v3330 = vmul.f32 %v578, %v3266
  %v3331 = vmul.f32 %v579, %v3267
  %v3332 = vmul.f32 %v580, %v3268
  %v3333 = vmul.f32 %v581, %v3269
  %v3334 = vmul.f32 %v582, %v3270
  %v3335 = vmul.f32 %v583, %v3271
  %v3336 = vmul.f32 %v584, %v3272
  %v3337 = vmul.f32 %v585, %v3273
  %v3338 = vmul.f32 %v586, %v3274
  %v3339 = vmul.f32 %v587, %v3275
  %v3340 = vmul.f32 %v588, %v3276
  %v3341 = vmul.f32 %v589, %v3277
  %v3342 = vmul.f32 %v590, %v3278
  %v3343 = vmul.f32 %v591, %v3279
  %v3344 = vmul.f32 %v592, %v3280
  %v3345 = vmul.f32 %v593, %v3281
  %v3346 = vmul.f32 %v594, %v3282
  %v3347 = vpack.c.bf16 %v3284, %v3283
  %v3348 = vpack.c.bf16 %v3286, %v3285
  %v3349 = vpack.c.bf16 %v3288, %v3287
  %v3350 = vpack.c.bf16 %v3290, %v3289
  %v3351 = vpack.c.bf16 %v3292, %v3291
  %v3352 = vpack.c.bf16 %v3294, %v3293
  %v3353 = vpack.c.bf16 %v3296, %v3295
  %v3354 = vpack.c.bf16 %v3298, %v3297
  %v3355 = vpack.c.bf16 %v3300, %v3299
  %v3356 = vpack.c.bf16 %v3302, %v3301
  %v3357 = vpack.c.bf16 %v3304, %v3303
  %v3358 = vpack.c.bf16 %v3306, %v3305
  %v3359 = vpack.c.bf16 %v3308, %v3307
  %v3360 = vpack.c.bf16 %v3310, %v3309
  %v3361 = vpack.c.bf16 %v3312, %v3311
  %v3362 = vpack.c.bf16 %v3314, %v3313
  %v3363 = vpack.c.bf16 %v3316, %v3315
  %v3364 = vpack.c.bf16 %v3318, %v3317
  %v3365 = vpack.c.bf16 %v3320, %v3319
  %v3366 = vpack.c.bf16 %v3322, %v3321
  %v3367 = vpack.c.bf16 %v3324, %v3323
  %v3368 = vpack.c.bf16 %v3326, %v3325
  %v3369 = vpack.c.bf16 %v3328, %v3327
  %v3370 = vpack.c.bf16 %v3330, %v3329
  %v3371 = vpack.c.bf16 %v3332, %v3331
  %v3372 = vpack.c.bf16 %v3334, %v3333
  %v3373 = vpack.c.bf16 %v3336, %v3335
  %v3374 = vpack.c.bf16 %v3338, %v3337
  %v3375 = vpack.c.bf16 %v3340, %v3339
  %v3376 = vpack.c.bf16 %v3342, %v3341
  %v3377 = vpack.c.bf16 %v3344, %v3343
  %v3378 = vpack.c.bf16 %v3346, %v3345
  %v3379 = vld [vmem:[%s3] sm:$0xf]
  %v3380 = vld [vmem:[%s3 + $0x4] sm:$0xf]
  %v3381 = vld [vmem:[%s3 + $0x8] sm:$0xf]
  %v3382 = vld [vmem:[%s3 + $0xc] sm:$0xf]
  %v3383 = vld [vmem:[%s3 + $0x10] sm:$0xf]
  %v3384 = vld [vmem:[%s3 + $0x14] sm:$0xf]
  %v3385 = vld [vmem:[%s3 + $0x18] sm:$0xf]
  %v3386 = vld [vmem:[%s3 + $0x1c] sm:$0xf]
  %v3387 = vld [vmem:[%s3 + $0x20] sm:$0xf]
  %v3388 = vld [vmem:[%s3 + $0x24] sm:$0xf]
  %v3389 = vld [vmem:[%s3 + $0x28] sm:$0xf]
  %v3390 = vld [vmem:[%s3 + $0x2c] sm:$0xf]
  %v3391 = vld [vmem:[%s3 + $0x30] sm:$0xf]
  %v3392 = vld [vmem:[%s3 + $0x34] sm:$0xf]
  %v3393 = vld [vmem:[%s3 + $0x38] sm:$0xf]
  %v3394 = vld [vmem:[%s3 + $0x3c] sm:$0xf]
  %v3395 = vld [vmem:[%s4] sm:$0x1]
  %v3397 = vperm.slane %v3395, 0
  %v3415 = vunpack.c.l.b16 %v3379
  %v3416 = vunpack.c.l.b16 %v3380
  %v3417 = vunpack.c.l.b16 %v3381
  %v3418 = vunpack.c.l.b16 %v3382
  %v3419 = vunpack.c.l.b16 %v3383
  %v3420 = vunpack.c.l.b16 %v3384
  %v3421 = vunpack.c.l.b16 %v3385
  %v3422 = vunpack.c.l.b16 %v3386
  %v3423 = vunpack.c.l.b16 %v3387
  %v3424 = vunpack.c.l.b16 %v3388
  %v3425 = vunpack.c.l.b16 %v3389
  %v3426 = vunpack.c.l.b16 %v3390
  %v3427 = vunpack.c.l.b16 %v3391
  %v3428 = vunpack.c.l.b16 %v3392
  %v3429 = vunpack.c.l.b16 %v3393
  %v3430 = vunpack.c.l.b16 %v3394
  %v3431 = vpack.c.b16 %v3416, %v3415
  %v3432 = vpack.c.b16 %v3418, %v3417
  %v3433 = vpack.c.b16 %v3420, %v3419
  %v3434 = vpack.c.b16 %v3422, %v3421
  %v3435 = vpack.c.b16 %v3424, %v3423
  %v3436 = vpack.c.b16 %v3426, %v3425
  %v3437 = vpack.c.b16 %v3428, %v3427
  %v3438 = vpack.c.b16 %v3430, %v3429
  %3447 = vmatpush.bf16.msra.mxu0 %v3438
  %3448 = vmatpush.bf16.msra.mxu0 %v3437
  %3449 = vmatpush.bf16.msra.mxu0 %v3436
  %3450 = vmatpush.bf16.msra.mxu0 %v3435
  %3451 = vmatpush.bf16.msra.mxu0 %v3434
  %3452 = vmatpush.bf16.msra.mxu0 %v3433
  %3453 = vmatpush.bf16.msra.mxu0 %v3432
  %3454 = vmatpush.bf16.msra.mxu0 %v3431
  %3455 = vmatmul.bf16.gmra.mxu0 %v3347
  %v3456 = vpop.f32.mrf.mxu0
  %v3457 = vadd.f32 %v3397, %v3456
  %v3458 = vpop.f32.mrf.mxu0
  %v3459 = vadd.f32 %v3397, %v3458
  %3460 = vmatmul.bf16.gmra.mxu0 %v3348
  %v3461 = vpop.f32.mrf.mxu0
  %v3462 = vadd.f32 %v3397, %v3461
  %v3463 = vpop.f32.mrf.mxu0
  %v3464 = vadd.f32 %v3397, %v3463
  %3465 = vmatmul.bf16.gmra.mxu0 %v3349
  %v3466 = vpop.f32.mrf.mxu0
  %v3467 = vadd.f32 %v3397, %v3466
  %v3468 = vpop.f32.mrf.mxu0
  %v3469 = vadd.f32 %v3397, %v3468
  %3470 = vmatmul.bf16.gmra.mxu0 %v3350
  %v3471 = vpop.f32.mrf.mxu0
  %v3472 = vadd.f32 %v3397, %v3471
  %v3473 = vpop.f32.mrf.mxu0
  %v3474 = vadd.f32 %v3397, %v3473
  %3475 = vmatmul.bf16.gmra.mxu0 %v3351
  %v3476 = vpop.f32.mrf.mxu0
  %v3477 = vadd.f32 %v3397, %v3476
  %v3478 = vpop.f32.mrf.mxu0
  %v3479 = vadd.f32 %v3397, %v3478
  %3480 = vmatmul.bf16.gmra.mxu0 %v3352
  %v3481 = vpop.f32.mrf.mxu0
  %v3482 = vadd.f32 %v3397, %v3481
  %v3483 = vpop.f32.mrf.mxu0
  %v3484 = vadd.f32 %v3397, %v3483
  %3485 = vmatmul.bf16.gmra.mxu0 %v3353
  %v3486 = vpop.f32.mrf.mxu0
  %v3487 = vadd.f32 %v3397, %v3486
  %v3488 = vpop.f32.mrf.mxu0
  %v3489 = vadd.f32 %v3397, %v3488
  %3490 = vmatmul.bf16.gmra.mxu0 %v3354
  %v3491 = vpop.f32.mrf.mxu0
  %v3492 = vadd.f32 %v3397, %v3491
  %v3493 = vpop.f32.mrf.mxu0
  %v3494 = vadd.f32 %v3397, %v3493
  %3495 = vmatmul.bf16.gmra.mxu0 %v3355
  %v3496 = vpop.f32.mrf.mxu0
  %v3497 = vadd.f32 %v3397, %v3496
  %v3498 = vpop.f32.mrf.mxu0
  %v3499 = vadd.f32 %v3397, %v3498
  %3500 = vmatmul.bf16.gmra.mxu0 %v3356
  %v3501 = vpop.f32.mrf.mxu0
  %v3502 = vadd.f32 %v3397, %v3501
  %v3503 = vpop.f32.mrf.mxu0
  %v3504 = vadd.f32 %v3397, %v3503
  %3505 = vmatmul.bf16.gmra.mxu0 %v3357
  %v3506 = vpop.f32.mrf.mxu0
  %v3507 = vadd.f32 %v3397, %v3506
  %v3508 = vpop.f32.mrf.mxu0
  %v3509 = vadd.f32 %v3397, %v3508
  %3510 = vmatmul.bf16.gmra.mxu0 %v3358
  %v3511 = vpop.f32.mrf.mxu0
  %v3512 = vadd.f32 %v3397, %v3511
  %v3513 = vpop.f32.mrf.mxu0
  %v3514 = vadd.f32 %v3397, %v3513
  %3515 = vmatmul.bf16.gmra.mxu0 %v3359
  %v3516 = vpop.f32.mrf.mxu0
  %v3517 = vadd.f32 %v3397, %v3516
  %v3518 = vpop.f32.mrf.mxu0
  %v3519 = vadd.f32 %v3397, %v3518
  %3520 = vmatmul.bf16.gmra.mxu0 %v3360
  %v3521 = vpop.f32.mrf.mxu0
  %v3522 = vadd.f32 %v3397, %v3521
  %v3523 = vpop.f32.mrf.mxu0
  %v3524 = vadd.f32 %v3397, %v3523
  %3525 = vmatmul.bf16.gmra.mxu0 %v3361
  %v3526 = vpop.f32.mrf.mxu0
  %v3527 = vadd.f32 %v3397, %v3526
  %v3528 = vpop.f32.mrf.mxu0
  %v3529 = vadd.f32 %v3397, %v3528
  %3530 = vmatmul.bf16.gmra.mxu0 %v3362
  %v3531 = vpop.f32.mrf.mxu0
  %v3532 = vadd.f32 %v3397, %v3531
  %v3533 = vpop.f32.mrf.mxu0
  %v3534 = vadd.f32 %v3397, %v3533
  %3535 = vmatmul.bf16.gmra.mxu0 %v3363
  %v3536 = vpop.f32.mrf.mxu0
  %v3537 = vadd.f32 %v3397, %v3536
  %v3538 = vpop.f32.mrf.mxu0
  %v3539 = vadd.f32 %v3397, %v3538
  %3540 = vmatmul.bf16.gmra.mxu0 %v3364
  %v3541 = vpop.f32.mrf.mxu0
  %v3542 = vadd.f32 %v3397, %v3541
  %v3543 = vpop.f32.mrf.mxu0
  %v3544 = vadd.f32 %v3397, %v3543
  %3545 = vmatmul.bf16.gmra.mxu0 %v3365
  %v3546 = vpop.f32.mrf.mxu0
  %v3547 = vadd.f32 %v3397, %v3546
  %v3548 = vpop.f32.mrf.mxu0
  %v3549 = vadd.f32 %v3397, %v3548
  %3550 = vmatmul.bf16.gmra.mxu0 %v3366
  %v3551 = vpop.f32.mrf.mxu0
  %v3552 = vadd.f32 %v3397, %v3551
  %v3553 = vpop.f32.mrf.mxu0
  %v3554 = vadd.f32 %v3397, %v3553
  %3555 = vmatmul.bf16.gmra.mxu0 %v3367
  %v3556 = vpop.f32.mrf.mxu0
  %v3557 = vadd.f32 %v3397, %v3556
  %v3558 = vpop.f32.mrf.mxu0
  %v3559 = vadd.f32 %v3397, %v3558
  %3560 = vmatmul.bf16.gmra.mxu0 %v3368
  %v3561 = vpop.f32.mrf.mxu0
  %v3562 = vadd.f32 %v3397, %v3561
  %v3563 = vpop.f32.mrf.mxu0
  %v3564 = vadd.f32 %v3397, %v3563
  %3565 = vmatmul.bf16.gmra.mxu0 %v3369
  %v3566 = vpop.f32.mrf.mxu0
  %v3567 = vadd.f32 %v3397, %v3566
  %v3568 = vpop.f32.mrf.mxu0
  %v3569 = vadd.f32 %v3397, %v3568
  %3570 = vmatmul.bf16.gmra.mxu0 %v3370
  %v3571 = vpop.f32.mrf.mxu0
  %v3572 = vadd.f32 %v3397, %v3571
  %v3573 = vpop.f32.mrf.mxu0
  %v3574 = vadd.f32 %v3397, %v3573
  %3575 = vmatmul.bf16.gmra.mxu0 %v3371
  %v3576 = vpop.f32.mrf.mxu0
  %v3577 = vadd.f32 %v3397, %v3576
  %v3578 = vpop.f32.mrf.mxu0
  %v3579 = vadd.f32 %v3397, %v3578
  %3580 = vmatmul.bf16.gmra.mxu0 %v3372
  %v3581 = vpop.f32.mrf.mxu0
  %v3582 = vadd.f32 %v3397, %v3581
  %v3583 = vpop.f32.mrf.mxu0
  %v3584 = vadd.f32 %v3397, %v3583
  %3585 = vmatmul.bf16.gmra.mxu0 %v3373
  %v3586 = vpop.f32.mrf.mxu0
  %v3587 = vadd.f32 %v3397, %v3586
  %v3588 = vpop.f32.mrf.mxu0
  %v3589 = vadd.f32 %v3397, %v3588
  %3590 = vmatmul.bf16.gmra.mxu0 %v3374
  %v3591 = vpop.f32.mrf.mxu0
  %v3592 = vadd.f32 %v3397, %v3591
  %v3593 = vpop.f32.mrf.mxu0
  %v3594 = vadd.f32 %v3397, %v3593
  %3595 = vmatmul.bf16.gmra.mxu0 %v3375
  %v3596 = vpop.f32.mrf.mxu0
  %v3597 = vadd.f32 %v3397, %v3596
  %v3598 = vpop.f32.mrf.mxu0
  %v3599 = vadd.f32 %v3397, %v3598
  %3600 = vmatmul.bf16.gmra.mxu0 %v3376
  %v3601 = vpop.f32.mrf.mxu0
  %v3602 = vadd.f32 %v3397, %v3601
  %v3603 = vpop.f32.mrf.mxu0
  %v3604 = vadd.f32 %v3397, %v3603
  %3605 = vmatmul.bf16.gmra.mxu0 %v3377
  %v3606 = vpop.f32.mrf.mxu0
  %v3607 = vadd.f32 %v3397, %v3606
  %v3608 = vpop.f32.mrf.mxu0
  %v3609 = vadd.f32 %v3397, %v3608
  %3610 = vmatmul.bf16.gmra.mxu0 %v3378
  %v3611 = vpop.f32.mrf.mxu0
  %v3612 = vadd.f32 %v3397, %v3611
  %v3613 = vpop.f32.mrf.mxu0
  %v3614 = vadd.f32 %v3397, %v3613
  %3615 = vdwg.mxu0
  %3616 = vst.msk [vmem:[%s5] sm:$0xff] %vm265, %v3457
  %3617 = vst.msk [vmem:[%s5 + $0x8] sm:$0xff] %vm265, %v3459
  %3618 = vst.msk [vmem:[%s5 + $0x10] sm:$0xff] %vm265, %v3462
  %3619 = vst.msk [vmem:[%s5 + $0x18] sm:$0xff] %vm265, %v3464
  %3620 = vst.msk [vmem:[%s5 + $0x20] sm:$0xff] %vm265, %v3467
  %3621 = vst.msk [vmem:[%s5 + $0x28] sm:$0xff] %vm265, %v3469
  %3622 = vst.msk [vmem:[%s5 + $0x30] sm:$0xff] %vm265, %v3472
  %3623 = vst.msk [vmem:[%s5 + $0x38] sm:$0xff] %vm265, %v3474
  %3624 = vst.msk [vmem:[%s5 + $0x40] sm:$0xff] %vm265, %v3477
  %3625 = vst.msk [vmem:[%s5 + $0x48] sm:$0xff] %vm265, %v3479
  %3626 = vst.msk [vmem:[%s5 + $0x50] sm:$0xff] %vm265, %v3482
  %3627 = vst.msk [vmem:[%s5 + $0x58] sm:$0xff] %vm265, %v3484
  %3628 = vst.msk [vmem:[%s5 + $0x60] sm:$0xff] %vm265, %v3487
  %3629 = vst.msk [vmem:[%s5 + $0x68] sm:$0xff] %vm265, %v3489
  %3630 = vst.msk [vmem:[%s5 + $0x70] sm:$0xff] %vm265, %v3492
  %3631 = vst.msk [vmem:[%s5 + $0x78] sm:$0xff] %vm265, %v3494
  %3632 = vst.msk [vmem:[%s5 + $0x80] sm:$0xff] %vm265, %v3497
  %3633 = vst.msk [vmem:[%s5 + $0x88] sm:$0xff] %vm265, %v3499
  %3634 = vst.msk [vmem:[%s5 + $0x90] sm:$0xff] %vm265, %v3502
  %3635 = vst.msk [vmem:[%s5 + $0x98] sm:$0xff] %vm265, %v3504
  %3636 = vst.msk [vmem:[%s5 + $0xa0] sm:$0xff] %vm265, %v3507
  %3637 = vst.msk [vmem:[%s5 + $0xa8] sm:$0xff] %vm265, %v3509
  %3638 = vst.msk [vmem:[%s5 + $0xb0] sm:$0xff] %vm265, %v3512
  %3639 = vst.msk [vmem:[%s5 + $0xb8] sm:$0xff] %vm265, %v3514
  %3640 = vst.msk [vmem:[%s5 + $0xc0] sm:$0xff] %vm265, %v3517
  %3641 = vst.msk [vmem:[%s5 + $0xc8] sm:$0xff] %vm265, %v3519
  %3642 = vst.msk [vmem:[%s5 + $0xd0] sm:$0xff] %vm265, %v3522
  %3643 = vst.msk [vmem:[%s5 + $0xd8] sm:$0xff] %vm265, %v3524
  %3644 = vst.msk [vmem:[%s5 + $0xe0] sm:$0xff] %vm265, %v3527
  %3645 = vst.msk [vmem:[%s5 + $0xe8] sm:$0xff] %vm265, %v3529
  %3646 = vst.msk [vmem:[%s5 + $0xf0] sm:$0xff] %vm265, %v3532
  %3647 = vst.msk [vmem:[%s5 + $0xf8] sm:$0xff] %vm265, %v3534
  %3648 = vst.msk [vmem:[%s5 + $0x100] sm:$0xff] %vm265, %v3537
  %3649 = vst.msk [vmem:[%s5 + $0x108] sm:$0xff] %vm265, %v3539
  %3650 = vst.msk [vmem:[%s5 + $0x110] sm:$0xff] %vm265, %v3542
  %3651 = vst.msk [vmem:[%s5 + $0x118] sm:$0xff] %vm265, %v3544
  %3652 = vst.msk [vmem:[%s5 + $0x120] sm:$0xff] %vm265, %v3547
  %3653 = vst.msk [vmem:[%s5 + $0x128] sm:$0xff] %vm265, %v3549
  %3654 = vst.msk [vmem:[%s5 + $0x130] sm:$0xff] %vm265, %v3552
  %3655 = vst.msk [vmem:[%s5 + $0x138] sm:$0xff] %vm265, %v3554
  %3656 = vst.msk [vmem:[%s5 + $0x140] sm:$0xff] %vm265, %v3557
  %3657 = vst.msk [vmem:[%s5 + $0x148] sm:$0xff] %vm265, %v3559
  %3658 = vst.msk [vmem:[%s5 + $0x150] sm:$0xff] %vm265, %v3562
  %3659 = vst.msk [vmem:[%s5 + $0x158] sm:$0xff] %vm265, %v3564
  %3660 = vst.msk [vmem:[%s5 + $0x160] sm:$0xff] %vm265, %v3567
  %3661 = vst.msk [vmem:[%s5 + $0x168] sm:$0xff] %vm265, %v3569
  %3662 = vst.msk [vmem:[%s5 + $0x170] sm:$0xff] %vm265, %v3572
  %3663 = vst.msk [vmem:[%s5 + $0x178] sm:$0xff] %vm265, %v3574
  %3664 = vst.msk [vmem:[%s5 + $0x180] sm:$0xff] %vm265, %v3577
  %3665 = vst.msk [vmem:[%s5 + $0x188] sm:$0xff] %vm265, %v3579
  %3666 = vst.msk [vmem:[%s5 + $0x190] sm:$0xff] %vm265, %v3582
  %3667 = vst.msk [vmem:[%s5 + $0x198] sm:$0xff] %vm265, %v3584
  %3668 = vst.msk [vmem:[%s5 + $0x1a0] sm:$0xff] %vm265, %v3587
  %3669 = vst.msk [vmem:[%s5 + $0x1a8] sm:$0xff] %vm265, %v3589
  %3670 = vst.msk [vmem:[%s5 + $0x1b0] sm:$0xff] %vm265, %v3592
  %3671 = vst.msk [vmem:[%s5 + $0x1b8] sm:$0xff] %vm265, %v3594
  %3672 = vst.msk [vmem:[%s5 + $0x1c0] sm:$0xff] %vm265, %v3597
  %3673 = vst.msk [vmem:[%s5 + $0x1c8] sm:$0xff] %vm265, %v3599
  %3674 = vst.msk [vmem:[%s5 + $0x1d0] sm:$0xff] %vm265, %v3602
  %3675 = vst.msk [vmem:[%s5 + $0x1d8] sm:$0xff] %vm265, %v3604
  %3676 = vst.msk [vmem:[%s5 + $0x1e0] sm:$0xff] %vm265, %v3607
  %3677 = vst.msk [vmem:[%s5 + $0x1e8] sm:$0xff] %vm265, %v3609
  %3678 = vst.msk [vmem:[%s5 + $0x1f0] sm:$0xff] %vm265, %v3612
  %3679 = vst.msk [vmem:[%s5 + $0x1f8] sm:$0xff] %vm265, %v3614
  // Predicated region
  $region22: #{mlp_forward.1} parent=0 // pred_check
    _
  $region23: #{mlp_forward.1} parent=0 // pred_check_branch
    %3681 = sbr.rel (0) target = $region25
  $region24: #{mlp_forward.1} parent=0 // pred_region
    _
  $region25: #{mlp_forward.1} parent=0 // pred_fallthru
    _
  // Predicated region
  $region26: #{mlp_forward.1} parent=0 // pred_check
    _
  $region27: #{mlp_forward.1} parent=0 // pred_check_branch
    %3683 = sbr.rel (0) target = $region29
  $region28: #{mlp_forward.1} parent=0 // pred_region
    _
  $region29: #{mlp_forward.1} parent=0 // pred_fallthru
    _

</llo_original>
